<compile_context>
chip_gen: v7x
topology: tpu7x:2x2x1
jax: 0.10.0
libtpu: 0.0.40
codegen_flags: <defaults>
</compile_context>

<pallas_src>
import numpy as np
import jax
import jax.numpy as jnp
from jax import lax
from jax.experimental import pallas as pl
from jax.experimental.pallas import tpu as pltpu

# ------------- config consistent with NeRF_TP / NeRFPPMLP defaults (reduced sizes) -------------
NUM_SRC_VIEWS = 3          # num_src_views
NETDEPTH = 4
NETWIDTH = 128
NETDEPTH_COND = 2
NETWIDTH_COND = 64
SKIP_LAYER = 2
COMBINE_LAYER = 3          # combine_type='average'
MIN_DEG_POINT = 0
MAX_DEG_POINT = 4          # module default 10, reduced for a small test
DEG_VIEW = 2               # module default 4, reduced
LOCAL_LATENT = 32          # module default 512, reduced
WORLD_LATENT = 16          # module default 128, reduced
NUM_RGB = 3
NUM_DENSITY = 1
RGB_PADDING = 1e-3
DENSITY_BIAS = -1.0

N_RAYS = 4
N_COARSE = 8
N_FINE = 16
POINT_TILE = 1024          # max points per grid step (views folded in -> MXU M = 3*T)

# The kernel below is fully unrolled / specialized for this layer structure:
# no skip layer may occur after the combine layer.
assert NETDEPTH == 4 and SKIP_LAYER == 2 and COMBINE_LAYER == NETDEPTH - 1
assert NETDEPTH_COND == 2


def _round_up(v, m):
    return ((v + m - 1) // m) * m


POS_SIZE_FG = ((MAX_DEG_POINT - MIN_DEG_POINT) * 2 + 1) * 3 + LOCAL_LATENT + WORLD_LATENT
POS_SIZE_BG = ((MAX_DEG_POINT - MIN_DEG_POINT) * 2 + 1) * 4 + LOCAL_LATENT + WORLD_LATENT
VIEW_POS_SIZE = (DEG_VIEW * 2 + 1) * 3
# x slab holds [pos features | ... zero pad ... | cond features] -> one DMA stream per head
POS_PAD = _round_up(max(POS_SIZE_FG, POS_SIZE_BG) + VIEW_POS_SIZE, 128)   # 128 at these sizes
COND_OFFSET = POS_PAD - VIEW_POS_SIZE                                     # 113
VIEW_WIDTH = 128            # view branch padded to full lane width
DCOL = NETWIDTH_COND        # density column inside the fused view-layer-0 output (col 64)
OUT_WIDTH = 128             # packed rgb|sigma output slab width
SIGMA_COL = NUM_RGB         # output column carrying sigma

assert COND_OFFSET >= max(POS_SIZE_FG, POS_SIZE_BG)
assert DCOL + NUM_DENSITY <= VIEW_WIDTH


# ---------------------------------- helpers (plain JAX glue) ----------------------------------
def pos_enc(x, min_deg, max_deg):
    """helper.pos_enc: concat([x, sin(x*2^k), cos(x*2^k)]) -> ((max-min)*2+1)*ch features."""
    scales = jnp.asarray([2.0 ** i for i in range(min_deg, max_deg)], x.dtype)
    xb = (x[..., None, :] * scales[:, None]).reshape(*x.shape[:-1], -1)
    four = jnp.sin(jnp.concatenate([xb, xb + 0.5 * jnp.pi], axis=-1))
    return jnp.concatenate([x, four], axis=-1)


def xavier_uniform(key, fan_in, fan_out):
    bound = float(np.sqrt(6.0 / (fan_in + fan_out)))
    return jax.random.uniform(key, (fan_in, fan_out), jnp.float32, -bound, bound)


def linear_params(key, fan_in, fan_out):
    kw, kb = jax.random.split(key)
    w = xavier_uniform(kw, fan_in, fan_out)
    bb = float(1.0 / np.sqrt(fan_in))
    b = jax.random.uniform(kb, (1, fan_out), jnp.float32, -bb, bb)
    return w, b


def init_nerfpp_mlp(key, input_ch):
    """Deterministic synthetic parameters matching NeRFPPMLP.__init__ shapes."""
    pos_size = ((MAX_DEG_POINT - MIN_DEG_POINT) * 2 + 1) * input_ch + LOCAL_LATENT + WORLD_LATENT
    view_pos_size = (DEG_VIEW * 2 + 1) * 3
    keys = jax.random.split(key, NETDEPTH + NETDEPTH_COND + 3)

    pts = [linear_params(keys[0], pos_size, NETWIDTH)]
    for idx in range(NETDEPTH - 1):
        fi = NETWIDTH + pos_size if (idx % SKIP_LAYER == 0 and idx > 0) else NETWIDTH
        pts.append(linear_params(keys[idx + 1], fi, NETWIDTH))

    views = [linear_params(keys[NETDEPTH], NETWIDTH + view_pos_size, NETWIDTH_COND)]
    for idx in range(NETDEPTH_COND - 1):
        views.append(linear_params(keys[NETDEPTH + 1 + idx], NETWIDTH_COND, NETWIDTH_COND))

    bottleneck = linear_params(keys[NETDEPTH + NETDEPTH_COND + 0], NETWIDTH, NETWIDTH)
    density = linear_params(keys[NETDEPTH + NETDEPTH_COND + 1], NETWIDTH, NUM_DENSITY)
    rgb = linear_params(keys[NETDEPTH + NETDEPTH_COND + 2], NETWIDTH_COND, NUM_RGB)
    return dict(pts=pts, views=views, bottleneck=bottleneck, density=density, rgb=rgb,
                pos_size=pos_size, view_pos_size=view_pos_size)


# -------------------------- weight packing for the Pallas kernel --------------------------
PACKED_KEYS = ('w0', 'w1', 'w2', 'w3h', 'w3x', 'wvh', 'wvx', 'wv1', 'wr', 'biases')


def pack_head_weights(params):
    """Split / pad / fuse NeRFPPMLP weights for the kernel.

    - skip-layer weight split into (h part, input part); input rows zero-padded to POS_PAD
    - bottleneck composed into view-layer-0 (wbn @ wv0b), density head fused as column DCOL
      of that same matmul, cond rows of view-layer-0 placed at COND_OFFSET of the x slab
    - view branch widths padded to 128 output lanes; rgb head padded to 128 lanes
    - all biases packed into a single (8, 128) f32 table
    - matmul weights cast to bf16 (kernel accumulates in f32 on the MXU)
    """
    (w0, b0), (w1, b1), (w2, b2), (w3, b3) = params['pts']
    wbn, bbn = params['bottleneck']
    wd, bd = params['density']
    (wv0, bv0), (wv1, bv1) = params['views']
    wr, br = params['rgb']

    def pad_to(a, rows=None, cols=None):
        r, c = a.shape
        rr = r if rows is None else rows
        cc = c if cols is None else cols
        return jnp.pad(a, ((0, rr - r), (0, cc - c)))

    w3h, w3x = w3[:NETWIDTH], w3[NETWIDTH:]           # skip layer: cat([h, inputs]) @ W
    wv0b, wv0c = wv0[:NETWIDTH], wv0[NETWIDTH:]       # view layer 0: cat([bottleneck, cond]) @ W

    # Compose bottleneck into view-layer-0 (both linear, no nonlinearity in between) and fuse
    # the density head as an extra output column (linear -> commutes with the view average).
    wv_fused = wbn @ wv0b                             # (128, 64)
    bv_fused = bbn @ wv0b + bv0                       # (1, 64)

    wvh = jnp.zeros((NETWIDTH, VIEW_WIDTH), jnp.float32)
    wvh = wvh.at[:, :NETWIDTH_COND].set(wv_fused)
    wvh = wvh.at[:, DCOL:DCOL + NUM_DENSITY].set(wd)

    wvx = jnp.zeros((POS_PAD, VIEW_WIDTH), jnp.float32)
    wvx = wvx.at[COND_OFFSET:COND_OFFSET + wv0c.shape[0], :NETWIDTH_COND].set(wv0c)

    biases = jnp.zeros((8, VIEW_WIDTH), jnp.float32)
    biases = biases.at[0, :NETWIDTH].set(b0[0])
    biases = biases.at[1, :NETWIDTH].set(b1[0])
    biases = biases.at[2, :NETWIDTH].set(b2[0])
    biases = biases.at[3, :NETWIDTH].set(b3[0])
    biases = biases.at[4, :NETWIDTH_COND].set(bv_fused[0])
    biases = biases.at[4, DCOL].set(bd[0, 0])
    biases = biases.at[5, :NETWIDTH_COND].set(bv1[0])
    biases = biases.at[6, :NUM_RGB].set(br[0])

    bf16 = jnp.bfloat16
    return dict(
        w0=pad_to(w0, rows=POS_PAD).astype(bf16),
        w1=w1.astype(bf16),
        w2=w2.astype(bf16),
        w3h=w3h.astype(bf16),
        w3x=pad_to(w3x, rows=POS_PAD).astype(bf16),
        wvh=wvh.astype(bf16),
        wvx=wvx.astype(bf16),
        wv1=pad_to(wv1, rows=VIEW_WIDTH, cols=VIEW_WIDTH).astype(bf16),
        wr=pad_to(wr, rows=VIEW_WIDTH, cols=OUT_WIDTH).astype(bf16),
        biases=biases,
    )


# ---------------------------------- Pallas kernel ----------------------------------
def nerfpp_mlp_kernel(x_ref, w0, w1, w2, w3h, w3x, wvh, wvx, wv1, wr, bias_ref, out_ref):
    """NeRFPPMLP.forward + NeRF_TP.predict activations for one head x one tile of points.

    All V views of a point sit in this block, so the multi-view 'average' combine is local:
    views are folded into the matmul M dimension and reduced with cheap f32 adds.
    The cond features arrive spliced into x's tail lanes (trunk weight rows there are zero).
    """
    V, T, _ = x_ref.shape
    M = V * T
    inv_v = 1.0 / float(V)
    bf16 = jnp.bfloat16

    def mm(a, w_r):                               # bf16 x bf16 -> f32 accumulate on the MXU
        return jnp.dot(a, w_r[...], preferred_element_type=jnp.float32)

    b0 = bias_ref[0:1, :]
    b1 = bias_ref[1:2, :]
    b2 = bias_ref[2:3, :]
    b3 = bias_ref[3:4, :]
    bvd = bias_ref[4:5, :]
    bv1 = bias_ref[5:6, :]
    br = bias_ref[6:7, :]

    x = x_ref[...].reshape(M, x_ref.shape[-1])            # bf16, views folded into M

    # ---- pts trunk (per view; skip connection via split weights, no concatenation) ----
    h = jnp.maximum(mm(x, w0) + b0, 0.0)
    h = jnp.maximum(mm(h.astype(bf16), w1) + b1, 0.0)
    h = jnp.maximum(mm(h.astype(bf16), w2) + b2, 0.0)
    h = jnp.maximum(mm(h.astype(bf16), w3h) + mm(x, w3x) + b3, 0.0)       # (M, 128)

    # ---- fused bottleneck∘view-layer-0 + density column + cond contribution, per view ----
    gd = mm(h.astype(bf16), wvh) + mm(x, wvx) + bvd                       # (M, 128)
    comb = jnp.sum(gd.reshape(V, T, VIEW_WIDTH), axis=0) * inv_v          # view avg, (T, 128)
    raw_sigma = comb[:, DCOL:DCOL + NUM_DENSITY]                          # (T, 1)

    # ---- view-conditioned branch (lanes >= 64 carry zero weight downstream) ----
    g = jnp.maximum(comb, 0.0)
    g = jnp.maximum(mm(g.astype(bf16), wv1) + bv1, 0.0)                   # (T, 128)
    raw_rgb = mm(g.astype(bf16), wr) + br                                 # (T, 128); cols 0:3 valid

    # ---- NeRF_TP.predict() activations, packed into one lane-dense bf16 output slab ----
    z = raw_sigma + DENSITY_BIAS
    sigma = jnp.maximum(z, 0.0) + jnp.log1p(jnp.exp(-jnp.abs(z)))         # softplus (stable)
    rgb = pl.reciprocal(1.0 + jnp.exp(-raw_rgb), approx=True)             # sigmoid via EUP
    rgb = rgb * (1.0 + 2.0 * RGB_PADDING) - RGB_PADDING

    lane = lax.broadcasted_iota(jnp.int32, (T, OUT_WIDTH), 1)
    out_ref[...] = jnp.where(lane == SIGMA_COL, sigma, rgb).astype(out_ref.dtype)


# ---------------------------------- kernel wrapper ----------------------------------
def run_nerfpp_heads(packed_heads, xs, cond, point_tile=POINT_TILE):
    """Evaluate H NeRFPPMLP heads (stacked padded weights, shared condition) in ONE pallas_call.

    packed_heads : list of H dicts from pack_head_weights (identical shapes)
    xs           : list of H arrays (V, N, pos_size_h) f32 — [pos_enc | local | world] per head
    cond         : (V, N, view_pos_size) f32 — view-direction encoding shared by the heads
    returns      : rgb (H, N, 3) f32, sigma (H, N, 1) f32
    """
    H = len(packed_heads)
    V, N, _ = xs[0].shape
    T = min(point_tile, _round_up(N, 128))       # adapt tile to actual point count
    n_pad = _round_up(N, T)

    def prep_x(x):
        # zero-pad pos features to POS_PAD lanes / n_pad points and splice cond into tail lanes
        xp = jnp.zeros((V, n_pad, POS_PAD), jnp.float32)
        xp = xp.at[:, :N, :x.shape[2]].set(x)
        xp = xp.at[:, :N, COND_OFFSET:COND_OFFSET + cond.shape[2]].set(cond)
        return xp.astype(jnp.bfloat16)

    x_all = jnp.stack([prep_x(x) for x in xs])                            # (H, V, n_pad, POS_PAD)
    weights = [jnp.stack([hd[k] for hd in packed_heads]) for k in PACKED_KEYS]

    grid = (H, n_pad // T)                        # head axis outermost -> weights stay resident

    def head_spec(shape):
        nd = len(shape)
        return pl.BlockSpec((None,) + tuple(shape),
                            lambda h, i, _nd=nd: (h,) + (0,) * _nd)

    in_specs = [
        pl.BlockSpec((None, V, T, POS_PAD), lambda h, i: (h, 0, i, 0)),   # x (per head, incl cond)
    ] + [head_spec(w.shape[1:]) for w in weights]

    out = pl.pallas_call(
        nerfpp_mlp_kernel,
        out_shape=jax.ShapeDtypeStruct((H, n_pad, OUT_WIDTH), jnp.bfloat16),
        grid_spec=pltpu.PrefetchScalarGridSpec(
            num_scalar_prefetch=0,
            grid=grid,
            in_specs=in_specs,
            out_specs=pl.BlockSpec((None, T, OUT_WIDTH), lambda h, i: (h, i, 0))),
        compiler_params=pltpu.CompilerParams(
            dimension_semantics=("parallel", "parallel"),
            vmem_limit_bytes=32 * 1024 * 1024),
    )(x_all, *weights)

    rgb = out[:, :N, 0:NUM_RGB].astype(jnp.float32)
    sigma = out[:, :N, SIGMA_COL:SIGMA_COL + NUM_DENSITY].astype(jnp.float32)
    return rgb, sigma


# ----------------------- pure-JAX reference (torch op order, for validation) -----------------------
def nerfpp_mlp_ref(params, x, cond, matmul_dtype=jnp.bfloat16):
    """Reference following the torch forward exactly; matmul inputs cast to matmul_dtype with
    f32 accumulation (bf16 mirrors the kernel's MXU precision; f32 gives a full-precision check)."""
    V, N, P = x.shape

    def lin(h, w, b):
        return jnp.dot(h.astype(matmul_dtype), w.astype(matmul_dtype),
                       preferred_element_type=jnp.float32) + b

    h = x.reshape(V * N, P).astype(jnp.float32)
    cond = cond.reshape(V * N, -1).astype(jnp.float32)
    inputs = h
    bottleneck = None
    for layer in range(NETDEPTH):
        w, b = params['pts'][layer]
        h = jax.nn.relu(lin(h, w, b))
        if layer == COMBINE_LAYER:
            wb, bb = params['bottleneck']
            bottleneck = lin(h, wb, bb)
            h = h.reshape(V, N, -1).mean(axis=0)            # combine_interleaved, 'average'
        if layer % SKIP_LAYER == 0 and layer > 0:
            h = jnp.concatenate([h, inputs], axis=-1)
    wd, bd = params['density']
    raw_sigma = lin(h, wd, bd)                              # (N, 1)

    y = jnp.concatenate([bottleneck, cond], axis=-1)
    for layer in range(NETDEPTH_COND):
        w, b = params['views'][layer]
        y = lin(y, w, b)
        if layer == 0:
            y = y.reshape(V, N, -1).mean(axis=0)            # combine_interleaved, 'average'
        y = jax.nn.relu(y)
    wr, br = params['rgb']
    raw_rgb = lin(y, wr, br)                                # (N, 3)

    sigma = jax.nn.softplus(raw_sigma + DENSITY_BIAS)
    rgb = jax.nn.sigmoid(raw_rgb) * (1.0 + 2.0 * RGB_PADDING) - RGB_PADDING
    return rgb, sigma


# ---------------------------------- NeRF_TP forward (glue) ----------------------------------
def world2camera(points, rot, trans):
    # points (N,3), rot (V,3,3), trans (V,3) -> (V,N,3)
    return jnp.einsum('vij,nj->vni', rot, points) + trans[:, None, :]


def build_mlp_input(samples_cam, local_latent, world_latent):
    """NeRF_TP.predict() input assembly: pos_enc(samples) ++ local_latent ++ world_latent."""
    V, n_points, _ = samples_cam.shape
    samples_enc = pos_enc(samples_cam, MIN_DEG_POINT, MAX_DEG_POINT)       # (V, N, enc)
    ll = local_latent.reshape(V, n_points, -1)
    wl = world_latent.reshape(V, n_points, -1)
    return jnp.concatenate([samples_enc, ll, wl], axis=-1)                 # (V, N, pos_size)


def nerf_tp_forward(rays, mlps):
    # TODO(synk): GridEncoder / spatial_encoder.index / index_grid (CNN encoder + grid_sample)
    # have no clean Pallas equivalent and are not provided; latents are synthetic stand-ins.
    # TODO(synk): helper.sample_along_rays / sample_pdf (sphere intersection, inverted-sphere
    # bg parameterization, pdf resampling) and helper.volumetric_rendering are not provided;
    # uniform samples stand in and raw radiance fields are returned per level.
    ret = []
    key = jax.random.PRNGKey(1)
    R = rays['rays_o'].shape[0]
    levels = [(N_COARSE, 'fg_coarse', 'bg_coarse'), (N_FINE, 'fg_fine', 'bg_fine')]
    for n_samples, fg_name, bg_name in levels:
        n_points = R * n_samples
        # fg samples along rays (world) -> each source-camera frame
        t_vals = jnp.linspace(1e-4, 1.0, n_samples)
        fg_pts = (rays['rays_o'][:, None, :]
                  + t_vals[None, :, None] * rays['rays_d'][:, None, :]).reshape(-1, 3)
        fg_samples_cam = world2camera(fg_pts, rays['src_rot'], rays['src_trans'])      # (V,N,3)
        # bg samples (input_ch=4: camera-frame xyz + inverse-depth channel)
        bg_t = jnp.linspace(1.0, 3.0, n_samples)
        bg_pts = (rays['rays_o'][:, None, :]
                  + bg_t[None, :, None] * rays['rays_d'][:, None, :]).reshape(-1, 3)
        bg_cam = world2camera(bg_pts, rays['src_rot'], rays['src_trans'])
        depth = jnp.broadcast_to((1.0 / bg_t)[None, :], (R, n_samples)).reshape(1, n_points, 1)
        depth = jnp.broadcast_to(depth, (NUM_SRC_VIEWS, n_points, 1))
        bg_samples_cam = jnp.concatenate([bg_cam, depth], axis=-1)                     # (V,N,4)

        # view directions in each source camera frame, tiled over samples (shared fg/bg)
        viewdirs_cam = jnp.einsum('vij,rj->vri', rays['src_rot'], rays['viewdirs'])    # (V,R,3)
        vd_enc = pos_enc(viewdirs_cam, 0, DEG_VIEW)                                    # (V,R,VD)
        cond_tile = jnp.broadcast_to(
            vd_enc[:, :, None, :],
            (NUM_SRC_VIEWS, R, n_samples, vd_enc.shape[-1])).reshape(NUM_SRC_VIEWS, n_points, -1)

        key, k1, k2, k3, k4 = jax.random.split(key, 5)
        wl_fg = 0.1 * jax.random.normal(k1, (NUM_SRC_VIEWS * n_points, WORLD_LATENT), jnp.float32)
        ll_fg = 0.1 * jax.random.normal(k2, (NUM_SRC_VIEWS * n_points, LOCAL_LATENT), jnp.float32)
        wl_bg = 0.1 * jax.random.normal(k3, (NUM_SRC_VIEWS * n_points, WORLD_LATENT), jnp.float32)
        ll_bg = 0.1 * jax.random.normal(k4, (NUM_SRC_VIEWS * n_points, LOCAL_LATENT), jnp.float32)

        fg_x = build_mlp_input(fg_samples_cam, ll_fg, wl_fg)
        bg_x = build_mlp_input(bg_samples_cam, ll_bg, wl_bg)

        # ONE pallas_call per level: fg + bg heads stacked on a leading "head" grid axis
        rgb, sigma = run_nerfpp_heads(
            [mlps[fg_name]['packed'], mlps[bg_name]['packed']], [fg_x, bg_x], cond_tile)
        fg_rgb = rgb[0].reshape(R, n_samples, NUM_RGB)
        fg_sigma = sigma[0].reshape(R, n_samples, NUM_DENSITY)
        bg_rgb = rgb[1].reshape(R, n_samples, NUM_RGB)
        bg_sigma = sigma[1].reshape(R, n_samples, NUM_DENSITY)
        ret.append((fg_rgb, fg_sigma, bg_rgb, bg_sigma))
    return ret


# ---------------------------------- main ----------------------------------
if __name__ == "__main__":
    key = jax.random.PRNGKey(0)
    k_mlp, k_rays, k_val = jax.random.split(key, 3)
    km = jax.random.split(k_mlp, 4)
    mlps = {}
    for name, kk, ch in (('fg_coarse', km[0], 3), ('fg_fine', km[1], 3),
                         ('bg_coarse', km[2], 4), ('bg_fine', km[3], 4)):
        raw = init_nerfpp_mlp(kk, input_ch=ch)
        mlps[name] = dict(raw=raw, packed=pack_head_weights(raw))

    kr = jax.random.split(k_rays, 4)
    rays_o = 0.1 * jax.random.normal(kr[0], (N_RAYS, 3), jnp.float32)
    rays_d = jax.random.normal(kr[1], (N_RAYS, 3), jnp.float32)
    rays_d = rays_d / jnp.linalg.norm(rays_d, axis=-1, keepdims=True)
    src_rot = (jnp.tile(jnp.eye(3, dtype=jnp.float32)[None], (NUM_SRC_VIEWS, 1, 1))
               + 0.01 * jax.random.normal(kr[2], (NUM_SRC_VIEWS, 3, 3), jnp.float32))
    src_trans = 0.1 * jax.random.normal(kr[3], (NUM_SRC_VIEWS, 3), jnp.float32)
    rays = dict(rays_o=rays_o, rays_d=rays_d, viewdirs=rays_d,
                src_rot=src_rot, src_trans=src_trans)

    # full NeRF_TP-style forward (coarse + fine levels, fg + bg heads) using the Pallas MLP kernel
    ret = nerf_tp_forward(rays, mlps)
    ret = jax.block_until_ready(ret)

    # ---- validate the multi-head Pallas kernel against the pure-JAX reference ----
    n_val = 96                                  # not a tile multiple -> exercises point padding
    kv = jax.random.split(k_val, 3)
    x_fg = jax.random.normal(kv[0], (NUM_SRC_VIEWS, n_val, POS_SIZE_FG), jnp.float32)
    x_bg = jax.random.normal(kv[1], (NUM_SRC_VIEWS, n_val, POS_SIZE_BG), jnp.float32)
    c_val = jax.random.normal(kv[2], (NUM_SRC_VIEWS, n_val, VIEW_POS_SIZE), jnp.float32)

    rgb_k, sig_k = run_nerfpp_heads(
        [mlps['fg_coarse']['packed'], mlps['bg_coarse']['packed']], [x_fg, x_bg], c_val)
    jax.block_until_ready((rgb_k, sig_k))

    for idx, (name, x_h) in enumerate((('fg_coarse', x_fg), ('bg_coarse', x_bg))):
        raw = mlps[name]['raw']
        # reference mirroring the kernel's bf16 MXU inputs (f32 accumulation); slightly looser
        # tolerance than before: the composed wbn@wv0b weight and the bf16 output slab change
        # rounding (still exact in real arithmetic).
        rgb_r, sig_r = nerfpp_mlp_ref(raw, x_h, c_val, matmul_dtype=jnp.bfloat16)
        np.testing.assert_allclose(np.asarray(rgb_k[idx]), np.asarray(rgb_r), rtol=3e-2, atol=3e-2)
        np.testing.assert_allclose(np.asarray(sig_k[idx]), np.asarray(sig_r), rtol=3e-2, atol=3e-2)
        # full-f32 reference: only difference is bf16 rounding of matmul inputs/outputs
        rgb_f, sig_f = nerfpp_mlp_ref(raw, x_h, c_val, matmul_dtype=jnp.float32)
        np.testing.assert_allclose(np.asarray(rgb_k[idx]), np.asarray(rgb_f), rtol=1e-1, atol=1e-1)
        np.testing.assert_allclose(np.asarray(sig_k[idx]), np.asarray(sig_f), rtol=1e-1, atol=1e-1)

    print("KERNEL_OK")
</pallas_src>

<mosaic_0001>
module attributes {stable_mosaic.version = 11 : i64} {
  func.func @nerfpp_mlp_kernel(%arg0: i32, %arg1: i32, %arg2: memref<1x3x128x128xbf16, #tpu.memory_space<vmem>>, %arg3: memref<1x128x128xbf16, #tpu.memory_space<vmem>>, %arg4: memref<1x128x128xbf16, #tpu.memory_space<vmem>>, %arg5: memref<1x128x128xbf16, #tpu.memory_space<vmem>>, %arg6: memref<1x128x128xbf16, #tpu.memory_space<vmem>>, %arg7: memref<1x128x128xbf16, #tpu.memory_space<vmem>>, %arg8: memref<1x128x128xbf16, #tpu.memory_space<vmem>>, %arg9: memref<1x128x128xbf16, #tpu.memory_space<vmem>>, %arg10: memref<1x128x128xbf16, #tpu.memory_space<vmem>>, %arg11: memref<1x128x128xbf16, #tpu.memory_space<vmem>>, %arg12: memref<1x8x128xf32, #tpu.memory_space<vmem>>, %arg13: memref<1x128x128xbf16, #tpu.memory_space<vmem>>) attributes {dimension_semantics = [#tpu.dimension_semantics<parallel>, #tpu.dimension_semantics<parallel>], iteration_bounds = array<i64: 2, 1>, scalar_prefetch = 0 : i64, scratch_operands = 0 : i64, tpu.core_type = #tpu.core_type<tc>, window_params = [{transform_indices = @transform_0, window_bounds = array<i64: 1, 3, 128, 128>}, {transform_indices = @transform_1, window_bounds = array<i64: 1, 128, 128>}, {transform_indices = @transform_2, window_bounds = array<i64: 1, 128, 128>}, {transform_indices = @transform_3, window_bounds = array<i64: 1, 128, 128>}, {transform_indices = @transform_4, window_bounds = array<i64: 1, 128, 128>}, {transform_indices = @transform_5, window_bounds = array<i64: 1, 128, 128>}, {transform_indices = @transform_6, window_bounds = array<i64: 1, 128, 128>}, {transform_indices = @transform_7, window_bounds = array<i64: 1, 128, 128>}, {transform_indices = @transform_8, window_bounds = array<i64: 1, 128, 128>}, {transform_indices = @transform_9, window_bounds = array<i64: 1, 128, 128>}, {transform_indices = @transform_10, window_bounds = array<i64: 1, 8, 128>}, {transform_indices = @transform_11, window_bounds = array<i64: 1, 128, 128>}]} {
    %c0 = arith.constant 0 : index
    %c0_0 = arith.constant 0 : index
    %c0_1 = arith.constant 0 : index
    %0 = vector.load %arg12[%c0, %c0_0, %c0_1] : memref<1x8x128xf32, #tpu.memory_space<vmem>>, vector<1x1x128xf32>
    %1 = vector.shape_cast %0 : vector<1x1x128xf32> to vector<1x128xf32>
    %c0_2 = arith.constant 0 : index
    %c1 = arith.constant 1 : index
    %c0_3 = arith.constant 0 : index
    %2 = vector.load %arg12[%c0_2, %c1, %c0_3] : memref<1x8x128xf32, #tpu.memory_space<vmem>>, vector<1x1x128xf32>
    %3 = vector.shape_cast %2 : vector<1x1x128xf32> to vector<1x128xf32>
    %c0_4 = arith.constant 0 : index
    %c2 = arith.constant 2 : index
    %c0_5 = arith.constant 0 : index
    %4 = vector.load %arg12[%c0_4, %c2, %c0_5] : memref<1x8x128xf32, #tpu.memory_space<vmem>>, vector<1x1x128xf32>
    %5 = vector.shape_cast %4 : vector<1x1x128xf32> to vector<1x128xf32>
    %c0_6 = arith.constant 0 : index
    %c3 = arith.constant 3 : index
    %c0_7 = arith.constant 0 : index
    %6 = vector.load %arg12[%c0_6, %c3, %c0_7] : memref<1x8x128xf32, #tpu.memory_space<vmem>>, vector<1x1x128xf32>
    %7 = vector.shape_cast %6 : vector<1x1x128xf32> to vector<1x128xf32>
    %c0_8 = arith.constant 0 : index
    %c4 = arith.constant 4 : index
    %c0_9 = arith.constant 0 : index
    %8 = vector.load %arg12[%c0_8, %c4, %c0_9] : memref<1x8x128xf32, #tpu.memory_space<vmem>>, vector<1x1x128xf32>
    %9 = vector.shape_cast %8 : vector<1x1x128xf32> to vector<1x128xf32>
    %c0_10 = arith.constant 0 : index
    %c5 = arith.constant 5 : index
    %c0_11 = arith.constant 0 : index
    %10 = vector.load %arg12[%c0_10, %c5, %c0_11] : memref<1x8x128xf32, #tpu.memory_space<vmem>>, vector<1x1x128xf32>
    %11 = vector.shape_cast %10 : vector<1x1x128xf32> to vector<1x128xf32>
    %c0_12 = arith.constant 0 : index
    %c6 = arith.constant 6 : index
    %c0_13 = arith.constant 0 : index
    %12 = vector.load %arg12[%c0_12, %c6, %c0_13] : memref<1x8x128xf32, #tpu.memory_space<vmem>>, vector<1x1x128xf32>
    %13 = vector.shape_cast %12 : vector<1x1x128xf32> to vector<1x128xf32>
    %c0_14 = arith.constant 0 : index
    %c0_15 = arith.constant 0 : index
    %c0_16 = arith.constant 0 : index
    %c0_17 = arith.constant 0 : index
    %14 = vector.load %arg2[%c0_14, %c0_15, %c0_16, %c0_17] : memref<1x3x128x128xbf16, #tpu.memory_space<vmem>>, vector<1x3x128x128xbf16>
    %15 = vector.shape_cast %14 : vector<1x3x128x128xbf16> to vector<3x128x128xbf16>
    %16 = vector.shape_cast %15 : vector<3x128x128xbf16> to vector<384x128xbf16>
    %c0_18 = arith.constant 0 : index
    %c0_19 = arith.constant 0 : index
    %c0_20 = arith.constant 0 : index
    %17 = vector.load %arg3[%c0_18, %c0_19, %c0_20] : memref<1x128x128xbf16, #tpu.memory_space<vmem>>, vector<1x128x128xbf16>
    %18 = vector.shape_cast %17 : vector<1x128x128xbf16> to vector<128x128xbf16>
    %cst = arith.constant dense<0.000000e+00> : vector<384x128xf32>
    %19 = tpu.matmul %16, %18, %cst {dimension_numbers = #tpu.dot_dimension_numbers<[1], [0], [0], [1], [0, 0, 1, 1], [], []>} : vector<384x128xbf16>, vector<128x128xbf16>, vector<384x128xf32> -> vector<384x128xf32>
    %20 = vector.broadcast %1 : vector<1x128xf32> to vector<384x128xf32>
    %21 = arith.addf %19, %20 : vector<384x128xf32>
    %cst_21 = arith.constant 0.000000e+00 : f32
    %22 = vector.broadcast %cst_21 : f32 to vector<384x128xf32>
    %23 = arith.maximumf %21, %22 : vector<384x128xf32>
    %24 = arith.truncf %23 : vector<384x128xf32> to vector<384x128xbf16>
    %c0_22 = arith.constant 0 : index
    %c0_23 = arith.constant 0 : index
    %c0_24 = arith.constant 0 : index
    %25 = vector.load %arg4[%c0_22, %c0_23, %c0_24] : memref<1x128x128xbf16, #tpu.memory_space<vmem>>, vector<1x128x128xbf16>
    %26 = vector.shape_cast %25 : vector<1x128x128xbf16> to vector<128x128xbf16>
    %cst_25 = arith.constant dense<0.000000e+00> : vector<384x128xf32>
    %27 = tpu.matmul %24, %26, %cst_25 {dimension_numbers = #tpu.dot_dimension_numbers<[1], [0], [0], [1], [0, 0, 1, 1], [], []>} : vector<384x128xbf16>, vector<128x128xbf16>, vector<384x128xf32> -> vector<384x128xf32>
    %28 = vector.broadcast %3 : vector<1x128xf32> to vector<384x128xf32>
    %29 = arith.addf %27, %28 : vector<384x128xf32>
    %cst_26 = arith.constant 0.000000e+00 : f32
    %30 = vector.broadcast %cst_26 : f32 to vector<384x128xf32>
    %31 = arith.maximumf %29, %30 : vector<384x128xf32>
    %32 = arith.truncf %31 : vector<384x128xf32> to vector<384x128xbf16>
    %c0_27 = arith.constant 0 : index
    %c0_28 = arith.constant 0 : index
    %c0_29 = arith.constant 0 : index
    %33 = vector.load %arg5[%c0_27, %c0_28, %c0_29] : memref<1x128x128xbf16, #tpu.memory_space<vmem>>, vector<1x128x128xbf16>
    %34 = vector.shape_cast %33 : vector<1x128x128xbf16> to vector<128x128xbf16>
    %cst_30 = arith.constant dense<0.000000e+00> : vector<384x128xf32>
    %35 = tpu.matmul %32, %34, %cst_30 {dimension_numbers = #tpu.dot_dimension_numbers<[1], [0], [0], [1], [0, 0, 1, 1], [], []>} : vector<384x128xbf16>, vector<128x128xbf16>, vector<384x128xf32> -> vector<384x128xf32>
    %36 = vector.broadcast %5 : vector<1x128xf32> to vector<384x128xf32>
    %37 = arith.addf %35, %36 : vector<384x128xf32>
    %cst_31 = arith.constant 0.000000e+00 : f32
    %38 = vector.broadcast %cst_31 : f32 to vector<384x128xf32>
    %39 = arith.maximumf %37, %38 : vector<384x128xf32>
    %40 = arith.truncf %39 : vector<384x128xf32> to vector<384x128xbf16>
    %c0_32 = arith.constant 0 : index
    %c0_33 = arith.constant 0 : index
    %c0_34 = arith.constant 0 : index
    %41 = vector.load %arg6[%c0_32, %c0_33, %c0_34] : memref<1x128x128xbf16, #tpu.memory_space<vmem>>, vector<1x128x128xbf16>
    %42 = vector.shape_cast %41 : vector<1x128x128xbf16> to vector<128x128xbf16>
    %cst_35 = arith.constant dense<0.000000e+00> : vector<384x128xf32>
    %43 = tpu.matmul %40, %42, %cst_35 {dimension_numbers = #tpu.dot_dimension_numbers<[1], [0], [0], [1], [0, 0, 1, 1], [], []>} : vector<384x128xbf16>, vector<128x128xbf16>, vector<384x128xf32> -> vector<384x128xf32>
    %c0_36 = arith.constant 0 : index
    %c0_37 = arith.constant 0 : index
    %c0_38 = arith.constant 0 : index
    %44 = vector.load %arg7[%c0_36, %c0_37, %c0_38] : memref<1x128x128xbf16, #tpu.memory_space<vmem>>, vector<1x128x128xbf16>
    %45 = vector.shape_cast %44 : vector<1x128x128xbf16> to vector<128x128xbf16>
    %cst_39 = arith.constant dense<0.000000e+00> : vector<384x128xf32>
    %46 = tpu.matmul %16, %45, %cst_39 {dimension_numbers = #tpu.dot_dimension_numbers<[1], [0], [0], [1], [0, 0, 1, 1], [], []>} : vector<384x128xbf16>, vector<128x128xbf16>, vector<384x128xf32> -> vector<384x128xf32>
    %47 = arith.addf %43, %46 : vector<384x128xf32>
    %48 = vector.broadcast %7 : vector<1x128xf32> to vector<384x128xf32>
    %49 = arith.addf %47, %48 : vector<384x128xf32>
    %cst_40 = arith.constant 0.000000e+00 : f32
    %50 = vector.broadcast %cst_40 : f32 to vector<384x128xf32>
    %51 = arith.maximumf %49, %50 : vector<384x128xf32>
    %52 = arith.truncf %51 : vector<384x128xf32> to vector<384x128xbf16>
    %c0_41 = arith.constant 0 : index
    %c0_42 = arith.constant 0 : index
    %c0_43 = arith.constant 0 : index
    %53 = vector.load %arg8[%c0_41, %c0_42, %c0_43] : memref<1x128x128xbf16, #tpu.memory_space<vmem>>, vector<1x128x128xbf16>
    %54 = vector.shape_cast %53 : vector<1x128x128xbf16> to vector<128x128xbf16>
    %cst_44 = arith.constant dense<0.000000e+00> : vector<384x128xf32>
    %55 = tpu.matmul %52, %54, %cst_44 {dimension_numbers = #tpu.dot_dimension_numbers<[1], [0], [0], [1], [0, 0, 1, 1], [], []>} : vector<384x128xbf16>, vector<128x128xbf16>, vector<384x128xf32> -> vector<384x128xf32>
    %c0_45 = arith.constant 0 : index
    %c0_46 = arith.constant 0 : index
    %c0_47 = arith.constant 0 : index
    %56 = vector.load %arg9[%c0_45, %c0_46, %c0_47] : memref<1x128x128xbf16, #tpu.memory_space<vmem>>, vector<1x128x128xbf16>
    %57 = vector.shape_cast %56 : vector<1x128x128xbf16> to vector<128x128xbf16>
    %cst_48 = arith.constant dense<0.000000e+00> : vector<384x128xf32>
    %58 = tpu.matmul %16, %57, %cst_48 {dimension_numbers = #tpu.dot_dimension_numbers<[1], [0], [0], [1], [0, 0, 1, 1], [], []>} : vector<384x128xbf16>, vector<128x128xbf16>, vector<384x128xf32> -> vector<384x128xf32>
    %59 = arith.addf %55, %58 : vector<384x128xf32>
    %60 = vector.broadcast %9 : vector<1x128xf32> to vector<384x128xf32>
    %61 = arith.addf %59, %60 : vector<384x128xf32>
    %62 = vector.shape_cast %61 : vector<384x128xf32> to vector<3x128x128xf32>
    %cst_49 = arith.constant dense<0.000000e+00> : vector<128x128xf32>
    %63 = vector.multi_reduction <add>, %62, %cst_49 [0] : vector<3x128x128xf32> to vector<128x128xf32>
    %cst_50 = arith.constant 0.333333343 : f32
    %64 = vector.broadcast %cst_50 : f32 to vector<128x128xf32>
    %65 = arith.mulf %63, %64 : vector<128x128xf32>
    %66 = vector.extract_strided_slice %65 {offsets = [0, 64], sizes = [128, 1], strides = [1, 1]} : vector<128x128xf32> to vector<128x1xf32>
    %cst_51 = arith.constant 0.000000e+00 : f32
    %67 = vector.broadcast %cst_51 : f32 to vector<128x128xf32>
    %68 = arith.maximumf %65, %67 : vector<128x128xf32>
    %69 = arith.truncf %68 : vector<128x128xf32> to vector<128x128xbf16>
    %c0_52 = arith.constant 0 : index
    %c0_53 = arith.constant 0 : index
    %c0_54 = arith.constant 0 : index
    %70 = vector.load %arg10[%c0_52, %c0_53, %c0_54] : memref<1x128x128xbf16, #tpu.memory_space<vmem>>, vector<1x128x128xbf16>
    %71 = vector.shape_cast %70 : vector<1x128x128xbf16> to vector<128x128xbf16>
    %cst_55 = arith.constant dense<0.000000e+00> : vector<128x128xf32>
    %72 = tpu.matmul %69, %71, %cst_55 {dimension_numbers = #tpu.dot_dimension_numbers<[1], [0], [0], [1], [0, 0, 1, 1], [], []>} : vector<128x128xbf16>, vector<128x128xbf16>, vector<128x128xf32> -> vector<128x128xf32>
    %73 = vector.broadcast %11 : vector<1x128xf32> to vector<128x128xf32>
    %74 = arith.addf %72, %73 : vector<128x128xf32>
    %cst_56 = arith.constant 0.000000e+00 : f32
    %75 = vector.broadcast %cst_56 : f32 to vector<128x128xf32>
    %76 = arith.maximumf %74, %75 : vector<128x128xf32>
    %77 = arith.truncf %76 : vector<128x128xf32> to vector<128x128xbf16>
    %c0_57 = arith.constant 0 : index
    %c0_58 = arith.constant 0 : index
    %c0_59 = arith.constant 0 : index
    %78 = vector.load %arg11[%c0_57, %c0_58, %c0_59] : memref<1x128x128xbf16, #tpu.memory_space<vmem>>, vector<1x128x128xbf16>
    %79 = vector.shape_cast %78 : vector<1x128x128xbf16> to vector<128x128xbf16>
    %cst_60 = arith.constant dense<0.000000e+00> : vector<128x128xf32>
    %80 = tpu.matmul %77, %79, %cst_60 {dimension_numbers = #tpu.dot_dimension_numbers<[1], [0], [0], [1], [0, 0, 1, 1], [], []>} : vector<128x128xbf16>, vector<128x128xbf16>, vector<128x128xf32> -> vector<128x128xf32>
    %81 = vector.broadcast %13 : vector<1x128xf32> to vector<128x128xf32>
    %82 = arith.addf %80, %81 : vector<128x128xf32>
    %cst_61 = arith.constant -1.000000e+00 : f32
    %83 = vector.broadcast %cst_61 : f32 to vector<128x1xf32>
    %84 = arith.addf %66, %83 : vector<128x1xf32>
    %cst_62 = arith.constant 0.000000e+00 : f32
    %85 = vector.broadcast %cst_62 : f32 to vector<128x1xf32>
    %86 = arith.maximumf %84, %85 : vector<128x1xf32>
    %87 = math.absf %84 : vector<128x1xf32>
    %cst_63 = arith.constant 0.000000e+00 : f32
    %88 = vector.broadcast %cst_63 : f32 to vector<128x1xf32>
    %89 = arith.subf %88, %87 : vector<128x1xf32>
    %90 = math.exp %89 : vector<128x1xf32>
    %91 = math.log1p %90 : vector<128x1xf32>
    %92 = arith.addf %86, %91 : vector<128x1xf32>
    %cst_64 = arith.constant 0.000000e+00 : f32
    %93 = vector.broadcast %cst_64 : f32 to vector<128x128xf32>
    %94 = arith.subf %93, %82 : vector<128x128xf32>
    %95 = math.exp %94 : vector<128x128xf32>
    %cst_65 = arith.constant 1.000000e+00 : f32
    %96 = vector.broadcast %cst_65 : f32 to vector<128x128xf32>
    %97 = arith.addf %96, %95 : vector<128x128xf32>
    %98 = tpu.reciprocal %97 {approx = true} : vector<128x128xf32> -> vector<128x128xf32>
    %cst_66 = arith.constant 1.002000e+00 : f32
    %99 = vector.broadcast %cst_66 : f32 to vector<128x128xf32>
    %100 = arith.mulf %98, %99 : vector<128x128xf32>
    %cst_67 = arith.constant 1.000000e-03 : f32
    %101 = vector.broadcast %cst_67 : f32 to vector<128x128xf32>
    %102 = arith.subf %100, %101 : vector<128x128xf32>
    %103 = tpu.iota {dimensions = array<i32: 1>} : vector<128x128xi32>
    %c3_i32 = arith.constant 3 : i32
    %104 = vector.broadcast %c3_i32 : i32 to vector<128x128xi32>
    %105 = arith.cmpi eq, %103, %104 : vector<128x128xi32>
    %106 = vector.shape_cast %92 : vector<128x1xf32> to vector<128x1xf32>
    %107 = vector.broadcast %106 : vector<128x1xf32> to vector<128x128xf32>
    %108 = arith.select %105, %107, %102 : vector<128x128xi1>, vector<128x128xf32>
    %109 = arith.truncf %108 : vector<128x128xf32> to vector<128x128xbf16>
    %c0_68 = arith.constant 0 : index
    %c0_69 = arith.constant 0 : index
    %c0_70 = arith.constant 0 : index
    %110 = vector.load %arg13[%c0_68, %c0_69, %c0_70] : memref<1x128x128xbf16, #tpu.memory_space<vmem>>, vector<1x128x128xbf16>
    %111 = vector.shape_cast %110 : vector<1x128x128xbf16> to vector<128x128xbf16>
    %112 = vector.shape_cast %109 : vector<128x128xbf16> to vector<1x128x128xbf16>
    tpu.vector_store %arg13[%c0_68, %c0_69, %c0_70], %112 {strides = array<i32>} : memref<1x128x128xbf16, #tpu.memory_space<vmem>>, vector<1x128x128xbf16>,
    return
  }
  func.func @transform_0(%arg0: i32, %arg1: i32) -> (i32, i32, i32, i32) {
    %c0_i32 = arith.constant 0 : i32
    %c0_i32_0 = arith.constant 0 : i32
    %c0_i32_1 = arith.constant 0 : i32
    return %arg0, %c0_i32, %arg1, %c0_i32_0 : i32, i32, i32, i32
  }
  func.func @transform_1(%arg0: i32, %arg1: i32) -> (i32, i32, i32) {
    %c0_i32 = arith.constant 0 : i32
    %c0_i32_0 = arith.constant 0 : i32
    %c0_i32_1 = arith.constant 0 : i32
    return %arg0, %c0_i32, %c0_i32_0 : i32, i32, i32
  }
  func.func @transform_2(%arg0: i32, %arg1: i32) -> (i32, i32, i32) {
    %c0_i32 = arith.constant 0 : i32
    %c0_i32_0 = arith.constant 0 : i32
    %c0_i32_1 = arith.constant 0 : i32
    return %arg0, %c0_i32, %c0_i32_0 : i32, i32, i32
  }
  func.func @transform_3(%arg0: i32, %arg1: i32) -> (i32, i32, i32) {
    %c0_i32 = arith.constant 0 : i32
    %c0_i32_0 = arith.constant 0 : i32
    %c0_i32_1 = arith.constant 0 : i32
    return %arg0, %c0_i32, %c0_i32_0 : i32, i32, i32
  }
  func.func @transform_4(%arg0: i32, %arg1: i32) -> (i32, i32, i32) {
    %c0_i32 = arith.constant 0 : i32
    %c0_i32_0 = arith.constant 0 : i32
    %c0_i32_1 = arith.constant 0 : i32
    return %arg0, %c0_i32, %c0_i32_0 : i32, i32, i32
  }
  func.func @transform_5(%arg0: i32, %arg1: i32) -> (i32, i32, i32) {
    %c0_i32 = arith.constant 0 : i32
    %c0_i32_0 = arith.constant 0 : i32
    %c0_i32_1 = arith.constant 0 : i32
    return %arg0, %c0_i32, %c0_i32_0 : i32, i32, i32
  }
  func.func @transform_6(%arg0: i32, %arg1: i32) -> (i32, i32, i32) {
    %c0_i32 = arith.constant 0 : i32
    %c0_i32_0 = arith.constant 0 : i32
    %c0_i32_1 = arith.constant 0 : i32
    return %arg0, %c0_i32, %c0_i32_0 : i32, i32, i32
  }
  func.func @transform_7(%arg0: i32, %arg1: i32) -> (i32, i32, i32) {
    %c0_i32 = arith.constant 0 : i32
    %c0_i32_0 = arith.constant 0 : i32
    %c0_i32_1 = arith.constant 0 : i32
    return %arg0, %c0_i32, %c0_i32_0 : i32, i32, i32
  }
  func.func @transform_8(%arg0: i32, %arg1: i32) -> (i32, i32, i32) {
    %c0_i32 = arith.constant 0 : i32
    %c0_i32_0 = arith.constant 0 : i32
    %c0_i32_1 = arith.constant 0 : i32
    return %arg0, %c0_i32, %c0_i32_0 : i32, i32, i32
  }
  func.func @transform_9(%arg0: i32, %arg1: i32) -> (i32, i32, i32) {
    %c0_i32 = arith.constant 0 : i32
    %c0_i32_0 = arith.constant 0 : i32
    %c0_i32_1 = arith.constant 0 : i32
    return %arg0, %c0_i32, %c0_i32_0 : i32, i32, i32
  }
  func.func @transform_10(%arg0: i32, %arg1: i32) -> (i32, i32, i32) {
    %c0_i32 = arith.constant 0 : i32
    %c0_i32_0 = arith.constant 0 : i32
    %c0_i32_1 = arith.constant 0 : i32
    return %arg0, %c0_i32, %c0_i32_0 : i32, i32, i32
  }
  func.func @transform_11(%arg0: i32, %arg1: i32) -> (i32, i32, i32) {
    %c0_i32 = arith.constant 0 : i32
    %c0_i32_0 = arith.constant 0 : i32
    return %arg0, %arg1, %c0_i32 : i32, i32, i32
  }
}

</mosaic_0001>

<llo_original>
// kernel: tpu_custom_call.1
$region0: #{tpu_custom_call.1}
  #allocation0 [shape = 'u32[]', space=smem, size = 0x4, offset = 0x4, fixed_abs, tag = 'smem constant byte address 0x4 - core index']
  #allocation1 [shape = 'u32[144,128]{1,0:T(1,128)}', space=vmem, size = 0x12000, scoped, tag = 'internal scratch']
  %s0 = inlined_call_operand.hbm [shape: bf16[2,3,128,128], index: 0, kind: input, shape index: {}]
  %s1 = inlined_call_operand.hbm [shape: bf16[2,128,128], index: 1, kind: input, shape index: {}]
  %s2 = inlined_call_operand.hbm [shape: bf16[2,128,128], index: 2, kind: input, shape index: {}]
  %s3 = inlined_call_operand.hbm [shape: bf16[2,128,128], index: 3, kind: input, shape index: {}]
  %s4 = inlined_call_operand.hbm [shape: bf16[2,128,128], index: 4, kind: input, shape index: {}]
  %s5 = inlined_call_operand.hbm [shape: bf16[2,128,128], index: 5, kind: input, shape index: {}]
  %s6 = inlined_call_operand.hbm [shape: bf16[2,128,128], index: 6, kind: input, shape index: {}]
  %s7 = inlined_call_operand.hbm [shape: bf16[2,128,128], index: 7, kind: input, shape index: {}]
  %s8 = inlined_call_operand.hbm [shape: bf16[2,128,128], index: 8, kind: input, shape index: {}]
  %s9 = inlined_call_operand.hbm [shape: bf16[2,128,128], index: 9, kind: input, shape index: {}]
  %s10 = inlined_call_operand.vmem [shape: f32[2,8,128], index: 10, kind: input, shape index: {}]
  %s11 = inlined_call_operand.hbm [shape: bf16[2,128,128], index: 11, kind: output, shape index: {}]
  %s12 = sld [smem:[#allocation0]]
  $region117: #{tpu_custom_call.1} parent=0
    _
  %s14 = ssub.s32 1, %s12
  %s15 = scalar_select 0, %s14, %s12
  $region1: #{tpu_custom_call.1} parent=0
    #allocation2 [shape = 'u8[196608]{0}', space=vmem, size = 0x30000, scoped, tag = 'input window, operand 0']
    #allocation3 [shape = 's32[2]{0}', space=sflag, size = 0x8, scoped, tag = 'scoped memory for tpu_custom_call.1']
    #allocation4 [shape = 's32[2]{0}', space=sflag, size = 0x8, scoped, tag = 'scoped memory for tpu_custom_call.1']
    #allocation5 [shape = 'u8[65536]{0}', space=vmem, size = 0x10000, scoped, tag = 'input window, operand 1']
    #allocation6 [shape = 's32[2]{0}', space=sflag, size = 0x8, scoped, tag = 'scoped memory for tpu_custom_call.1']
    #allocation7 [shape = 'u8[65536]{0}', space=vmem, size = 0x10000, scoped, tag = 'input window, operand 2']
    #allocation8 [shape = 'u8[65536]{0}', space=vmem, size = 0x10000, scoped, tag = 'input window, operand 3']
    #allocation9 [shape = 's32[2]{0}', space=sflag, size = 0x8, scoped, tag = 'scoped memory for tpu_custom_call.1']
    #allocation10 [shape = 'u8[65536]{0}', space=vmem, size = 0x10000, scoped, tag = 'input window, operand 4']
    #allocation11 [shape = 'u8[65536]{0}', space=vmem, size = 0x10000, scoped, tag = 'input window, operand 5']
    #allocation12 [shape = 's32[2]{0}', space=sflag, size = 0x8, scoped, tag = 'scoped memory for tpu_custom_call.1']
    #allocation13 [shape = 'u8[65536]{0}', space=vmem, size = 0x10000, scoped, tag = 'input window, operand 6']
    #allocation14 [shape = 'u8[65536]{0}', space=vmem, size = 0x10000, scoped, tag = 'input window, operand 7']
    #allocation15 [shape = 's32[2]{0}', space=sflag, size = 0x8, scoped, tag = 'scoped memory for tpu_custom_call.1']
    #allocation16 [shape = 'u8[65536]{0}', space=vmem, size = 0x10000, scoped, tag = 'input window, operand 8']
    #allocation17 [shape = 'u8[65536]{0}', space=vmem, size = 0x10000, scoped, tag = 'input window, operand 9']
    #allocation18 [shape = 's32[2]{0}', space=sflag, size = 0x8, scoped, tag = 'scoped memory for tpu_custom_call.1']
    #allocation19 [shape = 'u8[65536]{0}', space=vmem, size = 0x10000, scoped, tag = 'output window, operand 0']
    %16 = vsyncpa [#allocation3], 0
    %s17 = scalar_lea.sflag [#allocation3], 1
    %18 = vsyncpa %s17, 0
    %19 = vsyncpa [#allocation6], 0
    %s20 = scalar_lea.sflag [#allocation6], 1
    %21 = vsyncpa %s20, 0
    %22 = vsyncpa [#allocation9], 0
    %s23 = scalar_lea.sflag [#allocation9], 1
    %24 = vsyncpa %s23, 0
    %25 = vsyncpa [#allocation12], 0
    %s26 = scalar_lea.sflag [#allocation12], 1
    %27 = vsyncpa %s26, 0
    %28 = vsyncpa [#allocation15], 0
    %s29 = scalar_lea.sflag [#allocation15], 1
    %30 = vsyncpa %s29, 0
    %31 = vsyncpa [#allocation18], 0
    %s32 = scalar_lea.sflag [#allocation18], 1
    %33 = vsyncpa %s32, 0
    %34 = vsyncpa [#allocation4], 0
    %s35 = scalar_lea.sflag [#allocation4], 1
    %36 = vsyncpa %s35, 0
    loop: start=0, step=1, limit=4
    $region2: #{tpu_custom_call.1} parent=1 // loop_pre_header
      _
    $region3: #{tpu_custom_call.1} parent=1 // loop_header
      %s38 = sphi 0, %s42
      %p39 = scmp.ge.s32.totalorder %s38, 4
      %s45 = sphi 0, %s57
      %s46 = sphi 0, %s53
      %s47 = sphi 0, %s45
      %s48 = sphi 0, %s46
      %s49 = sphi 0, %s47
      %s50 = sphi 0, %s48
      %s62 = sphi 0, %s64
      %s65 = sphi 0, %s62
      %s66 = sphi 0, %s65
      %s82 = sphi 0, %s66
      %s88 = sphi 0, %s90
      %s91 = sphi 0, %s88
      %s92 = sphi 0, %s91
      %s108 = sphi 0, %s92
      %s114 = sphi 0, %s116
      %s117 = sphi 0, %s114
      %s118 = sphi 0, %s117
      %s134 = sphi 0, %s118
      %s140 = sphi 0, %s142
      %s143 = sphi 0, %s140
      %s144 = sphi 0, %s143
      %s160 = sphi 0, %s144
      %s166 = sphi 0, %s168
      %s169 = sphi 0, %s166
      %s170 = sphi 0, %s169
      %s186 = sphi 0, %s170
      %s192 = sphi 0, %s194
      %s195 = sphi 0, %s192
      %s196 = sphi 0, %s195
      %s212 = sphi 0, %s196
      %s218 = sphi 0, %s220
      %s221 = sphi 0, %s218
      %s222 = sphi 0, %s221
      %s238 = sphi 0, %s222
      %s244 = sphi 0, %s246
      %s247 = sphi 0, %s244
      %s248 = sphi 0, %s247
      %s264 = sphi 0, %s248
      %s270 = sphi 0, %s272
      %s273 = sphi 0, %s270
      %s274 = sphi 0, %s273
      %s290 = sphi 0, %s274
      %s296 = sphi 0, %s298
      %s299 = sphi 0, %s296
      %s300 = sphi 0, %s299
      %s316 = sphi 0, %s300
      %s322 = sphi 0, %s324
      %s325 = sphi 0, %s322
      %s326 = sphi 0, %s325
      %s342 = sphi 0, %s326
      %s350 = sphi 0, %s352
      %s353 = sphi 0, %s350
      %s354 = sphi 0, %s353
      %s370 = sphi 0, %s354
    $region4: #{tpu_custom_call.1} parent=1 // loop_header_branch
      %41 = sbr.rel (%p39) target = $region8
    $region5: #{tpu_custom_call.1} parent=1 // loop_body
      %s43 = ssub.s32 %s38, 1
      %s44 = ssub.s32 %s38, 2
      %s51 = sadd.s32 1, %s46
      %p52 = scmp.ge.s32.totalorder %s51, 1
      %s53 = scalar_select %p52, 0, %s51
      %s54 = sadd.s32 1, %s45
      %s55 = scalar_select %p52, %s54, %s45
      %p56 = scmp.ge.s32.totalorder %s55, 2
      %s57 = scalar_select %p56, 0, %s55
      %s58 = ssub.s32 %s45, %s57
      %s59 = ssub.s32 %s46, %s53
      %s60 = sor.u32 %s58, %s59
      %p61 = scmp.eq.s32.totalorder %s60, 0
      %s63 = sadd.s32 %s62, 1
      %s64 = scalar_select %p61, %s62, %s63
      %p67 = pneg %p61
      %p68 = scmp.eq.s32.totalorder %s38, 1
      %p69 = por %p67, %p68
      %p70 = scmp.ne.s32.totalorder %s62, %s65
      %p71 = scmp.eq.s32.totalorder %s38, 0
      %p72 = por %p70, %p71
      %p73 = scmp.ne.s32.totalorder %s62, %s65
      %p74 = scmp.eq.s32.totalorder %s43, 1
      %p75 = por %p73, %p74
      %p76 = scmp.ne.s32.totalorder %s65, %s66
      %p77 = scmp.eq.s32.totalorder %s43, 0
      %p78 = por %p76, %p77
      %p79 = scmp.ne.s32.totalorder %s65, %s66
      %p80 = scmp.eq.s32.totalorder %s44, 1
      %p81 = por %p79, %p80
      %p83 = scmp.ne.s32.totalorder %s66, %s82
      %p84 = scmp.eq.s32.totalorder %s44, 0
      %p85 = por %p83, %p84
      %s86 = ssub.s32 %s45, %s57
      %p87 = scmp.eq.s32.totalorder %s86, 0
      %s89 = sadd.s32 %s88, 1
      %s90 = scalar_select %p87, %s88, %s89
      %p93 = pneg %p87
      %p94 = scmp.eq.s32.totalorder %s38, 1
      %p95 = por %p93, %p94
      %p96 = scmp.ne.s32.totalorder %s88, %s91
      %p97 = scmp.eq.s32.totalorder %s38, 0
      %p98 = por %p96, %p97
      %p99 = scmp.ne.s32.totalorder %s88, %s91
      %p100 = scmp.eq.s32.totalorder %s43, 1
      %p101 = por %p99, %p100
      %p102 = scmp.ne.s32.totalorder %s91, %s92
      %p103 = scmp.eq.s32.totalorder %s43, 0
      %p104 = por %p102, %p103
      %p105 = scmp.ne.s32.totalorder %s91, %s92
      %p106 = scmp.eq.s32.totalorder %s44, 1
      %p107 = por %p105, %p106
      %p109 = scmp.ne.s32.totalorder %s92, %s108
      %p110 = scmp.eq.s32.totalorder %s44, 0
      %p111 = por %p109, %p110
      %s112 = ssub.s32 %s45, %s57
      %p113 = scmp.eq.s32.totalorder %s112, 0
      %s115 = sadd.s32 %s114, 1
      %s116 = scalar_select %p113, %s114, %s115
      %p119 = pneg %p113
      %p120 = scmp.eq.s32.totalorder %s38, 1
      %p121 = por %p119, %p120
      %p122 = scmp.ne.s32.totalorder %s114, %s117
      %p123 = scmp.eq.s32.totalorder %s38, 0
      %p124 = por %p122, %p123
      %p125 = scmp.ne.s32.totalorder %s114, %s117
      %p126 = scmp.eq.s32.totalorder %s43, 1
      %p127 = por %p125, %p126
      %p128 = scmp.ne.s32.totalorder %s117, %s118
      %p129 = scmp.eq.s32.totalorder %s43, 0
      %p130 = por %p128, %p129
      %p131 = scmp.ne.s32.totalorder %s117, %s118
      %p132 = scmp.eq.s32.totalorder %s44, 1
      %p133 = por %p131, %p132
      %p135 = scmp.ne.s32.totalorder %s118, %s134
      %p136 = scmp.eq.s32.totalorder %s44, 0
      %p137 = por %p135, %p136
      %s138 = ssub.s32 %s45, %s57
      %p139 = scmp.eq.s32.totalorder %s138, 0
      %s141 = sadd.s32 %s140, 1
      %s142 = scalar_select %p139, %s140, %s141
      %p145 = pneg %p139
      %p146 = scmp.eq.s32.totalorder %s38, 1
      %p147 = por %p145, %p146
      %p148 = scmp.ne.s32.totalorder %s140, %s143
      %p149 = scmp.eq.s32.totalorder %s38, 0
      %p150 = por %p148, %p149
      %p151 = scmp.ne.s32.totalorder %s140, %s143
      %p152 = scmp.eq.s32.totalorder %s43, 1
      %p153 = por %p151, %p152
      %p154 = scmp.ne.s32.totalorder %s143, %s144
      %p155 = scmp.eq.s32.totalorder %s43, 0
      %p156 = por %p154, %p155
      %p157 = scmp.ne.s32.totalorder %s143, %s144
      %p158 = scmp.eq.s32.totalorder %s44, 1
      %p159 = por %p157, %p158
      %p161 = scmp.ne.s32.totalorder %s144, %s160
      %p162 = scmp.eq.s32.totalorder %s44, 0
      %p163 = por %p161, %p162
      %s164 = ssub.s32 %s45, %s57
      %p165 = scmp.eq.s32.totalorder %s164, 0
      %s167 = sadd.s32 %s166, 1
      %s168 = scalar_select %p165, %s166, %s167
      %p171 = pneg %p165
      %p172 = scmp.eq.s32.totalorder %s38, 1
      %p173 = por %p171, %p172
      %p174 = scmp.ne.s32.totalorder %s166, %s169
      %p175 = scmp.eq.s32.totalorder %s38, 0
      %p176 = por %p174, %p175
      %p177 = scmp.ne.s32.totalorder %s166, %s169
      %p178 = scmp.eq.s32.totalorder %s43, 1
      %p179 = por %p177, %p178
      %p180 = scmp.ne.s32.totalorder %s169, %s170
      %p181 = scmp.eq.s32.totalorder %s43, 0
      %p182 = por %p180, %p181
      %p183 = scmp.ne.s32.totalorder %s169, %s170
      %p184 = scmp.eq.s32.totalorder %s44, 1
      %p185 = por %p183, %p184
      %p187 = scmp.ne.s32.totalorder %s170, %s186
      %p188 = scmp.eq.s32.totalorder %s44, 0
      %p189 = por %p187, %p188
      %s190 = ssub.s32 %s45, %s57
      %p191 = scmp.eq.s32.totalorder %s190, 0
      %s193 = sadd.s32 %s192, 1
      %s194 = scalar_select %p191, %s192, %s193
      %p197 = pneg %p191
      %p198 = scmp.eq.s32.totalorder %s38, 1
      %p199 = por %p197, %p198
      %p200 = scmp.ne.s32.totalorder %s192, %s195
      %p201 = scmp.eq.s32.totalorder %s38, 0
      %p202 = por %p200, %p201
      %p203 = scmp.ne.s32.totalorder %s192, %s195
      %p204 = scmp.eq.s32.totalorder %s43, 1
      %p205 = por %p203, %p204
      %p206 = scmp.ne.s32.totalorder %s195, %s196
      %p207 = scmp.eq.s32.totalorder %s43, 0
      %p208 = por %p206, %p207
      %p209 = scmp.ne.s32.totalorder %s195, %s196
      %p210 = scmp.eq.s32.totalorder %s44, 1
      %p211 = por %p209, %p210
      %p213 = scmp.ne.s32.totalorder %s196, %s212
      %p214 = scmp.eq.s32.totalorder %s44, 0
      %p215 = por %p213, %p214
      %s216 = ssub.s32 %s45, %s57
      %p217 = scmp.eq.s32.totalorder %s216, 0
      %s219 = sadd.s32 %s218, 1
      %s220 = scalar_select %p217, %s218, %s219
      %p223 = pneg %p217
      %p224 = scmp.eq.s32.totalorder %s38, 1
      %p225 = por %p223, %p224
      %p226 = scmp.ne.s32.totalorder %s218, %s221
      %p227 = scmp.eq.s32.totalorder %s38, 0
      %p228 = por %p226, %p227
      %p229 = scmp.ne.s32.totalorder %s218, %s221
      %p230 = scmp.eq.s32.totalorder %s43, 1
      %p231 = por %p229, %p230
      %p232 = scmp.ne.s32.totalorder %s221, %s222
      %p233 = scmp.eq.s32.totalorder %s43, 0
      %p234 = por %p232, %p233
      %p235 = scmp.ne.s32.totalorder %s221, %s222
      %p236 = scmp.eq.s32.totalorder %s44, 1
      %p237 = por %p235, %p236
      %p239 = scmp.ne.s32.totalorder %s222, %s238
      %p240 = scmp.eq.s32.totalorder %s44, 0
      %p241 = por %p239, %p240
      %s242 = ssub.s32 %s45, %s57
      %p243 = scmp.eq.s32.totalorder %s242, 0
      %s245 = sadd.s32 %s244, 1
      %s246 = scalar_select %p243, %s244, %s245
      %p249 = pneg %p243
      %p250 = scmp.eq.s32.totalorder %s38, 1
      %p251 = por %p249, %p250
      %p252 = scmp.ne.s32.totalorder %s244, %s247
      %p253 = scmp.eq.s32.totalorder %s38, 0
      %p254 = por %p252, %p253
      %p255 = scmp.ne.s32.totalorder %s244, %s247
      %p256 = scmp.eq.s32.totalorder %s43, 1
      %p257 = por %p255, %p256
      %p258 = scmp.ne.s32.totalorder %s247, %s248
      %p259 = scmp.eq.s32.totalorder %s43, 0
      %p260 = por %p258, %p259
      %p261 = scmp.ne.s32.totalorder %s247, %s248
      %p262 = scmp.eq.s32.totalorder %s44, 1
      %p263 = por %p261, %p262
      %p265 = scmp.ne.s32.totalorder %s248, %s264
      %p266 = scmp.eq.s32.totalorder %s44, 0
      %p267 = por %p265, %p266
      %s268 = ssub.s32 %s45, %s57
      %p269 = scmp.eq.s32.totalorder %s268, 0
      %s271 = sadd.s32 %s270, 1
      %s272 = scalar_select %p269, %s270, %s271
      %p275 = pneg %p269
      %p276 = scmp.eq.s32.totalorder %s38, 1
      %p277 = por %p275, %p276
      %p278 = scmp.ne.s32.totalorder %s270, %s273
      %p279 = scmp.eq.s32.totalorder %s38, 0
      %p280 = por %p278, %p279
      %p281 = scmp.ne.s32.totalorder %s270, %s273
      %p282 = scmp.eq.s32.totalorder %s43, 1
      %p283 = por %p281, %p282
      %p284 = scmp.ne.s32.totalorder %s273, %s274
      %p285 = scmp.eq.s32.totalorder %s43, 0
      %p286 = por %p284, %p285
      %p287 = scmp.ne.s32.totalorder %s273, %s274
      %p288 = scmp.eq.s32.totalorder %s44, 1
      %p289 = por %p287, %p288
      %p291 = scmp.ne.s32.totalorder %s274, %s290
      %p292 = scmp.eq.s32.totalorder %s44, 0
      %p293 = por %p291, %p292
      %s294 = ssub.s32 %s45, %s57
      %p295 = scmp.eq.s32.totalorder %s294, 0
      %s297 = sadd.s32 %s296, 1
      %s298 = scalar_select %p295, %s296, %s297
      %p301 = pneg %p295
      %p302 = scmp.eq.s32.totalorder %s38, 1
      %p303 = por %p301, %p302
      %p304 = scmp.ne.s32.totalorder %s296, %s299
      %p305 = scmp.eq.s32.totalorder %s38, 0
      %p306 = por %p304, %p305
      %p307 = scmp.ne.s32.totalorder %s296, %s299
      %p308 = scmp.eq.s32.totalorder %s43, 1
      %p309 = por %p307, %p308
      %p310 = scmp.ne.s32.totalorder %s299, %s300
      %p311 = scmp.eq.s32.totalorder %s43, 0
      %p312 = por %p310, %p311
      %p313 = scmp.ne.s32.totalorder %s299, %s300
      %p314 = scmp.eq.s32.totalorder %s44, 1
      %p315 = por %p313, %p314
      %p317 = scmp.ne.s32.totalorder %s300, %s316
      %p318 = scmp.eq.s32.totalorder %s44, 0
      %p319 = por %p317, %p318
      %s320 = ssub.s32 %s45, %s57
      %p321 = scmp.eq.s32.totalorder %s320, 0
      %s323 = sadd.s32 %s322, 1
      %s324 = scalar_select %p321, %s322, %s323
      %p327 = pneg %p321
      %p328 = scmp.eq.s32.totalorder %s38, 1
      %p329 = por %p327, %p328
      %p330 = scmp.ne.s32.totalorder %s322, %s325
      %p331 = scmp.eq.s32.totalorder %s38, 0
      %p332 = por %p330, %p331
      %p333 = scmp.ne.s32.totalorder %s322, %s325
      %p334 = scmp.eq.s32.totalorder %s43, 1
      %p335 = por %p333, %p334
      %p336 = scmp.ne.s32.totalorder %s325, %s326
      %p337 = scmp.eq.s32.totalorder %s43, 0
      %p338 = por %p336, %p337
      %p339 = scmp.ne.s32.totalorder %s325, %s326
      %p340 = scmp.eq.s32.totalorder %s44, 1
      %p341 = por %p339, %p340
      %p343 = scmp.ne.s32.totalorder %s326, %s342
      %p344 = scmp.eq.s32.totalorder %s44, 0
      %p345 = por %p343, %p344
      %s346 = ssub.s32 %s45, %s57
      %s347 = ssub.s32 %s46, %s53
      %s348 = sor.u32 %s346, %s347
      %p349 = scmp.eq.s32.totalorder %s348, 0
      %s351 = sadd.s32 %s350, 1
      %s352 = scalar_select %p349, %s350, %s351
      %p355 = pneg %p349
      %p356 = scmp.eq.s32.totalorder %s38, 1
      %p357 = por %p355, %p356
      %p358 = scmp.ne.s32.totalorder %s350, %s353
      %p359 = scmp.eq.s32.totalorder %s38, 0
      %p360 = por %p358, %p359
      %p361 = scmp.ne.s32.totalorder %s350, %s353
      %p362 = scmp.eq.s32.totalorder %s43, 1
      %p363 = por %p361, %p362
      %p364 = scmp.ne.s32.totalorder %s353, %s354
      %p365 = scmp.eq.s32.totalorder %s43, 0
      %p366 = por %p364, %p365
      %p367 = scmp.ne.s32.totalorder %s353, %s354
      %p368 = scmp.eq.s32.totalorder %s44, 1
      %p369 = por %p367, %p368
      %p371 = scmp.ne.s32.totalorder %s354, %s370
      %p372 = scmp.eq.s32.totalorder %s44, 0
      %p373 = por %p371, %p372
      %p374 = scmp.le.s32.totalorder 1, %s38
      %p375 = scmp.lt.s32.totalorder %s38, 3
      %p376 = pnand %p374, %p375
      %p377 = pneg %p376
      // Predicated region
      $region9: #{tpu_custom_call.1} parent=5 // pred_check
        _
      $region10: #{tpu_custom_call.1} parent=5 // pred_check_branch
        %379 = sbr.rel (%p376) target = $region12
      $region11: #{tpu_custom_call.1} parent=5 // pred_region
        %s380 = ssub.s32 %s38, 1
      $region12: #{tpu_custom_call.1} parent=5 // pred_fallthru
        _
      %p381 = scmp.lt.s32.totalorder %s38, 2
      // Predicated region
      $region13: #{tpu_custom_call.1} parent=5 // pred_check
        %p382 = pneg %p381
      $region14: #{tpu_custom_call.1} parent=5 // pred_check_branch
        %384 = sbr.rel (%p382) target = $region16
      $region15: #{tpu_custom_call.1} parent=5 // pred_region
        // Predicated region
        $region17: #{tpu_custom_call.1} parent=15 // pred_check
          %p385 = pneg %p72
        $region18: #{tpu_custom_call.1} parent=15 // pred_check_branch
          %387 = sbr.rel (%p385) target = $region20
        $region19: #{tpu_custom_call.1} parent=15 // pred_region
          %s388 = sand.u32 %s62, 1
          %s389 = scalar_lea.sflag [#allocation3], %s388
          %s390 = sand.u32 %s62, 1
          %s391 = smul.addr %s390, 192
          %s392 = scalar_lea.vmem [#allocation2], %s391
          %s393 = smul.u32 16, %s46
          %s395 = ssub.s32 3072, 3072
          %396 = vsyncadd %s389, %s395
          %s397 = smul.addr %s45, 48
          %s398 = sadd.s32 %s393, %s397
          %s399 = smul.addr %s398, 64
          %s400 = scalar_lea.hbm %s0, %s399
          %s401 = sshll.u32 %s392, 4
          %s402 = int_to_ptr.vmem [resolvable:$true] %s401
          %407 = dma.hbm_to_vmem [thread:$0]  %s400, 3072, %s402, %s389, 64, 64, 4
        $region20: #{tpu_custom_call.1} parent=15 // pred_fallthru
          _
        // Predicated region
        $region21: #{tpu_custom_call.1} parent=15 // pred_check
          %p408 = pneg %p98
        $region22: #{tpu_custom_call.1} parent=15 // pred_check_branch
          %410 = sbr.rel (%p408) target = $region24
        $region23: #{tpu_custom_call.1} parent=15 // pred_region
          %s411 = sand.u32 %s38, 1
          %s412 = scalar_lea.sflag [#allocation6], %s411
          %s413 = sand.u32 %s88, 1
          %s414 = smul.addr %s413, 64
          %s415 = scalar_lea.vmem [#allocation5], %s414
          %s417 = ssub.s32 1024, 1024
          %418 = vsyncadd %s412, %s417
          %s419 = smul.addr %s45, 16
          %s420 = smul.addr %s419, 64
          %s421 = scalar_lea.hbm %s1, %s420
          %s422 = sshll.u32 %s415, 4
          %s423 = int_to_ptr.vmem [resolvable:$true] %s422
          %428 = dma.hbm_to_vmem [thread:$0]  %s421, 1024, %s423, %s412, 64, 64, 4
        $region24: #{tpu_custom_call.1} parent=15 // pred_fallthru
          _
        // Predicated region
        $region25: #{tpu_custom_call.1} parent=15 // pred_check
          %p429 = pneg %p124
        $region26: #{tpu_custom_call.1} parent=15 // pred_check_branch
          %431 = sbr.rel (%p429) target = $region28
        $region27: #{tpu_custom_call.1} parent=15 // pred_region
          %s432 = sand.u32 %s38, 1
          %s433 = scalar_lea.sflag [#allocation6], %s432
          %s434 = sand.u32 %s114, 1
          %s435 = smul.addr %s434, 64
          %s436 = scalar_lea.vmem [#allocation7], %s435
          %s438 = ssub.s32 1024, 1024
          %439 = vsyncadd %s433, %s438
          %s440 = smul.addr %s45, 16
          %s441 = smul.addr %s440, 64
          %s442 = scalar_lea.hbm %s2, %s441
          %s443 = sshll.u32 %s436, 4
          %s444 = int_to_ptr.vmem [resolvable:$true] %s443
          %449 = dma.hbm_to_vmem [thread:$0]  %s442, 1024, %s444, %s433, 64, 64, 4
        $region28: #{tpu_custom_call.1} parent=15 // pred_fallthru
          _
        // Predicated region
        $region29: #{tpu_custom_call.1} parent=15 // pred_check
          %p450 = pneg %p150
        $region30: #{tpu_custom_call.1} parent=15 // pred_check_branch
          %452 = sbr.rel (%p450) target = $region32
        $region31: #{tpu_custom_call.1} parent=15 // pred_region
          %s453 = sand.u32 %s38, 1
          %s454 = scalar_lea.sflag [#allocation9], %s453
          %s455 = sand.u32 %s140, 1
          %s456 = smul.addr %s455, 64
          %s457 = scalar_lea.vmem [#allocation8], %s456
          %s459 = ssub.s32 1024, 1024
          %460 = vsyncadd %s454, %s459
          %s461 = smul.addr %s45, 16
          %s462 = smul.addr %s461, 64
          %s463 = scalar_lea.hbm %s3, %s462
          %s464 = sshll.u32 %s457, 4
          %s465 = int_to_ptr.vmem [resolvable:$true] %s464
          %470 = dma.hbm_to_vmem [thread:$0]  %s463, 1024, %s465, %s454, 64, 64, 4
        $region32: #{tpu_custom_call.1} parent=15 // pred_fallthru
          _
        // Predicated region
        $region33: #{tpu_custom_call.1} parent=15 // pred_check
          %p471 = pneg %p176
        $region34: #{tpu_custom_call.1} parent=15 // pred_check_branch
          %473 = sbr.rel (%p471) target = $region36
        $region35: #{tpu_custom_call.1} parent=15 // pred_region
          %s474 = sand.u32 %s38, 1
          %s475 = scalar_lea.sflag [#allocation9], %s474
          %s476 = sand.u32 %s166, 1
          %s477 = smul.addr %s476, 64
          %s478 = scalar_lea.vmem [#allocation10], %s477
          %s480 = ssub.s32 1024, 1024
          %481 = vsyncadd %s475, %s480
          %s482 = smul.addr %s45, 16
          %s483 = smul.addr %s482, 64
          %s484 = scalar_lea.hbm %s4, %s483
          %s485 = sshll.u32 %s478, 4
          %s486 = int_to_ptr.vmem [resolvable:$true] %s485
          %491 = dma.hbm_to_vmem [thread:$0]  %s484, 1024, %s486, %s475, 64, 64, 4
        $region36: #{tpu_custom_call.1} parent=15 // pred_fallthru
          _
        // Predicated region
        $region37: #{tpu_custom_call.1} parent=15 // pred_check
          %p492 = pneg %p202
        $region38: #{tpu_custom_call.1} parent=15 // pred_check_branch
          %494 = sbr.rel (%p492) target = $region40
        $region39: #{tpu_custom_call.1} parent=15 // pred_region
          %s495 = sand.u32 %s38, 1
          %s496 = scalar_lea.sflag [#allocation12], %s495
          %s497 = sand.u32 %s192, 1
          %s498 = smul.addr %s497, 64
          %s499 = scalar_lea.vmem [#allocation11], %s498
          %s501 = ssub.s32 1024, 1024
          %502 = vsyncadd %s496, %s501
          %s503 = smul.addr %s45, 16
          %s504 = smul.addr %s503, 64
          %s505 = scalar_lea.hbm %s5, %s504
          %s506 = sshll.u32 %s499, 4
          %s507 = int_to_ptr.vmem [resolvable:$true] %s506
          %512 = dma.hbm_to_vmem [thread:$0]  %s505, 1024, %s507, %s496, 64, 64, 4
        $region40: #{tpu_custom_call.1} parent=15 // pred_fallthru
          _
        // Predicated region
        $region41: #{tpu_custom_call.1} parent=15 // pred_check
          %p513 = pneg %p228
        $region42: #{tpu_custom_call.1} parent=15 // pred_check_branch
          %515 = sbr.rel (%p513) target = $region44
        $region43: #{tpu_custom_call.1} parent=15 // pred_region
          %s516 = sand.u32 %s38, 1
          %s517 = scalar_lea.sflag [#allocation12], %s516
          %s518 = sand.u32 %s218, 1
          %s519 = smul.addr %s518, 64
          %s520 = scalar_lea.vmem [#allocation13], %s519
          %s522 = ssub.s32 1024, 1024
          %523 = vsyncadd %s517, %s522
          %s524 = smul.addr %s45, 16
          %s525 = smul.addr %s524, 64
          %s526 = scalar_lea.hbm %s6, %s525
          %s527 = sshll.u32 %s520, 4
          %s528 = int_to_ptr.vmem [resolvable:$true] %s527
          %533 = dma.hbm_to_vmem [thread:$0]  %s526, 1024, %s528, %s517, 64, 64, 4
        $region44: #{tpu_custom_call.1} parent=15 // pred_fallthru
          _
        // Predicated region
        $region45: #{tpu_custom_call.1} parent=15 // pred_check
          %p534 = pneg %p254
        $region46: #{tpu_custom_call.1} parent=15 // pred_check_branch
          %536 = sbr.rel (%p534) target = $region48
        $region47: #{tpu_custom_call.1} parent=15 // pred_region
          %s537 = sand.u32 %s38, 1
          %s538 = scalar_lea.sflag [#allocation15], %s537
          %s539 = sand.u32 %s244, 1
          %s540 = smul.addr %s539, 64
          %s541 = scalar_lea.vmem [#allocation14], %s540
          %s543 = ssub.s32 1024, 1024
          %544 = vsyncadd %s538, %s543
          %s545 = smul.addr %s45, 16
          %s546 = smul.addr %s545, 64
          %s547 = scalar_lea.hbm %s7, %s546
          %s548 = sshll.u32 %s541, 4
          %s549 = int_to_ptr.vmem [resolvable:$true] %s548
          %554 = dma.hbm_to_vmem [thread:$0]  %s547, 1024, %s549, %s538, 64, 64, 4
        $region48: #{tpu_custom_call.1} parent=15 // pred_fallthru
          _
        // Predicated region
        $region49: #{tpu_custom_call.1} parent=15 // pred_check
          %p555 = pneg %p280
        $region50: #{tpu_custom_call.1} parent=15 // pred_check_branch
          %557 = sbr.rel (%p555) target = $region52
        $region51: #{tpu_custom_call.1} parent=15 // pred_region
          %s558 = sand.u32 %s38, 1
          %s559 = scalar_lea.sflag [#allocation15], %s558
          %s560 = sand.u32 %s270, 1
          %s561 = smul.addr %s560, 64
          %s562 = scalar_lea.vmem [#allocation16], %s561
          %s564 = ssub.s32 1024, 1024
          %565 = vsyncadd %s559, %s564
          %s566 = smul.addr %s45, 16
          %s567 = smul.addr %s566, 64
          %s568 = scalar_lea.hbm %s8, %s567
          %s569 = sshll.u32 %s562, 4
          %s570 = int_to_ptr.vmem [resolvable:$true] %s569
          %575 = dma.hbm_to_vmem [thread:$0]  %s568, 1024, %s570, %s559, 64, 64, 4
        $region52: #{tpu_custom_call.1} parent=15 // pred_fallthru
          _
        // Predicated region
        $region53: #{tpu_custom_call.1} parent=15 // pred_check
          %p576 = pneg %p306
        $region54: #{tpu_custom_call.1} parent=15 // pred_check_branch
          %578 = sbr.rel (%p576) target = $region56
        $region55: #{tpu_custom_call.1} parent=15 // pred_region
          %s579 = sand.u32 %s296, 1
          %s580 = scalar_lea.sflag [#allocation18], %s579
          %s581 = sand.u32 %s296, 1
          %s582 = smul.addr %s581, 64
          %s583 = scalar_lea.vmem [#allocation17], %s582
          %s585 = ssub.s32 1024, 1024
          %586 = vsyncadd %s580, %s585
          %s587 = smul.addr %s45, 16
          %s588 = smul.addr %s587, 64
          %s589 = scalar_lea.hbm %s9, %s588
          %s590 = sshll.u32 %s583, 4
          %s591 = int_to_ptr.vmem [resolvable:$true] %s590
          %596 = dma.hbm_to_vmem [thread:$0]  %s589, 1024, %s591, %s580, 64, 64, 4
        $region56: #{tpu_custom_call.1} parent=15 // pred_fallthru
          _
        // Predicated region
        $region57: #{tpu_custom_call.1} parent=15 // pred_check
          %p597 = pneg %p332
        $region58: #{tpu_custom_call.1} parent=15 // pred_check_branch
          %599 = sbr.rel (%p597) target = $region60
        $region59: #{tpu_custom_call.1} parent=15 // pred_region
          %p600 = scmp.lt.s32.totalorder %s45, 1
          %s601 = scalar_select %p600, %s45, 1
          %s602 = smul.addr %s601, 8
          %s603 = scalar_lea.vmem %s10, %s602
        $region60: #{tpu_custom_call.1} parent=15 // pred_fallthru
          _
      $region16: #{tpu_custom_call.1} parent=5 // pred_fallthru
        _
      %p604 = scmp.le.s32.totalorder 1, %s38
      %p605 = scmp.lt.s32.totalorder %s38, 3
      %p606 = pnand %p604, %p605
      %p607 = pneg %p606
      // Predicated region
      $region61: #{tpu_custom_call.1} parent=5 // pred_check
        _
      $region62: #{tpu_custom_call.1} parent=5 // pred_check_branch
        %609 = sbr.rel (%p606) target = $region64
      $region63: #{tpu_custom_call.1} parent=5 // pred_region
        %s610 = ssub.s32 %s38, 1
        %s611 = sand.u32 %s65, 1
        %s612 = scalar_lea.sflag [#allocation3], %s611
        %s613 = sand.u32 %s65, 1
        %s614 = smul.addr %s613, 192
        %s615 = scalar_lea.vmem [#allocation2], %s614
        // Predicated region
        $region65: #{tpu_custom_call.1} parent=63 // pred_check
          %p616 = pneg %p78
        $region66: #{tpu_custom_call.1} parent=63 // pred_check_branch
          %618 = sbr.rel (%p616) target = $region68
        $region67: #{tpu_custom_call.1} parent=63 // pred_region
          %619 = dma.done %s612, 3072
        $region68: #{tpu_custom_call.1} parent=63 // pred_fallthru
          _
        %s620 = sand.u32 %s43, 1
        %s621 = scalar_lea.sflag [#allocation6], %s620
        %s622 = sand.u32 %s91, 1
        %s623 = smul.addr %s622, 64
        %s624 = scalar_lea.vmem [#allocation5], %s623
        // Predicated region
        $region69: #{tpu_custom_call.1} parent=63 // pred_check
          %p625 = pneg %p104
        $region70: #{tpu_custom_call.1} parent=63 // pred_check_branch
          %627 = sbr.rel (%p625) target = $region72
        $region71: #{tpu_custom_call.1} parent=63 // pred_region
          %628 = dma.done %s621, 1024
        $region72: #{tpu_custom_call.1} parent=63 // pred_fallthru
          _
        %s629 = sand.u32 %s43, 1
        %s630 = scalar_lea.sflag [#allocation6], %s629
        %s631 = sand.u32 %s117, 1
        %s632 = smul.addr %s631, 64
        %s633 = scalar_lea.vmem [#allocation7], %s632
        // Predicated region
        $region73: #{tpu_custom_call.1} parent=63 // pred_check
          %p634 = pneg %p130
        $region74: #{tpu_custom_call.1} parent=63 // pred_check_branch
          %636 = sbr.rel (%p634) target = $region76
        $region75: #{tpu_custom_call.1} parent=63 // pred_region
          %637 = dma.done %s630, 1024
        $region76: #{tpu_custom_call.1} parent=63 // pred_fallthru
          _
        %s638 = sand.u32 %s43, 1
        %s639 = scalar_lea.sflag [#allocation9], %s638
        %s640 = sand.u32 %s143, 1
        %s641 = smul.addr %s640, 64
        %s642 = scalar_lea.vmem [#allocation8], %s641
        // Predicated region
        $region77: #{tpu_custom_call.1} parent=63 // pred_check
          %p643 = pneg %p156
        $region78: #{tpu_custom_call.1} parent=63 // pred_check_branch
          %645 = sbr.rel (%p643) target = $region80
        $region79: #{tpu_custom_call.1} parent=63 // pred_region
          %646 = dma.done %s639, 1024
        $region80: #{tpu_custom_call.1} parent=63 // pred_fallthru
          _
        %s647 = sand.u32 %s43, 1
        %s648 = scalar_lea.sflag [#allocation9], %s647
        %s649 = sand.u32 %s169, 1
        %s650 = smul.addr %s649, 64
        %s651 = scalar_lea.vmem [#allocation10], %s650
        // Predicated region
        $region81: #{tpu_custom_call.1} parent=63 // pred_check
          %p652 = pneg %p182
        $region82: #{tpu_custom_call.1} parent=63 // pred_check_branch
          %654 = sbr.rel (%p652) target = $region84
        $region83: #{tpu_custom_call.1} parent=63 // pred_region
          %655 = dma.done %s648, 1024
        $region84: #{tpu_custom_call.1} parent=63 // pred_fallthru
          _
        %s656 = sand.u32 %s43, 1
        %s657 = scalar_lea.sflag [#allocation12], %s656
        %s658 = sand.u32 %s195, 1
        %s659 = smul.addr %s658, 64
        %s660 = scalar_lea.vmem [#allocation11], %s659
        // Predicated region
        $region85: #{tpu_custom_call.1} parent=63 // pred_check
          %p661 = pneg %p208
        $region86: #{tpu_custom_call.1} parent=63 // pred_check_branch
          %663 = sbr.rel (%p661) target = $region88
        $region87: #{tpu_custom_call.1} parent=63 // pred_region
          %664 = dma.done %s657, 1024
        $region88: #{tpu_custom_call.1} parent=63 // pred_fallthru
          _
        %s665 = sand.u32 %s43, 1
        %s666 = scalar_lea.sflag [#allocation12], %s665
        %s667 = sand.u32 %s221, 1
        %s668 = smul.addr %s667, 64
        %s669 = scalar_lea.vmem [#allocation13], %s668
        // Predicated region
        $region89: #{tpu_custom_call.1} parent=63 // pred_check
          %p670 = pneg %p234
        $region90: #{tpu_custom_call.1} parent=63 // pred_check_branch
          %672 = sbr.rel (%p670) target = $region92
        $region91: #{tpu_custom_call.1} parent=63 // pred_region
          %673 = dma.done %s666, 1024
        $region92: #{tpu_custom_call.1} parent=63 // pred_fallthru
          _
        %s674 = sand.u32 %s43, 1
        %s675 = scalar_lea.sflag [#allocation15], %s674
        %s676 = sand.u32 %s247, 1
        %s677 = smul.addr %s676, 64
        %s678 = scalar_lea.vmem [#allocation14], %s677
        // Predicated region
        $region93: #{tpu_custom_call.1} parent=63 // pred_check
          %p679 = pneg %p260
        $region94: #{tpu_custom_call.1} parent=63 // pred_check_branch
          %681 = sbr.rel (%p679) target = $region96
        $region95: #{tpu_custom_call.1} parent=63 // pred_region
          %682 = dma.done %s675, 1024
        $region96: #{tpu_custom_call.1} parent=63 // pred_fallthru
          _
        %s683 = sand.u32 %s43, 1
        %s684 = scalar_lea.sflag [#allocation15], %s683
        %s685 = sand.u32 %s273, 1
        %s686 = smul.addr %s685, 64
        %s687 = scalar_lea.vmem [#allocation16], %s686
        // Predicated region
        $region97: #{tpu_custom_call.1} parent=63 // pred_check
          %p688 = pneg %p286
        $region98: #{tpu_custom_call.1} parent=63 // pred_check_branch
          %690 = sbr.rel (%p688) target = $region100
        $region99: #{tpu_custom_call.1} parent=63 // pred_region
          %691 = dma.done %s684, 1024
        $region100: #{tpu_custom_call.1} parent=63 // pred_fallthru
          _
        %s692 = sand.u32 %s299, 1
        %s693 = scalar_lea.sflag [#allocation18], %s692
        %s694 = sand.u32 %s299, 1
        %s695 = smul.addr %s694, 64
        %s696 = scalar_lea.vmem [#allocation17], %s695
        // Predicated region
        $region101: #{tpu_custom_call.1} parent=63 // pred_check
          %p697 = pneg %p312
        $region102: #{tpu_custom_call.1} parent=63 // pred_check_branch
          %699 = sbr.rel (%p697) target = $region104
        $region103: #{tpu_custom_call.1} parent=63 // pred_region
          %700 = dma.done %s693, 1024
        $region104: #{tpu_custom_call.1} parent=63 // pred_fallthru
          _
        %s701 = sand.u32 %s65, 1
        %s702 = scalar_lea.sflag [#allocation3], %s701
        %s703 = sand.u32 %s65, 1
        %s704 = smul.addr %s703, 192
        %s705 = scalar_lea.vmem [#allocation2], %s704
        %p706 = pneg %p78
        %p707 = pneg %p75
        %s708 = sand.u32 %s43, 1
        %s709 = scalar_lea.sflag [#allocation6], %s708
        %s710 = sand.u32 %s91, 1
        %s711 = smul.addr %s710, 64
        %s712 = scalar_lea.vmem [#allocation5], %s711
        %p713 = pneg %p104
        %p714 = pneg %p101
        %s715 = sand.u32 %s43, 1
        %s716 = scalar_lea.sflag [#allocation6], %s715
        %s717 = sand.u32 %s117, 1
        %s718 = smul.addr %s717, 64
        %s719 = scalar_lea.vmem [#allocation7], %s718
        %p720 = pneg %p130
        %p721 = pneg %p127
        %s722 = sand.u32 %s43, 1
        %s723 = scalar_lea.sflag [#allocation9], %s722
        %s724 = sand.u32 %s143, 1
        %s725 = smul.addr %s724, 64
        %s726 = scalar_lea.vmem [#allocation8], %s725
        %p727 = pneg %p156
        %p728 = pneg %p153
        %s729 = sand.u32 %s43, 1
        %s730 = scalar_lea.sflag [#allocation9], %s729
        %s731 = sand.u32 %s169, 1
        %s732 = smul.addr %s731, 64
        %s733 = scalar_lea.vmem [#allocation10], %s732
        %p734 = pneg %p182
        %p735 = pneg %p179
        %s736 = sand.u32 %s43, 1
        %s737 = scalar_lea.sflag [#allocation12], %s736
        %s738 = sand.u32 %s195, 1
        %s739 = smul.addr %s738, 64
        %s740 = scalar_lea.vmem [#allocation11], %s739
        %p741 = pneg %p208
        %p742 = pneg %p205
        %s743 = sand.u32 %s43, 1
        %s744 = scalar_lea.sflag [#allocation12], %s743
        %s745 = sand.u32 %s221, 1
        %s746 = smul.addr %s745, 64
        %s747 = scalar_lea.vmem [#allocation13], %s746
        %p748 = pneg %p234
        %p749 = pneg %p231
        %s750 = sand.u32 %s43, 1
        %s751 = scalar_lea.sflag [#allocation15], %s750
        %s752 = sand.u32 %s247, 1
        %s753 = smul.addr %s752, 64
        %s754 = scalar_lea.vmem [#allocation14], %s753
        %p755 = pneg %p260
        %p756 = pneg %p257
        %s757 = sand.u32 %s43, 1
        %s758 = scalar_lea.sflag [#allocation15], %s757
        %s759 = sand.u32 %s273, 1
        %s760 = smul.addr %s759, 64
        %s761 = scalar_lea.vmem [#allocation16], %s760
        %p762 = pneg %p286
        %p763 = pneg %p283
        %s764 = sand.u32 %s299, 1
        %s765 = scalar_lea.sflag [#allocation18], %s764
        %s766 = sand.u32 %s299, 1
        %s767 = smul.addr %s766, 64
        %s768 = scalar_lea.vmem [#allocation17], %s767
        %p769 = pneg %p312
        %p770 = pneg %p309
        %p771 = scmp.lt.s32.totalorder %s47, 1
        %s772 = scalar_select %p771, %s47, 1
        %s773 = smul.addr %s772, 8
        %s774 = scalar_lea.vmem %s10, %s773
        %p775 = pneg %p338
        %p776 = pneg %p335
        %p777 = pneg %p366
        %p778 = pneg %p363
        %s779 = sand.u32 %s353, 1
        %s780 = scalar_lea.sflag [#allocation4], %s779
        %s781 = sand.u32 %s353, 1
        %s782 = smul.addr %s781, 64
        %s783 = scalar_lea.vmem [#allocation19], %s782
        %s784 = smul.u32 16, %s48
        %p785 = scmp.lt.s32.totalorder %s47, 1
        %s786 = scalar_select %p785, %s47, 1
        %s787 = smul.addr %s786, 8
        %s788 = scalar_lea.vmem %s10, %s787
        %s789 = smul.u32 16, %s48
        %v791 = vld [vmem:[%s788] sm:$0x1]
        %v792 = vld [vmem:[%s788 + $0x1] sm:$0x1]
        %v793 = vld [vmem:[%s788 + $0x2] sm:$0x1]
        %v794 = vld [vmem:[%s788 + $0x3] sm:$0x1]
        %v795 = vld [vmem:[%s788 + $0x4] sm:$0x1]
        %v796 = vld [vmem:[%s788 + $0x5] sm:$0x1]
        %v797 = vld [vmem:[%s788 + $0x6] sm:$0x1]
        %v798 = vld [vmem:[%s615] sm:$0xf]
        %v799 = vld [vmem:[%s615 + $0x4] sm:$0xf]
        %v800 = vld [vmem:[%s615 + $0x8] sm:$0xf]
        %v801 = vld [vmem:[%s615 + $0xc] sm:$0xf]
        %v802 = vld [vmem:[%s615 + $0x10] sm:$0xf]
        %v803 = vld [vmem:[%s615 + $0x14] sm:$0xf]
        %v804 = vld [vmem:[%s615 + $0x18] sm:$0xf]
        %v805 = vld [vmem:[%s615 + $0x1c] sm:$0xf]
        %v806 = vld [vmem:[%s615 + $0x20] sm:$0xf]
        %v807 = vld [vmem:[%s615 + $0x24] sm:$0xf]
        %v808 = vld [vmem:[%s615 + $0x28] sm:$0xf]
        %v809 = vld [vmem:[%s615 + $0x2c] sm:$0xf]
        %v810 = vld [vmem:[%s615 + $0x30] sm:$0xf]
        %v811 = vld [vmem:[%s615 + $0x34] sm:$0xf]
        %v812 = vld [vmem:[%s615 + $0x38] sm:$0xf]
        %v813 = vld [vmem:[%s615 + $0x3c] sm:$0xf]
        %v814 = vld [vmem:[%s615 + $0x40] sm:$0xf]
        %v815 = vld [vmem:[%s615 + $0x44] sm:$0xf]
        %v816 = vld [vmem:[%s615 + $0x48] sm:$0xf]
        %v817 = vld [vmem:[%s615 + $0x4c] sm:$0xf]
        %v818 = vld [vmem:[%s615 + $0x50] sm:$0xf]
        %v819 = vld [vmem:[%s615 + $0x54] sm:$0xf]
        %v820 = vld [vmem:[%s615 + $0x58] sm:$0xf]
        %v821 = vld [vmem:[%s615 + $0x5c] sm:$0xf]
        %v822 = vld [vmem:[%s615 + $0x60] sm:$0xf]
        %v823 = vld [vmem:[%s615 + $0x64] sm:$0xf]
        %v824 = vld [vmem:[%s615 + $0x68] sm:$0xf]
        %v825 = vld [vmem:[%s615 + $0x6c] sm:$0xf]
        %v826 = vld [vmem:[%s615 + $0x70] sm:$0xf]
        %v827 = vld [vmem:[%s615 + $0x74] sm:$0xf]
        %v828 = vld [vmem:[%s615 + $0x78] sm:$0xf]
        %v829 = vld [vmem:[%s615 + $0x7c] sm:$0xf]
        %v830 = vld [vmem:[%s615 + $0x80] sm:$0xf]
        %v831 = vld [vmem:[%s615 + $0x84] sm:$0xf]
        %v832 = vld [vmem:[%s615 + $0x88] sm:$0xf]
        %v833 = vld [vmem:[%s615 + $0x8c] sm:$0xf]
        %v834 = vld [vmem:[%s615 + $0x90] sm:$0xf]
        %v835 = vld [vmem:[%s615 + $0x94] sm:$0xf]
        %v836 = vld [vmem:[%s615 + $0x98] sm:$0xf]
        %v837 = vld [vmem:[%s615 + $0x9c] sm:$0xf]
        %v838 = vld [vmem:[%s615 + $0xa0] sm:$0xf]
        %v839 = vld [vmem:[%s615 + $0xa4] sm:$0xf]
        %v840 = vld [vmem:[%s615 + $0xa8] sm:$0xf]
        %v841 = vld [vmem:[%s615 + $0xac] sm:$0xf]
        %v842 = vld [vmem:[%s615 + $0xb0] sm:$0xf]
        %v843 = vld [vmem:[%s615 + $0xb4] sm:$0xf]
        %v844 = vld [vmem:[%s615 + $0xb8] sm:$0xf]
        %v845 = vld [vmem:[%s615 + $0xbc] sm:$0xf]
        %v846 = vld [vmem:[%s624] sm:$0xf]
        %v847 = vld [vmem:[%s624 + $0x4] sm:$0xf]
        %v848 = vld [vmem:[%s624 + $0x8] sm:$0xf]
        %v849 = vld [vmem:[%s624 + $0xc] sm:$0xf]
        %v850 = vld [vmem:[%s624 + $0x10] sm:$0xf]
        %v851 = vld [vmem:[%s624 + $0x14] sm:$0xf]
        %v852 = vld [vmem:[%s624 + $0x18] sm:$0xf]
        %v853 = vld [vmem:[%s624 + $0x1c] sm:$0xf]
        %v854 = vld [vmem:[%s624 + $0x20] sm:$0xf]
        %v855 = vld [vmem:[%s624 + $0x24] sm:$0xf]
        %v856 = vld [vmem:[%s624 + $0x28] sm:$0xf]
        %v857 = vld [vmem:[%s624 + $0x2c] sm:$0xf]
        %v858 = vld [vmem:[%s624 + $0x30] sm:$0xf]
        %v859 = vld [vmem:[%s624 + $0x34] sm:$0xf]
        %v860 = vld [vmem:[%s624 + $0x38] sm:$0xf]
        %v861 = vld [vmem:[%s624 + $0x3c] sm:$0xf]
        %v862 = vlaneseq
        %v863 = vshrl.u32 %v862, 7
        %v864 = vsub.s32 0, %v863
        %v865 = vrot.slane %v791, %v864
        %v914 = vunpack.c.l.b16 %v798
        %v915 = vunpack.c.l.b16 %v799
        %v916 = vunpack.c.l.b16 %v800
        %v917 = vunpack.c.l.b16 %v801
        %v918 = vunpack.c.l.b16 %v802
        %v919 = vunpack.c.l.b16 %v803
        %v920 = vunpack.c.l.b16 %v804
        %v921 = vunpack.c.l.b16 %v805
        %v922 = vunpack.c.l.b16 %v806
        %v923 = vunpack.c.l.b16 %v807
        %v924 = vunpack.c.l.b16 %v808
        %v925 = vunpack.c.l.b16 %v809
        %v926 = vunpack.c.l.b16 %v810
        %v927 = vunpack.c.l.b16 %v811
        %v928 = vunpack.c.l.b16 %v812
        %v929 = vunpack.c.l.b16 %v813
        %v930 = vunpack.c.l.b16 %v814
        %v931 = vunpack.c.l.b16 %v815
        %v932 = vunpack.c.l.b16 %v816
        %v933 = vunpack.c.l.b16 %v817
        %v934 = vunpack.c.l.b16 %v818
        %v935 = vunpack.c.l.b16 %v819
        %v936 = vunpack.c.l.b16 %v820
        %v937 = vunpack.c.l.b16 %v821
        %v938 = vunpack.c.l.b16 %v822
        %v939 = vunpack.c.l.b16 %v823
        %v940 = vunpack.c.l.b16 %v824
        %v941 = vunpack.c.l.b16 %v825
        %v942 = vunpack.c.l.b16 %v826
        %v943 = vunpack.c.l.b16 %v827
        %v944 = vunpack.c.l.b16 %v828
        %v945 = vunpack.c.l.b16 %v829
        %v946 = vunpack.c.l.b16 %v830
        %v947 = vunpack.c.l.b16 %v831
        %v948 = vunpack.c.l.b16 %v832
        %v949 = vunpack.c.l.b16 %v833
        %v950 = vunpack.c.l.b16 %v834
        %v951 = vunpack.c.l.b16 %v835
        %v952 = vunpack.c.l.b16 %v836
        %v953 = vunpack.c.l.b16 %v837
        %v954 = vunpack.c.l.b16 %v838
        %v955 = vunpack.c.l.b16 %v839
        %v956 = vunpack.c.l.b16 %v840
        %v957 = vunpack.c.l.b16 %v841
        %v958 = vunpack.c.l.b16 %v842
        %v959 = vunpack.c.l.b16 %v843
        %v960 = vunpack.c.l.b16 %v844
        %v961 = vunpack.c.l.b16 %v845
        %v962 = vpack.c.b16 %v915, %v914
        %v963 = vpack.c.b16 %v917, %v916
        %v964 = vpack.c.b16 %v919, %v918
        %v965 = vpack.c.b16 %v921, %v920
        %v966 = vpack.c.b16 %v923, %v922
        %v967 = vpack.c.b16 %v925, %v924
        %v968 = vpack.c.b16 %v927, %v926
        %v969 = vpack.c.b16 %v929, %v928
        %v970 = vpack.c.b16 %v931, %v930
        %v971 = vpack.c.b16 %v933, %v932
        %v972 = vpack.c.b16 %v935, %v934
        %v973 = vpack.c.b16 %v937, %v936
        %v974 = vpack.c.b16 %v939, %v938
        %v975 = vpack.c.b16 %v941, %v940
        %v976 = vpack.c.b16 %v943, %v942
        %v977 = vpack.c.b16 %v945, %v944
        %v978 = vpack.c.b16 %v947, %v946
        %v979 = vpack.c.b16 %v949, %v948
        %v980 = vpack.c.b16 %v951, %v950
        %v981 = vpack.c.b16 %v953, %v952
        %v982 = vpack.c.b16 %v955, %v954
        %v983 = vpack.c.b16 %v957, %v956
        %v984 = vpack.c.b16 %v959, %v958
        %v985 = vpack.c.b16 %v961, %v960
        %v1026 = vunpack.c.l.b16 %v846
        %v1027 = vunpack.c.l.b16 %v847
        %v1028 = vunpack.c.l.b16 %v848
        %v1029 = vunpack.c.l.b16 %v849
        %v1030 = vunpack.c.l.b16 %v850
        %v1031 = vunpack.c.l.b16 %v851
        %v1032 = vunpack.c.l.b16 %v852
        %v1033 = vunpack.c.l.b16 %v853
        %v1034 = vunpack.c.l.b16 %v854
        %v1035 = vunpack.c.l.b16 %v855
        %v1036 = vunpack.c.l.b16 %v856
        %v1037 = vunpack.c.l.b16 %v857
        %v1038 = vunpack.c.l.b16 %v858
        %v1039 = vunpack.c.l.b16 %v859
        %v1040 = vunpack.c.l.b16 %v860
        %v1041 = vunpack.c.l.b16 %v861
        %v1042 = vpack.c.b16 %v1027, %v1026
        %v1043 = vpack.c.b16 %v1029, %v1028
        %v1044 = vpack.c.b16 %v1031, %v1030
        %v1045 = vpack.c.b16 %v1033, %v1032
        %v1046 = vpack.c.b16 %v1035, %v1034
        %v1047 = vpack.c.b16 %v1037, %v1036
        %v1048 = vpack.c.b16 %v1039, %v1038
        %v1049 = vpack.c.b16 %v1041, %v1040
        %1058 = vmatprep.subr.bf16.mxu0 0
        %1059 = vmatpush1.bf16.msra.mxu0 %v1042
        %1060 = vmatprep.subr.bf16.mxu0 0
        %1061 = vmatpush1.bf16.msra.mxu0 %v1043
        %1062 = vmatprep.subr.bf16.mxu0 0
        %1063 = vmatpush1.bf16.msra.mxu0 %v1044
        %1064 = vmatprep.subr.bf16.mxu0 0
        %1065 = vmatpush1.bf16.msra.mxu0 %v1045
        %1066 = vmatprep.subr.bf16.mxu0 0
        %1067 = vmatpush1.bf16.msra.mxu0 %v1046
        %1068 = vmatprep.subr.bf16.mxu0 0
        %1069 = vmatpush1.bf16.msra.mxu0 %v1047
        %1070 = vmatprep.subr.bf16.mxu0 0
        %1071 = vmatpush1.bf16.msra.mxu0 %v1048
        %1072 = vmatprep.subr.bf16.mxu0 0
        %1073 = vmatpush1.bf16.msra.mxu0 %v1049
        %1074 = vmatprep.subr.bf16.mxu0 0
        %1075 = vmatpush1.bf16.msra.mxu0 0
        %1076 = vmatprep.subr.bf16.mxu0 0
        %1077 = vmatpush1.bf16.msra.mxu0 0
        %1078 = vmatprep.subr.bf16.mxu0 0
        %1079 = vmatpush1.bf16.msra.mxu0 0
        %1080 = vmatprep.subr.bf16.mxu0 0
        %1081 = vmatpush1.bf16.msra.mxu0 0
        %1082 = vmatprep.subr.bf16.mxu0 0
        %1083 = vmatpush1.bf16.msra.mxu0 0
        %1084 = vmatprep.subr.bf16.mxu0 0
        %1085 = vmatpush1.bf16.msra.mxu0 0
        %1086 = vmatprep.subr.bf16.mxu0 0
        %1087 = vmatpush1.bf16.msra.mxu0 0
        %1088 = vmatprep.subr.bf16.mxu0 0
        %1089 = vmatpush1.bf16.msra.mxu0 0
        %1090 = vmatprep.mubr.bf16.mxu0 0
        %1091 = vmatmul.mubr.bf16.gmra.mrb[0].mxu0 %v962
        %v1092 = vpop.f32.mrb[0].mxu0
        %v1093 = vadd.f32 %v865, %v1092
        %v1094 = vpop.f32.mrb[0].mxu0
        %v1095 = vpop.f32.mrb[0].mxu0
        %v1096 = vadd.f32 %v865, %v1095
        %v1097 = vpop.f32.mrb[0].mxu0
        %1098 = vmatprep.mubr.bf16.mxu0 0
        %1099 = vmatmul.mubr.bf16.gmra.mrb[0].mxu0 %v963
        %v1100 = vpop.f32.mrb[0].mxu0
        %v1101 = vadd.f32 %v865, %v1100
        %v1102 = vpop.f32.mrb[0].mxu0
        %v1103 = vpop.f32.mrb[0].mxu0
        %v1104 = vadd.f32 %v865, %v1103
        %v1105 = vpop.f32.mrb[0].mxu0
        %1106 = vmatprep.mubr.bf16.mxu0 0
        %1107 = vmatmul.mubr.bf16.gmra.mrb[0].mxu0 %v964
        %v1108 = vpop.f32.mrb[0].mxu0
        %v1109 = vadd.f32 %v865, %v1108
        %v1110 = vpop.f32.mrb[0].mxu0
        %v1111 = vpop.f32.mrb[0].mxu0
        %v1112 = vadd.f32 %v865, %v1111
        %v1113 = vpop.f32.mrb[0].mxu0
        %1114 = vmatprep.mubr.bf16.mxu0 0
        %1115 = vmatmul.mubr.bf16.gmra.mrb[0].mxu0 %v965
        %v1116 = vpop.f32.mrb[0].mxu0
        %v1117 = vadd.f32 %v865, %v1116
        %v1118 = vpop.f32.mrb[0].mxu0
        %v1119 = vpop.f32.mrb[0].mxu0
        %v1120 = vadd.f32 %v865, %v1119
        %v1121 = vpop.f32.mrb[0].mxu0
        %1122 = vmatprep.mubr.bf16.mxu0 0
        %1123 = vmatmul.mubr.bf16.gmra.mrb[0].mxu0 %v966
        %v1124 = vpop.f32.mrb[0].mxu0
        %v1125 = vadd.f32 %v865, %v1124
        %v1126 = vpop.f32.mrb[0].mxu0
        %v1127 = vpop.f32.mrb[0].mxu0
        %v1128 = vadd.f32 %v865, %v1127
        %v1129 = vpop.f32.mrb[0].mxu0
        %1130 = vmatprep.mubr.bf16.mxu0 0
        %1131 = vmatmul.mubr.bf16.gmra.mrb[0].mxu0 %v967
        %v1132 = vpop.f32.mrb[0].mxu0
        %v1133 = vadd.f32 %v865, %v1132
        %v1134 = vpop.f32.mrb[0].mxu0
        %v1135 = vpop.f32.mrb[0].mxu0
        %v1136 = vadd.f32 %v865, %v1135
        %v1137 = vpop.f32.mrb[0].mxu0
        %1138 = vmatprep.mubr.bf16.mxu0 0
        %1139 = vmatmul.mubr.bf16.gmra.mrb[0].mxu0 %v968
        %v1140 = vpop.f32.mrb[0].mxu0
        %v1141 = vadd.f32 %v865, %v1140
        %v1142 = vpop.f32.mrb[0].mxu0
        %v1143 = vpop.f32.mrb[0].mxu0
        %v1144 = vadd.f32 %v865, %v1143
        %v1145 = vpop.f32.mrb[0].mxu0
        %1146 = vmatprep.mubr.bf16.mxu0 0
        %1147 = vmatmul.mubr.bf16.gmra.mrb[0].mxu0 %v969
        %v1148 = vpop.f32.mrb[0].mxu0
        %v1149 = vadd.f32 %v865, %v1148
        %v1150 = vpop.f32.mrb[0].mxu0
        %v1151 = vpop.f32.mrb[0].mxu0
        %v1152 = vadd.f32 %v865, %v1151
        %v1153 = vpop.f32.mrb[0].mxu0
        %1154 = vmatprep.mubr.bf16.mxu0 0
        %1155 = vmatmul.mubr.bf16.gmra.mrb[0].mxu0 %v970
        %v1156 = vpop.f32.mrb[0].mxu0
        %v1157 = vadd.f32 %v865, %v1156
        %v1158 = vpop.f32.mrb[0].mxu0
        %v1159 = vpop.f32.mrb[0].mxu0
        %v1160 = vadd.f32 %v865, %v1159
        %v1161 = vpop.f32.mrb[0].mxu0
        %1162 = vmatprep.mubr.bf16.mxu0 0
        %1163 = vmatmul.mubr.bf16.gmra.mrb[0].mxu0 %v971
        %v1164 = vpop.f32.mrb[0].mxu0
        %v1165 = vadd.f32 %v865, %v1164
        %v1166 = vpop.f32.mrb[0].mxu0
        %v1167 = vpop.f32.mrb[0].mxu0
        %v1168 = vadd.f32 %v865, %v1167
        %v1169 = vpop.f32.mrb[0].mxu0
        %1170 = vmatprep.mubr.bf16.mxu0 0
        %1171 = vmatmul.mubr.bf16.gmra.mrb[0].mxu0 %v972
        %v1172 = vpop.f32.mrb[0].mxu0
        %v1173 = vadd.f32 %v865, %v1172
        %v1174 = vpop.f32.mrb[0].mxu0
        %v1175 = vpop.f32.mrb[0].mxu0
        %v1176 = vadd.f32 %v865, %v1175
        %v1177 = vpop.f32.mrb[0].mxu0
        %1178 = vmatprep.mubr.bf16.mxu0 0
        %1179 = vmatmul.mubr.bf16.gmra.mrb[0].mxu0 %v973
        %v1180 = vpop.f32.mrb[0].mxu0
        %v1181 = vadd.f32 %v865, %v1180
        %v1182 = vpop.f32.mrb[0].mxu0
        %v1183 = vpop.f32.mrb[0].mxu0
        %v1184 = vadd.f32 %v865, %v1183
        %v1185 = vpop.f32.mrb[0].mxu0
        %1186 = vmatprep.mubr.bf16.mxu0 0
        %1187 = vmatmul.mubr.bf16.gmra.mrb[0].mxu0 %v974
        %v1188 = vpop.f32.mrb[0].mxu0
        %v1189 = vadd.f32 %v865, %v1188
        %v1190 = vpop.f32.mrb[0].mxu0
        %v1191 = vpop.f32.mrb[0].mxu0
        %v1192 = vadd.f32 %v865, %v1191
        %v1193 = vpop.f32.mrb[0].mxu0
        %1194 = vmatprep.mubr.bf16.mxu0 0
        %1195 = vmatmul.mubr.bf16.gmra.mrb[0].mxu0 %v975
        %v1196 = vpop.f32.mrb[0].mxu0
        %v1197 = vadd.f32 %v865, %v1196
        %v1198 = vpop.f32.mrb[0].mxu0
        %v1199 = vpop.f32.mrb[0].mxu0
        %v1200 = vadd.f32 %v865, %v1199
        %v1201 = vpop.f32.mrb[0].mxu0
        %1202 = vmatprep.mubr.bf16.mxu0 0
        %1203 = vmatmul.mubr.bf16.gmra.mrb[0].mxu0 %v976
        %v1204 = vpop.f32.mrb[0].mxu0
        %v1205 = vadd.f32 %v865, %v1204
        %v1206 = vpop.f32.mrb[0].mxu0
        %v1207 = vpop.f32.mrb[0].mxu0
        %v1208 = vadd.f32 %v865, %v1207
        %v1209 = vpop.f32.mrb[0].mxu0
        %1210 = vmatprep.mubr.bf16.mxu0 0
        %1211 = vmatmul.mubr.bf16.gmra.mrb[0].mxu0 %v977
        %v1212 = vpop.f32.mrb[0].mxu0
        %v1213 = vadd.f32 %v865, %v1212
        %v1214 = vpop.f32.mrb[0].mxu0
        %v1215 = vpop.f32.mrb[0].mxu0
        %v1216 = vadd.f32 %v865, %v1215
        %v1217 = vpop.f32.mrb[0].mxu0
        %1218 = vmatprep.mubr.bf16.mxu0 0
        %1219 = vmatmul.mubr.bf16.gmra.mrb[0].mxu0 %v978
        %v1220 = vpop.f32.mrb[0].mxu0
        %v1221 = vadd.f32 %v865, %v1220
        %v1222 = vpop.f32.mrb[0].mxu0
        %v1223 = vpop.f32.mrb[0].mxu0
        %v1224 = vadd.f32 %v865, %v1223
        %v1225 = vpop.f32.mrb[0].mxu0
        %1226 = vmatprep.mubr.bf16.mxu0 0
        %1227 = vmatmul.mubr.bf16.gmra.mrb[0].mxu0 %v979
        %v1228 = vpop.f32.mrb[0].mxu0
        %v1229 = vadd.f32 %v865, %v1228
        %v1230 = vpop.f32.mrb[0].mxu0
        %v1231 = vpop.f32.mrb[0].mxu0
        %v1232 = vadd.f32 %v865, %v1231
        %v1233 = vpop.f32.mrb[0].mxu0
        %1234 = vmatprep.mubr.bf16.mxu0 0
        %1235 = vmatmul.mubr.bf16.gmra.mrb[0].mxu0 %v980
        %v1236 = vpop.f32.mrb[0].mxu0
        %v1237 = vadd.f32 %v865, %v1236
        %v1238 = vpop.f32.mrb[0].mxu0
        %v1239 = vpop.f32.mrb[0].mxu0
        %v1240 = vadd.f32 %v865, %v1239
        %v1241 = vpop.f32.mrb[0].mxu0
        %1242 = vmatprep.mubr.bf16.mxu0 0
        %1243 = vmatmul.mubr.bf16.gmra.mrb[0].mxu0 %v981
        %v1244 = vpop.f32.mrb[0].mxu0
        %v1245 = vadd.f32 %v865, %v1244
        %v1246 = vpop.f32.mrb[0].mxu0
        %v1247 = vpop.f32.mrb[0].mxu0
        %v1248 = vadd.f32 %v865, %v1247
        %v1249 = vpop.f32.mrb[0].mxu0
        %1250 = vmatprep.mubr.bf16.mxu0 0
        %1251 = vmatmul.mubr.bf16.gmra.mrb[0].mxu0 %v982
        %v1252 = vpop.f32.mrb[0].mxu0
        %v1253 = vadd.f32 %v865, %v1252
        %v1254 = vpop.f32.mrb[0].mxu0
        %v1255 = vpop.f32.mrb[0].mxu0
        %v1256 = vadd.f32 %v865, %v1255
        %v1257 = vpop.f32.mrb[0].mxu0
        %1258 = vmatprep.mubr.bf16.mxu0 0
        %1259 = vmatmul.mubr.bf16.gmra.mrb[0].mxu0 %v983
        %v1260 = vpop.f32.mrb[0].mxu0
        %v1261 = vadd.f32 %v865, %v1260
        %v1262 = vpop.f32.mrb[0].mxu0
        %v1263 = vpop.f32.mrb[0].mxu0
        %v1264 = vadd.f32 %v865, %v1263
        %v1265 = vpop.f32.mrb[0].mxu0
        %1266 = vmatprep.mubr.bf16.mxu0 0
        %1267 = vmatmul.mubr.bf16.gmra.mrb[0].mxu0 %v984
        %v1268 = vpop.f32.mrb[0].mxu0
        %v1269 = vadd.f32 %v865, %v1268
        %v1270 = vpop.f32.mrb[0].mxu0
        %v1271 = vpop.f32.mrb[0].mxu0
        %v1272 = vadd.f32 %v865, %v1271
        %v1273 = vpop.f32.mrb[0].mxu0
        %1274 = vmatprep.mubr.bf16.mxu0 0
        %1275 = vmatmul.mubr.bf16.gmra.mrb[0].mxu0 %v985
        %v1276 = vpop.f32.mrb[0].mxu0
        %v1277 = vadd.f32 %v865, %v1276
        %v1278 = vpop.f32.mrb[0].mxu0
        %v1279 = vpop.f32.mrb[0].mxu0
        %v1280 = vadd.f32 %v865, %v1279
        %v1281 = vpop.f32.mrb[0].mxu0
        %1282 = vdwg.mxu0
        %v1283 = vmax.f32 %v1093, 0.0
        %v1284 = vmax.f32 %v1096, 0.0
        %v1285 = vmax.f32 %v1101, 0.0
        %v1286 = vmax.f32 %v1104, 0.0
        %v1287 = vmax.f32 %v1109, 0.0
        %v1288 = vmax.f32 %v1112, 0.0
        %v1289 = vmax.f32 %v1117, 0.0
        %v1290 = vmax.f32 %v1120, 0.0
        %v1291 = vmax.f32 %v1125, 0.0
        %v1292 = vmax.f32 %v1128, 0.0
        %v1293 = vmax.f32 %v1133, 0.0
        %v1294 = vmax.f32 %v1136, 0.0
        %v1295 = vmax.f32 %v1141, 0.0
        %v1296 = vmax.f32 %v1144, 0.0
        %v1297 = vmax.f32 %v1149, 0.0
        %v1298 = vmax.f32 %v1152, 0.0
        %v1299 = vmax.f32 %v1157, 0.0
        %v1300 = vmax.f32 %v1160, 0.0
        %v1301 = vmax.f32 %v1165, 0.0
        %v1302 = vmax.f32 %v1168, 0.0
        %v1303 = vmax.f32 %v1173, 0.0
        %v1304 = vmax.f32 %v1176, 0.0
        %v1305 = vmax.f32 %v1181, 0.0
        %v1306 = vmax.f32 %v1184, 0.0
        %v1307 = vmax.f32 %v1189, 0.0
        %v1308 = vmax.f32 %v1192, 0.0
        %v1309 = vmax.f32 %v1197, 0.0
        %v1310 = vmax.f32 %v1200, 0.0
        %v1311 = vmax.f32 %v1205, 0.0
        %v1312 = vmax.f32 %v1208, 0.0
        %v1313 = vmax.f32 %v1213, 0.0
        %v1314 = vmax.f32 %v1216, 0.0
        %v1315 = vmax.f32 %v1221, 0.0
        %v1316 = vmax.f32 %v1224, 0.0
        %v1317 = vmax.f32 %v1229, 0.0
        %v1318 = vmax.f32 %v1232, 0.0
        %v1319 = vmax.f32 %v1237, 0.0
        %v1320 = vmax.f32 %v1240, 0.0
        %v1321 = vmax.f32 %v1245, 0.0
        %v1322 = vmax.f32 %v1248, 0.0
        %v1323 = vmax.f32 %v1253, 0.0
        %v1324 = vmax.f32 %v1256, 0.0
        %v1325 = vmax.f32 %v1261, 0.0
        %v1326 = vmax.f32 %v1264, 0.0
        %v1327 = vmax.f32 %v1269, 0.0
        %v1328 = vmax.f32 %v1272, 0.0
        %v1329 = vmax.f32 %v1277, 0.0
        %v1330 = vmax.f32 %v1280, 0.0
        %v1331 = vpack.c.bf16 %v1284, %v1283
        %v1332 = vpack.c.bf16 %v1286, %v1285
        %v1333 = vpack.c.bf16 %v1288, %v1287
        %v1334 = vpack.c.bf16 %v1290, %v1289
        %v1335 = vpack.c.bf16 %v1292, %v1291
        %v1336 = vpack.c.bf16 %v1294, %v1293
        %v1337 = vpack.c.bf16 %v1296, %v1295
        %v1338 = vpack.c.bf16 %v1298, %v1297
        %v1339 = vpack.c.bf16 %v1300, %v1299
        %v1340 = vpack.c.bf16 %v1302, %v1301
        %v1341 = vpack.c.bf16 %v1304, %v1303
        %v1342 = vpack.c.bf16 %v1306, %v1305
        %v1343 = vpack.c.bf16 %v1308, %v1307
        %v1344 = vpack.c.bf16 %v1310, %v1309
        %v1345 = vpack.c.bf16 %v1312, %v1311
        %v1346 = vpack.c.bf16 %v1314, %v1313
        %v1347 = vpack.c.bf16 %v1316, %v1315
        %v1348 = vpack.c.bf16 %v1318, %v1317
        %v1349 = vpack.c.bf16 %v1320, %v1319
        %v1350 = vpack.c.bf16 %v1322, %v1321
        %v1351 = vpack.c.bf16 %v1324, %v1323
        %v1352 = vpack.c.bf16 %v1326, %v1325
        %v1353 = vpack.c.bf16 %v1328, %v1327
        %v1354 = vpack.c.bf16 %v1330, %v1329
        %v1355 = vld [vmem:[%s633] sm:$0xf]
        %v1356 = vld [vmem:[%s633 + $0x4] sm:$0xf]
        %v1357 = vld [vmem:[%s633 + $0x8] sm:$0xf]
        %v1358 = vld [vmem:[%s633 + $0xc] sm:$0xf]
        %v1359 = vld [vmem:[%s633 + $0x10] sm:$0xf]
        %v1360 = vld [vmem:[%s633 + $0x14] sm:$0xf]
        %v1361 = vld [vmem:[%s633 + $0x18] sm:$0xf]
        %v1362 = vld [vmem:[%s633 + $0x1c] sm:$0xf]
        %v1363 = vld [vmem:[%s633 + $0x20] sm:$0xf]
        %v1364 = vld [vmem:[%s633 + $0x24] sm:$0xf]
        %v1365 = vld [vmem:[%s633 + $0x28] sm:$0xf]
        %v1366 = vld [vmem:[%s633 + $0x2c] sm:$0xf]
        %v1367 = vld [vmem:[%s633 + $0x30] sm:$0xf]
        %v1368 = vld [vmem:[%s633 + $0x34] sm:$0xf]
        %v1369 = vld [vmem:[%s633 + $0x38] sm:$0xf]
        %v1370 = vld [vmem:[%s633 + $0x3c] sm:$0xf]
        %v1371 = vlaneseq
        %v1372 = vshrl.u32 %v1371, 7
        %v1373 = vsub.s32 0, %v1372
        %v1374 = vrot.slane %v792, %v1373
        %v1391 = vunpack.c.l.b16 %v1355
        %v1392 = vunpack.c.l.b16 %v1356
        %v1393 = vunpack.c.l.b16 %v1357
        %v1394 = vunpack.c.l.b16 %v1358
        %v1395 = vunpack.c.l.b16 %v1359
        %v1396 = vunpack.c.l.b16 %v1360
        %v1397 = vunpack.c.l.b16 %v1361
        %v1398 = vunpack.c.l.b16 %v1362
        %v1399 = vunpack.c.l.b16 %v1363
        %v1400 = vunpack.c.l.b16 %v1364
        %v1401 = vunpack.c.l.b16 %v1365
        %v1402 = vunpack.c.l.b16 %v1366
        %v1403 = vunpack.c.l.b16 %v1367
        %v1404 = vunpack.c.l.b16 %v1368
        %v1405 = vunpack.c.l.b16 %v1369
        %v1406 = vunpack.c.l.b16 %v1370
        %v1407 = vpack.c.b16 %v1392, %v1391
        %v1408 = vpack.c.b16 %v1394, %v1393
        %v1409 = vpack.c.b16 %v1396, %v1395
        %v1410 = vpack.c.b16 %v1398, %v1397
        %v1411 = vpack.c.b16 %v1400, %v1399
        %v1412 = vpack.c.b16 %v1402, %v1401
        %v1413 = vpack.c.b16 %v1404, %v1403
        %v1414 = vpack.c.b16 %v1406, %v1405
        %1423 = vmatprep.subr.bf16.mxu0 0
        %1424 = vmatpush1.bf16.msra.mxu0 %v1407
        %1425 = vmatprep.subr.bf16.mxu0 0
        %1426 = vmatpush1.bf16.msra.mxu0 %v1408
        %1427 = vmatprep.subr.bf16.mxu0 0
        %1428 = vmatpush1.bf16.msra.mxu0 %v1409
        %1429 = vmatprep.subr.bf16.mxu0 0
        %1430 = vmatpush1.bf16.msra.mxu0 %v1410
        %1431 = vmatprep.subr.bf16.mxu0 0
        %1432 = vmatpush1.bf16.msra.mxu0 %v1411
        %1433 = vmatprep.subr.bf16.mxu0 0
        %1434 = vmatpush1.bf16.msra.mxu0 %v1412
        %1435 = vmatprep.subr.bf16.mxu0 0
        %1436 = vmatpush1.bf16.msra.mxu0 %v1413
        %1437 = vmatprep.subr.bf16.mxu0 0
        %1438 = vmatpush1.bf16.msra.mxu0 %v1414
        %1439 = vmatprep.subr.bf16.mxu0 0
        %1440 = vmatpush1.bf16.msra.mxu0 0
        %1441 = vmatprep.subr.bf16.mxu0 0
        %1442 = vmatpush1.bf16.msra.mxu0 0
        %1443 = vmatprep.subr.bf16.mxu0 0
        %1444 = vmatpush1.bf16.msra.mxu0 0
        %1445 = vmatprep.subr.bf16.mxu0 0
        %1446 = vmatpush1.bf16.msra.mxu0 0
        %1447 = vmatprep.subr.bf16.mxu0 0
        %1448 = vmatpush1.bf16.msra.mxu0 0
        %1449 = vmatprep.subr.bf16.mxu0 0
        %1450 = vmatpush1.bf16.msra.mxu0 0
        %1451 = vmatprep.subr.bf16.mxu0 0
        %1452 = vmatpush1.bf16.msra.mxu0 0
        %1453 = vmatprep.subr.bf16.mxu0 0
        %1454 = vmatpush1.bf16.msra.mxu0 0
        %1455 = vmatprep.mubr.bf16.mxu0 0
        %1456 = vmatmul.mubr.bf16.gmra.mrb[0].mxu0 %v1331
        %v1457 = vpop.f32.mrb[0].mxu0
        %v1458 = vadd.f32 %v1374, %v1457
        %v1459 = vpop.f32.mrb[0].mxu0
        %v1460 = vpop.f32.mrb[0].mxu0
        %v1461 = vadd.f32 %v1374, %v1460
        %v1462 = vpop.f32.mrb[0].mxu0
        %1463 = vmatprep.mubr.bf16.mxu0 0
        %1464 = vmatmul.mubr.bf16.gmra.mrb[0].mxu0 %v1332
        %v1465 = vpop.f32.mrb[0].mxu0
        %v1466 = vadd.f32 %v1374, %v1465
        %v1467 = vpop.f32.mrb[0].mxu0
        %v1468 = vpop.f32.mrb[0].mxu0
        %v1469 = vadd.f32 %v1374, %v1468
        %v1470 = vpop.f32.mrb[0].mxu0
        %1471 = vmatprep.mubr.bf16.mxu0 0
        %1472 = vmatmul.mubr.bf16.gmra.mrb[0].mxu0 %v1333
        %v1473 = vpop.f32.mrb[0].mxu0
        %v1474 = vadd.f32 %v1374, %v1473
        %v1475 = vpop.f32.mrb[0].mxu0
        %v1476 = vpop.f32.mrb[0].mxu0
        %v1477 = vadd.f32 %v1374, %v1476
        %v1478 = vpop.f32.mrb[0].mxu0
        %1479 = vmatprep.mubr.bf16.mxu0 0
        %1480 = vmatmul.mubr.bf16.gmra.mrb[0].mxu0 %v1334
        %v1481 = vpop.f32.mrb[0].mxu0
        %v1482 = vadd.f32 %v1374, %v1481
        %v1483 = vpop.f32.mrb[0].mxu0
        %v1484 = vpop.f32.mrb[0].mxu0
        %v1485 = vadd.f32 %v1374, %v1484
        %v1486 = vpop.f32.mrb[0].mxu0
        %1487 = vmatprep.mubr.bf16.mxu0 0
        %1488 = vmatmul.mubr.bf16.gmra.mrb[0].mxu0 %v1335
        %v1489 = vpop.f32.mrb[0].mxu0
        %v1490 = vadd.f32 %v1374, %v1489
        %v1491 = vpop.f32.mrb[0].mxu0
        %v1492 = vpop.f32.mrb[0].mxu0
        %v1493 = vadd.f32 %v1374, %v1492
        %v1494 = vpop.f32.mrb[0].mxu0
        %1495 = vmatprep.mubr.bf16.mxu0 0
        %1496 = vmatmul.mubr.bf16.gmra.mrb[0].mxu0 %v1336
        %v1497 = vpop.f32.mrb[0].mxu0
        %v1498 = vadd.f32 %v1374, %v1497
        %v1499 = vpop.f32.mrb[0].mxu0
        %v1500 = vpop.f32.mrb[0].mxu0
        %v1501 = vadd.f32 %v1374, %v1500
        %v1502 = vpop.f32.mrb[0].mxu0
        %1503 = vmatprep.mubr.bf16.mxu0 0
        %1504 = vmatmul.mubr.bf16.gmra.mrb[0].mxu0 %v1337
        %v1505 = vpop.f32.mrb[0].mxu0
        %v1506 = vadd.f32 %v1374, %v1505
        %v1507 = vpop.f32.mrb[0].mxu0
        %v1508 = vpop.f32.mrb[0].mxu0
        %v1509 = vadd.f32 %v1374, %v1508
        %v1510 = vpop.f32.mrb[0].mxu0
        %1511 = vmatprep.mubr.bf16.mxu0 0
        %1512 = vmatmul.mubr.bf16.gmra.mrb[0].mxu0 %v1338
        %v1513 = vpop.f32.mrb[0].mxu0
        %v1514 = vadd.f32 %v1374, %v1513
        %v1515 = vpop.f32.mrb[0].mxu0
        %v1516 = vpop.f32.mrb[0].mxu0
        %v1517 = vadd.f32 %v1374, %v1516
        %v1518 = vpop.f32.mrb[0].mxu0
        %1519 = vmatprep.mubr.bf16.mxu0 0
        %1520 = vmatmul.mubr.bf16.gmra.mrb[0].mxu0 %v1339
        %v1521 = vpop.f32.mrb[0].mxu0
        %v1522 = vadd.f32 %v1374, %v1521
        %v1523 = vpop.f32.mrb[0].mxu0
        %v1524 = vpop.f32.mrb[0].mxu0
        %v1525 = vadd.f32 %v1374, %v1524
        %v1526 = vpop.f32.mrb[0].mxu0
        %1527 = vmatprep.mubr.bf16.mxu0 0
        %1528 = vmatmul.mubr.bf16.gmra.mrb[0].mxu0 %v1340
        %v1529 = vpop.f32.mrb[0].mxu0
        %v1530 = vadd.f32 %v1374, %v1529
        %v1531 = vpop.f32.mrb[0].mxu0
        %v1532 = vpop.f32.mrb[0].mxu0
        %v1533 = vadd.f32 %v1374, %v1532
        %v1534 = vpop.f32.mrb[0].mxu0
        %1535 = vmatprep.mubr.bf16.mxu0 0
        %1536 = vmatmul.mubr.bf16.gmra.mrb[0].mxu0 %v1341
        %v1537 = vpop.f32.mrb[0].mxu0
        %v1538 = vadd.f32 %v1374, %v1537
        %v1539 = vpop.f32.mrb[0].mxu0
        %v1540 = vpop.f32.mrb[0].mxu0
        %v1541 = vadd.f32 %v1374, %v1540
        %v1542 = vpop.f32.mrb[0].mxu0
        %1543 = vmatprep.mubr.bf16.mxu0 0
        %1544 = vmatmul.mubr.bf16.gmra.mrb[0].mxu0 %v1342
        %v1545 = vpop.f32.mrb[0].mxu0
        %v1546 = vadd.f32 %v1374, %v1545
        %v1547 = vpop.f32.mrb[0].mxu0
        %v1548 = vpop.f32.mrb[0].mxu0
        %v1549 = vadd.f32 %v1374, %v1548
        %v1550 = vpop.f32.mrb[0].mxu0
        %1551 = vmatprep.mubr.bf16.mxu0 0
        %1552 = vmatmul.mubr.bf16.gmra.mrb[0].mxu0 %v1343
        %v1553 = vpop.f32.mrb[0].mxu0
        %v1554 = vadd.f32 %v1374, %v1553
        %v1555 = vpop.f32.mrb[0].mxu0
        %v1556 = vpop.f32.mrb[0].mxu0
        %v1557 = vadd.f32 %v1374, %v1556
        %v1558 = vpop.f32.mrb[0].mxu0
        %1559 = vmatprep.mubr.bf16.mxu0 0
        %1560 = vmatmul.mubr.bf16.gmra.mrb[0].mxu0 %v1344
        %v1561 = vpop.f32.mrb[0].mxu0
        %v1562 = vadd.f32 %v1374, %v1561
        %v1563 = vpop.f32.mrb[0].mxu0
        %v1564 = vpop.f32.mrb[0].mxu0
        %v1565 = vadd.f32 %v1374, %v1564
        %v1566 = vpop.f32.mrb[0].mxu0
        %1567 = vmatprep.mubr.bf16.mxu0 0
        %1568 = vmatmul.mubr.bf16.gmra.mrb[0].mxu0 %v1345
        %v1569 = vpop.f32.mrb[0].mxu0
        %v1570 = vadd.f32 %v1374, %v1569
        %v1571 = vpop.f32.mrb[0].mxu0
        %v1572 = vpop.f32.mrb[0].mxu0
        %v1573 = vadd.f32 %v1374, %v1572
        %v1574 = vpop.f32.mrb[0].mxu0
        %1575 = vmatprep.mubr.bf16.mxu0 0
        %1576 = vmatmul.mubr.bf16.gmra.mrb[0].mxu0 %v1346
        %v1577 = vpop.f32.mrb[0].mxu0
        %v1578 = vadd.f32 %v1374, %v1577
        %v1579 = vpop.f32.mrb[0].mxu0
        %v1580 = vpop.f32.mrb[0].mxu0
        %v1581 = vadd.f32 %v1374, %v1580
        %v1582 = vpop.f32.mrb[0].mxu0
        %1583 = vmatprep.mubr.bf16.mxu0 0
        %1584 = vmatmul.mubr.bf16.gmra.mrb[0].mxu0 %v1347
        %v1585 = vpop.f32.mrb[0].mxu0
        %v1586 = vadd.f32 %v1374, %v1585
        %v1587 = vpop.f32.mrb[0].mxu0
        %v1588 = vpop.f32.mrb[0].mxu0
        %v1589 = vadd.f32 %v1374, %v1588
        %v1590 = vpop.f32.mrb[0].mxu0
        %1591 = vmatprep.mubr.bf16.mxu0 0
        %1592 = vmatmul.mubr.bf16.gmra.mrb[0].mxu0 %v1348
        %v1593 = vpop.f32.mrb[0].mxu0
        %v1594 = vadd.f32 %v1374, %v1593
        %v1595 = vpop.f32.mrb[0].mxu0
        %v1596 = vpop.f32.mrb[0].mxu0
        %v1597 = vadd.f32 %v1374, %v1596
        %v1598 = vpop.f32.mrb[0].mxu0
        %1599 = vmatprep.mubr.bf16.mxu0 0
        %1600 = vmatmul.mubr.bf16.gmra.mrb[0].mxu0 %v1349
        %v1601 = vpop.f32.mrb[0].mxu0
        %v1602 = vadd.f32 %v1374, %v1601
        %v1603 = vpop.f32.mrb[0].mxu0
        %v1604 = vpop.f32.mrb[0].mxu0
        %v1605 = vadd.f32 %v1374, %v1604
        %v1606 = vpop.f32.mrb[0].mxu0
        %1607 = vmatprep.mubr.bf16.mxu0 0
        %1608 = vmatmul.mubr.bf16.gmra.mrb[0].mxu0 %v1350
        %v1609 = vpop.f32.mrb[0].mxu0
        %v1610 = vadd.f32 %v1374, %v1609
        %v1611 = vpop.f32.mrb[0].mxu0
        %v1612 = vpop.f32.mrb[0].mxu0
        %v1613 = vadd.f32 %v1374, %v1612
        %v1614 = vpop.f32.mrb[0].mxu0
        %1615 = vmatprep.mubr.bf16.mxu0 0
        %1616 = vmatmul.mubr.bf16.gmra.mrb[0].mxu0 %v1351
        %v1617 = vpop.f32.mrb[0].mxu0
        %v1618 = vadd.f32 %v1374, %v1617
        %v1619 = vpop.f32.mrb[0].mxu0
        %v1620 = vpop.f32.mrb[0].mxu0
        %v1621 = vadd.f32 %v1374, %v1620
        %v1622 = vpop.f32.mrb[0].mxu0
        %1623 = vmatprep.mubr.bf16.mxu0 0
        %1624 = vmatmul.mubr.bf16.gmra.mrb[0].mxu0 %v1352
        %v1625 = vpop.f32.mrb[0].mxu0
        %v1626 = vadd.f32 %v1374, %v1625
        %v1627 = vpop.f32.mrb[0].mxu0
        %v1628 = vpop.f32.mrb[0].mxu0
        %v1629 = vadd.f32 %v1374, %v1628
        %v1630 = vpop.f32.mrb[0].mxu0
        %1631 = vmatprep.mubr.bf16.mxu0 0
        %1632 = vmatmul.mubr.bf16.gmra.mrb[0].mxu0 %v1353
        %v1633 = vpop.f32.mrb[0].mxu0
        %v1634 = vadd.f32 %v1374, %v1633
        %v1635 = vpop.f32.mrb[0].mxu0
        %v1636 = vpop.f32.mrb[0].mxu0
        %v1637 = vadd.f32 %v1374, %v1636
        %v1638 = vpop.f32.mrb[0].mxu0
        %1639 = vmatprep.mubr.bf16.mxu0 0
        %1640 = vmatmul.mubr.bf16.gmra.mrb[0].mxu0 %v1354
        %v1641 = vpop.f32.mrb[0].mxu0
        %v1642 = vadd.f32 %v1374, %v1641
        %v1643 = vpop.f32.mrb[0].mxu0
        %v1644 = vpop.f32.mrb[0].mxu0
        %v1645 = vadd.f32 %v1374, %v1644
        %v1646 = vpop.f32.mrb[0].mxu0
        %1647 = vdwg.mxu0
        %v1648 = vmax.f32 %v1458, 0.0
        %v1649 = vmax.f32 %v1461, 0.0
        %v1650 = vmax.f32 %v1466, 0.0
        %v1651 = vmax.f32 %v1469, 0.0
        %v1652 = vmax.f32 %v1474, 0.0
        %v1653 = vmax.f32 %v1477, 0.0
        %v1654 = vmax.f32 %v1482, 0.0
        %v1655 = vmax.f32 %v1485, 0.0
        %v1656 = vmax.f32 %v1490, 0.0
        %v1657 = vmax.f32 %v1493, 0.0
        %v1658 = vmax.f32 %v1498, 0.0
        %v1659 = vmax.f32 %v1501, 0.0
        %v1660 = vmax.f32 %v1506, 0.0
        %v1661 = vmax.f32 %v1509, 0.0
        %v1662 = vmax.f32 %v1514, 0.0
        %v1663 = vmax.f32 %v1517, 0.0
        %v1664 = vmax.f32 %v1522, 0.0
        %v1665 = vmax.f32 %v1525, 0.0
        %v1666 = vmax.f32 %v1530, 0.0
        %v1667 = vmax.f32 %v1533, 0.0
        %v1668 = vmax.f32 %v1538, 0.0
        %v1669 = vmax.f32 %v1541, 0.0
        %v1670 = vmax.f32 %v1546, 0.0
        %v1671 = vmax.f32 %v1549, 0.0
        %v1672 = vmax.f32 %v1554, 0.0
        %v1673 = vmax.f32 %v1557, 0.0
        %v1674 = vmax.f32 %v1562, 0.0
        %v1675 = vmax.f32 %v1565, 0.0
        %v1676 = vmax.f32 %v1570, 0.0
        %v1677 = vmax.f32 %v1573, 0.0
        %v1678 = vmax.f32 %v1578, 0.0
        %v1679 = vmax.f32 %v1581, 0.0
        %v1680 = vmax.f32 %v1586, 0.0
        %v1681 = vmax.f32 %v1589, 0.0
        %v1682 = vmax.f32 %v1594, 0.0
        %v1683 = vmax.f32 %v1597, 0.0
        %v1684 = vmax.f32 %v1602, 0.0
        %v1685 = vmax.f32 %v1605, 0.0
        %v1686 = vmax.f32 %v1610, 0.0
        %v1687 = vmax.f32 %v1613, 0.0
        %v1688 = vmax.f32 %v1618, 0.0
        %v1689 = vmax.f32 %v1621, 0.0
        %v1690 = vmax.f32 %v1626, 0.0
        %v1691 = vmax.f32 %v1629, 0.0
        %v1692 = vmax.f32 %v1634, 0.0
        %v1693 = vmax.f32 %v1637, 0.0
        %v1694 = vmax.f32 %v1642, 0.0
        %v1695 = vmax.f32 %v1645, 0.0
        %v1696 = vpack.c.bf16 %v1649, %v1648
        %v1697 = vpack.c.bf16 %v1651, %v1650
        %v1698 = vpack.c.bf16 %v1653, %v1652
        %v1699 = vpack.c.bf16 %v1655, %v1654
        %v1700 = vpack.c.bf16 %v1657, %v1656
        %v1701 = vpack.c.bf16 %v1659, %v1658
        %v1702 = vpack.c.bf16 %v1661, %v1660
        %v1703 = vpack.c.bf16 %v1663, %v1662
        %v1704 = vpack.c.bf16 %v1665, %v1664
        %v1705 = vpack.c.bf16 %v1667, %v1666
        %v1706 = vpack.c.bf16 %v1669, %v1668
        %v1707 = vpack.c.bf16 %v1671, %v1670
        %v1708 = vpack.c.bf16 %v1673, %v1672
        %v1709 = vpack.c.bf16 %v1675, %v1674
        %v1710 = vpack.c.bf16 %v1677, %v1676
        %v1711 = vpack.c.bf16 %v1679, %v1678
        %v1712 = vpack.c.bf16 %v1681, %v1680
        %v1713 = vpack.c.bf16 %v1683, %v1682
        %v1714 = vpack.c.bf16 %v1685, %v1684
        %v1715 = vpack.c.bf16 %v1687, %v1686
        %v1716 = vpack.c.bf16 %v1689, %v1688
        %v1717 = vpack.c.bf16 %v1691, %v1690
        %v1718 = vpack.c.bf16 %v1693, %v1692
        %v1719 = vpack.c.bf16 %v1695, %v1694
        %v1720 = vld [vmem:[%s642] sm:$0xf]
        %v1721 = vld [vmem:[%s642 + $0x4] sm:$0xf]
        %v1722 = vld [vmem:[%s642 + $0x8] sm:$0xf]
        %v1723 = vld [vmem:[%s642 + $0xc] sm:$0xf]
        %v1724 = vld [vmem:[%s642 + $0x10] sm:$0xf]
        %v1725 = vld [vmem:[%s642 + $0x14] sm:$0xf]
        %v1726 = vld [vmem:[%s642 + $0x18] sm:$0xf]
        %v1727 = vld [vmem:[%s642 + $0x1c] sm:$0xf]
        %v1728 = vld [vmem:[%s642 + $0x20] sm:$0xf]
        %v1729 = vld [vmem:[%s642 + $0x24] sm:$0xf]
        %v1730 = vld [vmem:[%s642 + $0x28] sm:$0xf]
        %v1731 = vld [vmem:[%s642 + $0x2c] sm:$0xf]
        %v1732 = vld [vmem:[%s642 + $0x30] sm:$0xf]
        %v1733 = vld [vmem:[%s642 + $0x34] sm:$0xf]
        %v1734 = vld [vmem:[%s642 + $0x38] sm:$0xf]
        %v1735 = vld [vmem:[%s642 + $0x3c] sm:$0xf]
        %v1736 = vlaneseq
        %v1737 = vshrl.u32 %v1736, 7
        %v1738 = vsub.s32 0, %v1737
        %v1739 = vrot.slane %v793, %v1738
        %v1756 = vunpack.c.l.b16 %v1720
        %v1757 = vunpack.c.l.b16 %v1721
        %v1758 = vunpack.c.l.b16 %v1722
        %v1759 = vunpack.c.l.b16 %v1723
        %v1760 = vunpack.c.l.b16 %v1724
        %v1761 = vunpack.c.l.b16 %v1725
        %v1762 = vunpack.c.l.b16 %v1726
        %v1763 = vunpack.c.l.b16 %v1727
        %v1764 = vunpack.c.l.b16 %v1728
        %v1765 = vunpack.c.l.b16 %v1729
        %v1766 = vunpack.c.l.b16 %v1730
        %v1767 = vunpack.c.l.b16 %v1731
        %v1768 = vunpack.c.l.b16 %v1732
        %v1769 = vunpack.c.l.b16 %v1733
        %v1770 = vunpack.c.l.b16 %v1734
        %v1771 = vunpack.c.l.b16 %v1735
        %v1772 = vpack.c.b16 %v1757, %v1756
        %v1773 = vpack.c.b16 %v1759, %v1758
        %v1774 = vpack.c.b16 %v1761, %v1760
        %v1775 = vpack.c.b16 %v1763, %v1762
        %v1776 = vpack.c.b16 %v1765, %v1764
        %v1777 = vpack.c.b16 %v1767, %v1766
        %v1778 = vpack.c.b16 %v1769, %v1768
        %v1779 = vpack.c.b16 %v1771, %v1770
        %1788 = vmatprep.subr.bf16.mxu0 0
        %1789 = vmatpush1.bf16.msra.mxu0 %v1772
        %1790 = vmatprep.subr.bf16.mxu0 0
        %1791 = vmatpush1.bf16.msra.mxu0 %v1773
        %1792 = vmatprep.subr.bf16.mxu0 0
        %1793 = vmatpush1.bf16.msra.mxu0 %v1774
        %1794 = vmatprep.subr.bf16.mxu0 0
        %1795 = vmatpush1.bf16.msra.mxu0 %v1775
        %1796 = vmatprep.subr.bf16.mxu0 0
        %1797 = vmatpush1.bf16.msra.mxu0 %v1776
        %1798 = vmatprep.subr.bf16.mxu0 0
        %1799 = vmatpush1.bf16.msra.mxu0 %v1777
        %1800 = vmatprep.subr.bf16.mxu0 0
        %1801 = vmatpush1.bf16.msra.mxu0 %v1778
        %1802 = vmatprep.subr.bf16.mxu0 0
        %1803 = vmatpush1.bf16.msra.mxu0 %v1779
        %1804 = vmatprep.subr.bf16.mxu0 0
        %1805 = vmatpush1.bf16.msra.mxu0 0
        %1806 = vmatprep.subr.bf16.mxu0 0
        %1807 = vmatpush1.bf16.msra.mxu0 0
        %1808 = vmatprep.subr.bf16.mxu0 0
        %1809 = vmatpush1.bf16.msra.mxu0 0
        %1810 = vmatprep.subr.bf16.mxu0 0
        %1811 = vmatpush1.bf16.msra.mxu0 0
        %1812 = vmatprep.subr.bf16.mxu0 0
        %1813 = vmatpush1.bf16.msra.mxu0 0
        %1814 = vmatprep.subr.bf16.mxu0 0
        %1815 = vmatpush1.bf16.msra.mxu0 0
        %1816 = vmatprep.subr.bf16.mxu0 0
        %1817 = vmatpush1.bf16.msra.mxu0 0
        %1818 = vmatprep.subr.bf16.mxu0 0
        %1819 = vmatpush1.bf16.msra.mxu0 0
        %1820 = vmatprep.mubr.bf16.mxu0 0
        %1821 = vmatmul.mubr.bf16.gmra.mrb[0].mxu0 %v1696
        %v1822 = vpop.f32.mrb[0].mxu0
        %v1823 = vadd.f32 %v1739, %v1822
        %v1824 = vpop.f32.mrb[0].mxu0
        %v1825 = vpop.f32.mrb[0].mxu0
        %v1826 = vadd.f32 %v1739, %v1825
        %v1827 = vpop.f32.mrb[0].mxu0
        %1828 = vmatprep.mubr.bf16.mxu0 0
        %1829 = vmatmul.mubr.bf16.gmra.mrb[0].mxu0 %v1697
        %v1830 = vpop.f32.mrb[0].mxu0
        %v1831 = vadd.f32 %v1739, %v1830
        %v1832 = vpop.f32.mrb[0].mxu0
        %v1833 = vpop.f32.mrb[0].mxu0
        %v1834 = vadd.f32 %v1739, %v1833
        %v1835 = vpop.f32.mrb[0].mxu0
        %1836 = vmatprep.mubr.bf16.mxu0 0
        %1837 = vmatmul.mubr.bf16.gmra.mrb[0].mxu0 %v1698
        %v1838 = vpop.f32.mrb[0].mxu0
        %v1839 = vadd.f32 %v1739, %v1838
        %v1840 = vpop.f32.mrb[0].mxu0
        %v1841 = vpop.f32.mrb[0].mxu0
        %v1842 = vadd.f32 %v1739, %v1841
        %v1843 = vpop.f32.mrb[0].mxu0
        %1844 = vmatprep.mubr.bf16.mxu0 0
        %1845 = vmatmul.mubr.bf16.gmra.mrb[0].mxu0 %v1699
        %v1846 = vpop.f32.mrb[0].mxu0
        %v1847 = vadd.f32 %v1739, %v1846
        %v1848 = vpop.f32.mrb[0].mxu0
        %v1849 = vpop.f32.mrb[0].mxu0
        %v1850 = vadd.f32 %v1739, %v1849
        %v1851 = vpop.f32.mrb[0].mxu0
        %1852 = vmatprep.mubr.bf16.mxu0 0
        %1853 = vmatmul.mubr.bf16.gmra.mrb[0].mxu0 %v1700
        %v1854 = vpop.f32.mrb[0].mxu0
        %v1855 = vadd.f32 %v1739, %v1854
        %v1856 = vpop.f32.mrb[0].mxu0
        %v1857 = vpop.f32.mrb[0].mxu0
        %v1858 = vadd.f32 %v1739, %v1857
        %v1859 = vpop.f32.mrb[0].mxu0
        %1860 = vmatprep.mubr.bf16.mxu0 0
        %1861 = vmatmul.mubr.bf16.gmra.mrb[0].mxu0 %v1701
        %v1862 = vpop.f32.mrb[0].mxu0
        %v1863 = vadd.f32 %v1739, %v1862
        %v1864 = vpop.f32.mrb[0].mxu0
        %v1865 = vpop.f32.mrb[0].mxu0
        %v1866 = vadd.f32 %v1739, %v1865
        %v1867 = vpop.f32.mrb[0].mxu0
        %1868 = vmatprep.mubr.bf16.mxu0 0
        %1869 = vmatmul.mubr.bf16.gmra.mrb[0].mxu0 %v1702
        %v1870 = vpop.f32.mrb[0].mxu0
        %v1871 = vadd.f32 %v1739, %v1870
        %v1872 = vpop.f32.mrb[0].mxu0
        %v1873 = vpop.f32.mrb[0].mxu0
        %v1874 = vadd.f32 %v1739, %v1873
        %v1875 = vpop.f32.mrb[0].mxu0
        %1876 = vmatprep.mubr.bf16.mxu0 0
        %1877 = vmatmul.mubr.bf16.gmra.mrb[0].mxu0 %v1703
        %v1878 = vpop.f32.mrb[0].mxu0
        %v1879 = vadd.f32 %v1739, %v1878
        %v1880 = vpop.f32.mrb[0].mxu0
        %v1881 = vpop.f32.mrb[0].mxu0
        %v1882 = vadd.f32 %v1739, %v1881
        %v1883 = vpop.f32.mrb[0].mxu0
        %1884 = vmatprep.mubr.bf16.mxu0 0
        %1885 = vmatmul.mubr.bf16.gmra.mrb[0].mxu0 %v1704
        %v1886 = vpop.f32.mrb[0].mxu0
        %v1887 = vadd.f32 %v1739, %v1886
        %v1888 = vpop.f32.mrb[0].mxu0
        %v1889 = vpop.f32.mrb[0].mxu0
        %v1890 = vadd.f32 %v1739, %v1889
        %v1891 = vpop.f32.mrb[0].mxu0
        %1892 = vmatprep.mubr.bf16.mxu0 0
        %1893 = vmatmul.mubr.bf16.gmra.mrb[0].mxu0 %v1705
        %v1894 = vpop.f32.mrb[0].mxu0
        %v1895 = vadd.f32 %v1739, %v1894
        %v1896 = vpop.f32.mrb[0].mxu0
        %v1897 = vpop.f32.mrb[0].mxu0
        %v1898 = vadd.f32 %v1739, %v1897
        %v1899 = vpop.f32.mrb[0].mxu0
        %1900 = vmatprep.mubr.bf16.mxu0 0
        %1901 = vmatmul.mubr.bf16.gmra.mrb[0].mxu0 %v1706
        %v1902 = vpop.f32.mrb[0].mxu0
        %v1903 = vadd.f32 %v1739, %v1902
        %v1904 = vpop.f32.mrb[0].mxu0
        %v1905 = vpop.f32.mrb[0].mxu0
        %v1906 = vadd.f32 %v1739, %v1905
        %v1907 = vpop.f32.mrb[0].mxu0
        %1908 = vmatprep.mubr.bf16.mxu0 0
        %1909 = vmatmul.mubr.bf16.gmra.mrb[0].mxu0 %v1707
        %v1910 = vpop.f32.mrb[0].mxu0
        %v1911 = vadd.f32 %v1739, %v1910
        %v1912 = vpop.f32.mrb[0].mxu0
        %v1913 = vpop.f32.mrb[0].mxu0
        %v1914 = vadd.f32 %v1739, %v1913
        %v1915 = vpop.f32.mrb[0].mxu0
        %1916 = vmatprep.mubr.bf16.mxu0 0
        %1917 = vmatmul.mubr.bf16.gmra.mrb[0].mxu0 %v1708
        %v1918 = vpop.f32.mrb[0].mxu0
        %v1919 = vadd.f32 %v1739, %v1918
        %v1920 = vpop.f32.mrb[0].mxu0
        %v1921 = vpop.f32.mrb[0].mxu0
        %v1922 = vadd.f32 %v1739, %v1921
        %v1923 = vpop.f32.mrb[0].mxu0
        %1924 = vmatprep.mubr.bf16.mxu0 0
        %1925 = vmatmul.mubr.bf16.gmra.mrb[0].mxu0 %v1709
        %v1926 = vpop.f32.mrb[0].mxu0
        %v1927 = vadd.f32 %v1739, %v1926
        %v1928 = vpop.f32.mrb[0].mxu0
        %v1929 = vpop.f32.mrb[0].mxu0
        %v1930 = vadd.f32 %v1739, %v1929
        %v1931 = vpop.f32.mrb[0].mxu0
        %1932 = vmatprep.mubr.bf16.mxu0 0
        %1933 = vmatmul.mubr.bf16.gmra.mrb[0].mxu0 %v1710
        %v1934 = vpop.f32.mrb[0].mxu0
        %v1935 = vadd.f32 %v1739, %v1934
        %v1936 = vpop.f32.mrb[0].mxu0
        %v1937 = vpop.f32.mrb[0].mxu0
        %v1938 = vadd.f32 %v1739, %v1937
        %v1939 = vpop.f32.mrb[0].mxu0
        %1940 = vmatprep.mubr.bf16.mxu0 0
        %1941 = vmatmul.mubr.bf16.gmra.mrb[0].mxu0 %v1711
        %v1942 = vpop.f32.mrb[0].mxu0
        %v1943 = vadd.f32 %v1739, %v1942
        %v1944 = vpop.f32.mrb[0].mxu0
        %v1945 = vpop.f32.mrb[0].mxu0
        %v1946 = vadd.f32 %v1739, %v1945
        %v1947 = vpop.f32.mrb[0].mxu0
        %1948 = vmatprep.mubr.bf16.mxu0 0
        %1949 = vmatmul.mubr.bf16.gmra.mrb[0].mxu0 %v1712
        %v1950 = vpop.f32.mrb[0].mxu0
        %v1951 = vadd.f32 %v1739, %v1950
        %v1952 = vpop.f32.mrb[0].mxu0
        %v1953 = vpop.f32.mrb[0].mxu0
        %v1954 = vadd.f32 %v1739, %v1953
        %v1955 = vpop.f32.mrb[0].mxu0
        %1956 = vmatprep.mubr.bf16.mxu0 0
        %1957 = vmatmul.mubr.bf16.gmra.mrb[0].mxu0 %v1713
        %v1958 = vpop.f32.mrb[0].mxu0
        %v1959 = vadd.f32 %v1739, %v1958
        %v1960 = vpop.f32.mrb[0].mxu0
        %v1961 = vpop.f32.mrb[0].mxu0
        %v1962 = vadd.f32 %v1739, %v1961
        %v1963 = vpop.f32.mrb[0].mxu0
        %1964 = vmatprep.mubr.bf16.mxu0 0
        %1965 = vmatmul.mubr.bf16.gmra.mrb[0].mxu0 %v1714
        %v1966 = vpop.f32.mrb[0].mxu0
        %v1967 = vadd.f32 %v1739, %v1966
        %v1968 = vpop.f32.mrb[0].mxu0
        %v1969 = vpop.f32.mrb[0].mxu0
        %v1970 = vadd.f32 %v1739, %v1969
        %v1971 = vpop.f32.mrb[0].mxu0
        %1972 = vmatprep.mubr.bf16.mxu0 0
        %1973 = vmatmul.mubr.bf16.gmra.mrb[0].mxu0 %v1715
        %v1974 = vpop.f32.mrb[0].mxu0
        %v1975 = vadd.f32 %v1739, %v1974
        %v1976 = vpop.f32.mrb[0].mxu0
        %v1977 = vpop.f32.mrb[0].mxu0
        %v1978 = vadd.f32 %v1739, %v1977
        %v1979 = vpop.f32.mrb[0].mxu0
        %1980 = vmatprep.mubr.bf16.mxu0 0
        %1981 = vmatmul.mubr.bf16.gmra.mrb[0].mxu0 %v1716
        %v1982 = vpop.f32.mrb[0].mxu0
        %v1983 = vadd.f32 %v1739, %v1982
        %v1984 = vpop.f32.mrb[0].mxu0
        %v1985 = vpop.f32.mrb[0].mxu0
        %v1986 = vadd.f32 %v1739, %v1985
        %v1987 = vpop.f32.mrb[0].mxu0
        %1988 = vmatprep.mubr.bf16.mxu0 0
        %1989 = vmatmul.mubr.bf16.gmra.mrb[0].mxu0 %v1717
        %v1990 = vpop.f32.mrb[0].mxu0
        %v1991 = vadd.f32 %v1739, %v1990
        %v1992 = vpop.f32.mrb[0].mxu0
        %v1993 = vpop.f32.mrb[0].mxu0
        %v1994 = vadd.f32 %v1739, %v1993
        %v1995 = vpop.f32.mrb[0].mxu0
        %1996 = vmatprep.mubr.bf16.mxu0 0
        %1997 = vmatmul.mubr.bf16.gmra.mrb[0].mxu0 %v1718
        %v1998 = vpop.f32.mrb[0].mxu0
        %v1999 = vadd.f32 %v1739, %v1998
        %v2000 = vpop.f32.mrb[0].mxu0
        %v2001 = vpop.f32.mrb[0].mxu0
        %v2002 = vadd.f32 %v1739, %v2001
        %v2003 = vpop.f32.mrb[0].mxu0
        %2004 = vmatprep.mubr.bf16.mxu0 0
        %2005 = vmatmul.mubr.bf16.gmra.mrb[0].mxu0 %v1719
        %v2006 = vpop.f32.mrb[0].mxu0
        %v2007 = vadd.f32 %v1739, %v2006
        %v2008 = vpop.f32.mrb[0].mxu0
        %v2009 = vpop.f32.mrb[0].mxu0
        %v2010 = vadd.f32 %v1739, %v2009
        %v2011 = vpop.f32.mrb[0].mxu0
        %2012 = vdwg.mxu0
        %v2013 = vmax.f32 %v1823, 0.0
        %v2014 = vmax.f32 %v1826, 0.0
        %v2015 = vmax.f32 %v1831, 0.0
        %v2016 = vmax.f32 %v1834, 0.0
        %v2017 = vmax.f32 %v1839, 0.0
        %v2018 = vmax.f32 %v1842, 0.0
        %v2019 = vmax.f32 %v1847, 0.0
        %v2020 = vmax.f32 %v1850, 0.0
        %v2021 = vmax.f32 %v1855, 0.0
        %v2022 = vmax.f32 %v1858, 0.0
        %v2023 = vmax.f32 %v1863, 0.0
        %v2024 = vmax.f32 %v1866, 0.0
        %v2025 = vmax.f32 %v1871, 0.0
        %v2026 = vmax.f32 %v1874, 0.0
        %v2027 = vmax.f32 %v1879, 0.0
        %v2028 = vmax.f32 %v1882, 0.0
        %v2029 = vmax.f32 %v1887, 0.0
        %v2030 = vmax.f32 %v1890, 0.0
        %v2031 = vmax.f32 %v1895, 0.0
        %v2032 = vmax.f32 %v1898, 0.0
        %v2033 = vmax.f32 %v1903, 0.0
        %v2034 = vmax.f32 %v1906, 0.0
        %v2035 = vmax.f32 %v1911, 0.0
        %v2036 = vmax.f32 %v1914, 0.0
        %v2037 = vmax.f32 %v1919, 0.0
        %v2038 = vmax.f32 %v1922, 0.0
        %v2039 = vmax.f32 %v1927, 0.0
        %v2040 = vmax.f32 %v1930, 0.0
        %v2041 = vmax.f32 %v1935, 0.0
        %v2042 = vmax.f32 %v1938, 0.0
        %v2043 = vmax.f32 %v1943, 0.0
        %v2044 = vmax.f32 %v1946, 0.0
        %v2045 = vmax.f32 %v1951, 0.0
        %v2046 = vmax.f32 %v1954, 0.0
        %v2047 = vmax.f32 %v1959, 0.0
        %v2048 = vmax.f32 %v1962, 0.0
        %v2049 = vmax.f32 %v1967, 0.0
        %v2050 = vmax.f32 %v1970, 0.0
        %v2051 = vmax.f32 %v1975, 0.0
        %v2052 = vmax.f32 %v1978, 0.0
        %v2053 = vmax.f32 %v1983, 0.0
        %v2054 = vmax.f32 %v1986, 0.0
        %v2055 = vmax.f32 %v1991, 0.0
        %v2056 = vmax.f32 %v1994, 0.0
        %v2057 = vmax.f32 %v1999, 0.0
        %v2058 = vmax.f32 %v2002, 0.0
        %v2059 = vmax.f32 %v2007, 0.0
        %v2060 = vmax.f32 %v2010, 0.0
        %v2061 = vpack.c.bf16 %v2014, %v2013
        %v2062 = vpack.c.bf16 %v2016, %v2015
        %v2063 = vpack.c.bf16 %v2018, %v2017
        %v2064 = vpack.c.bf16 %v2020, %v2019
        %v2065 = vpack.c.bf16 %v2022, %v2021
        %v2066 = vpack.c.bf16 %v2024, %v2023
        %v2067 = vpack.c.bf16 %v2026, %v2025
        %v2068 = vpack.c.bf16 %v2028, %v2027
        %v2069 = vpack.c.bf16 %v2030, %v2029
        %v2070 = vpack.c.bf16 %v2032, %v2031
        %v2071 = vpack.c.bf16 %v2034, %v2033
        %v2072 = vpack.c.bf16 %v2036, %v2035
        %v2073 = vpack.c.bf16 %v2038, %v2037
        %v2074 = vpack.c.bf16 %v2040, %v2039
        %v2075 = vpack.c.bf16 %v2042, %v2041
        %v2076 = vpack.c.bf16 %v2044, %v2043
        %v2077 = vpack.c.bf16 %v2046, %v2045
        %v2078 = vpack.c.bf16 %v2048, %v2047
        %v2079 = vpack.c.bf16 %v2050, %v2049
        %v2080 = vpack.c.bf16 %v2052, %v2051
        %v2081 = vpack.c.bf16 %v2054, %v2053
        %v2082 = vpack.c.bf16 %v2056, %v2055
        %v2083 = vpack.c.bf16 %v2058, %v2057
        %v2084 = vpack.c.bf16 %v2060, %v2059
        %v2085 = vld [vmem:[%s651] sm:$0xf]
        %v2086 = vld [vmem:[%s651 + $0x4] sm:$0xf]
        %v2087 = vld [vmem:[%s651 + $0x8] sm:$0xf]
        %v2088 = vld [vmem:[%s651 + $0xc] sm:$0xf]
        %v2089 = vld [vmem:[%s651 + $0x10] sm:$0xf]
        %v2090 = vld [vmem:[%s651 + $0x14] sm:$0xf]
        %v2091 = vld [vmem:[%s651 + $0x18] sm:$0xf]
        %v2092 = vld [vmem:[%s651 + $0x1c] sm:$0xf]
        %v2093 = vld [vmem:[%s651 + $0x20] sm:$0xf]
        %v2094 = vld [vmem:[%s651 + $0x24] sm:$0xf]
        %v2095 = vld [vmem:[%s651 + $0x28] sm:$0xf]
        %v2096 = vld [vmem:[%s651 + $0x2c] sm:$0xf]
        %v2097 = vld [vmem:[%s651 + $0x30] sm:$0xf]
        %v2098 = vld [vmem:[%s651 + $0x34] sm:$0xf]
        %v2099 = vld [vmem:[%s651 + $0x38] sm:$0xf]
        %v2100 = vld [vmem:[%s651 + $0x3c] sm:$0xf]
        %v2101 = vld [vmem:[%s660] sm:$0xf]
        %v2102 = vld [vmem:[%s660 + $0x4] sm:$0xf]
        %v2103 = vld [vmem:[%s660 + $0x8] sm:$0xf]
        %v2104 = vld [vmem:[%s660 + $0xc] sm:$0xf]
        %v2105 = vld [vmem:[%s660 + $0x10] sm:$0xf]
        %v2106 = vld [vmem:[%s660 + $0x14] sm:$0xf]
        %v2107 = vld [vmem:[%s660 + $0x18] sm:$0xf]
        %v2108 = vld [vmem:[%s660 + $0x1c] sm:$0xf]
        %v2109 = vld [vmem:[%s660 + $0x20] sm:$0xf]
        %v2110 = vld [vmem:[%s660 + $0x24] sm:$0xf]
        %v2111 = vld [vmem:[%s660 + $0x28] sm:$0xf]
        %v2112 = vld [vmem:[%s660 + $0x2c] sm:$0xf]
        %v2113 = vld [vmem:[%s660 + $0x30] sm:$0xf]
        %v2114 = vld [vmem:[%s660 + $0x34] sm:$0xf]
        %v2115 = vld [vmem:[%s660 + $0x38] sm:$0xf]
        %v2116 = vld [vmem:[%s660 + $0x3c] sm:$0xf]
        %v2133 = vunpack.c.l.b16 %v2101
        %v2134 = vunpack.c.l.b16 %v2102
        %v2135 = vunpack.c.l.b16 %v2103
        %v2136 = vunpack.c.l.b16 %v2104
        %v2137 = vunpack.c.l.b16 %v2105
        %v2138 = vunpack.c.l.b16 %v2106
        %v2139 = vunpack.c.l.b16 %v2107
        %v2140 = vunpack.c.l.b16 %v2108
        %v2141 = vunpack.c.l.b16 %v2109
        %v2142 = vunpack.c.l.b16 %v2110
        %v2143 = vunpack.c.l.b16 %v2111
        %v2144 = vunpack.c.l.b16 %v2112
        %v2145 = vunpack.c.l.b16 %v2113
        %v2146 = vunpack.c.l.b16 %v2114
        %v2147 = vunpack.c.l.b16 %v2115
        %v2148 = vunpack.c.l.b16 %v2116
        %v2149 = vpack.c.b16 %v2134, %v2133
        %v2150 = vpack.c.b16 %v2136, %v2135
        %v2151 = vpack.c.b16 %v2138, %v2137
        %v2152 = vpack.c.b16 %v2140, %v2139
        %v2153 = vpack.c.b16 %v2142, %v2141
        %v2154 = vpack.c.b16 %v2144, %v2143
        %v2155 = vpack.c.b16 %v2146, %v2145
        %v2156 = vpack.c.b16 %v2148, %v2147
        %2165 = vmatprep.subr.bf16.mxu0 0
        %2166 = vmatpush1.bf16.msra.mxu0 %v2149
        %2167 = vmatprep.subr.bf16.mxu0 0
        %2168 = vmatpush1.bf16.msra.mxu0 %v2150
        %2169 = vmatprep.subr.bf16.mxu0 0
        %2170 = vmatpush1.bf16.msra.mxu0 %v2151
        %2171 = vmatprep.subr.bf16.mxu0 0
        %2172 = vmatpush1.bf16.msra.mxu0 %v2152
        %2173 = vmatprep.subr.bf16.mxu0 0
        %2174 = vmatpush1.bf16.msra.mxu0 %v2153
        %2175 = vmatprep.subr.bf16.mxu0 0
        %2176 = vmatpush1.bf16.msra.mxu0 %v2154
        %2177 = vmatprep.subr.bf16.mxu0 0
        %2178 = vmatpush1.bf16.msra.mxu0 %v2155
        %2179 = vmatprep.subr.bf16.mxu0 0
        %2180 = vmatpush1.bf16.msra.mxu0 %v2156
        %2181 = vmatprep.subr.bf16.mxu0 0
        %2182 = vmatpush1.bf16.msra.mxu0 0
        %2183 = vmatprep.subr.bf16.mxu0 0
        %2184 = vmatpush1.bf16.msra.mxu0 0
        %2185 = vmatprep.subr.bf16.mxu0 0
        %2186 = vmatpush1.bf16.msra.mxu0 0
        %2187 = vmatprep.subr.bf16.mxu0 0
        %2188 = vmatpush1.bf16.msra.mxu0 0
        %2189 = vmatprep.subr.bf16.mxu0 0
        %2190 = vmatpush1.bf16.msra.mxu0 0
        %2191 = vmatprep.subr.bf16.mxu0 0
        %2192 = vmatpush1.bf16.msra.mxu0 0
        %2193 = vmatprep.subr.bf16.mxu0 0
        %2194 = vmatpush1.bf16.msra.mxu0 0
        %2195 = vmatprep.subr.bf16.mxu0 0
        %2196 = vmatpush1.bf16.msra.mxu0 0
        %2197 = vmatprep.mubr.bf16.mxu0 0
        %2198 = vmatmul.mubr.bf16.gmra.mrb[0].mxu0 %v962
        %v2199 = vpop.f32.mrb[0].mxu0
        %v2200 = vadd.f32 0.0, %v2199
        %v2201 = vpop.f32.mrb[0].mxu0
        %v2202 = vpop.f32.mrb[0].mxu0
        %v2203 = vadd.f32 0.0, %v2202
        %v2204 = vpop.f32.mrb[0].mxu0
        %2205 = vmatprep.mubr.bf16.mxu0 0
        %2206 = vmatmul.mubr.bf16.gmra.mrb[0].mxu0 %v963
        %v2207 = vpop.f32.mrb[0].mxu0
        %v2208 = vadd.f32 0.0, %v2207
        %v2209 = vpop.f32.mrb[0].mxu0
        %v2210 = vpop.f32.mrb[0].mxu0
        %v2211 = vadd.f32 0.0, %v2210
        %v2212 = vpop.f32.mrb[0].mxu0
        %2213 = vmatprep.mubr.bf16.mxu0 0
        %2214 = vmatmul.mubr.bf16.gmra.mrb[0].mxu0 %v964
        %v2215 = vpop.f32.mrb[0].mxu0
        %v2216 = vadd.f32 0.0, %v2215
        %v2217 = vpop.f32.mrb[0].mxu0
        %v2218 = vpop.f32.mrb[0].mxu0
        %v2219 = vadd.f32 0.0, %v2218
        %v2220 = vpop.f32.mrb[0].mxu0
        %2221 = vmatprep.mubr.bf16.mxu0 0
        %2222 = vmatmul.mubr.bf16.gmra.mrb[0].mxu0 %v965
        %v2223 = vpop.f32.mrb[0].mxu0
        %v2224 = vadd.f32 0.0, %v2223
        %v2225 = vpop.f32.mrb[0].mxu0
        %v2226 = vpop.f32.mrb[0].mxu0
        %v2227 = vadd.f32 0.0, %v2226
        %v2228 = vpop.f32.mrb[0].mxu0
        %2229 = vmatprep.mubr.bf16.mxu0 0
        %2230 = vmatmul.mubr.bf16.gmra.mrb[0].mxu0 %v966
        %v2231 = vpop.f32.mrb[0].mxu0
        %v2232 = vadd.f32 0.0, %v2231
        %v2233 = vpop.f32.mrb[0].mxu0
        %v2234 = vpop.f32.mrb[0].mxu0
        %v2235 = vadd.f32 0.0, %v2234
        %v2236 = vpop.f32.mrb[0].mxu0
        %2237 = vmatprep.mubr.bf16.mxu0 0
        %2238 = vmatmul.mubr.bf16.gmra.mrb[0].mxu0 %v967
        %v2239 = vpop.f32.mrb[0].mxu0
        %v2240 = vadd.f32 0.0, %v2239
        %v2241 = vpop.f32.mrb[0].mxu0
        %v2242 = vpop.f32.mrb[0].mxu0
        %v2243 = vadd.f32 0.0, %v2242
        %v2244 = vpop.f32.mrb[0].mxu0
        %2245 = vmatprep.mubr.bf16.mxu0 0
        %2246 = vmatmul.mubr.bf16.gmra.mrb[0].mxu0 %v968
        %v2247 = vpop.f32.mrb[0].mxu0
        %v2248 = vadd.f32 0.0, %v2247
        %v2249 = vpop.f32.mrb[0].mxu0
        %v2250 = vpop.f32.mrb[0].mxu0
        %v2251 = vadd.f32 0.0, %v2250
        %v2252 = vpop.f32.mrb[0].mxu0
        %2253 = vmatprep.mubr.bf16.mxu0 0
        %2254 = vmatmul.mubr.bf16.gmra.mrb[0].mxu0 %v969
        %v2255 = vpop.f32.mrb[0].mxu0
        %v2256 = vadd.f32 0.0, %v2255
        %v2257 = vpop.f32.mrb[0].mxu0
        %v2258 = vpop.f32.mrb[0].mxu0
        %v2259 = vadd.f32 0.0, %v2258
        %v2260 = vpop.f32.mrb[0].mxu0
        %2261 = vmatprep.mubr.bf16.mxu0 0
        %2262 = vmatmul.mubr.bf16.gmra.mrb[0].mxu0 %v970
        %v2263 = vpop.f32.mrb[0].mxu0
        %v2264 = vadd.f32 0.0, %v2263
        %v2265 = vpop.f32.mrb[0].mxu0
        %v2266 = vpop.f32.mrb[0].mxu0
        %v2267 = vadd.f32 0.0, %v2266
        %v2268 = vpop.f32.mrb[0].mxu0
        %2269 = vmatprep.mubr.bf16.mxu0 0
        %2270 = vmatmul.mubr.bf16.gmra.mrb[0].mxu0 %v971
        %v2271 = vpop.f32.mrb[0].mxu0
        %v2272 = vadd.f32 0.0, %v2271
        %v2273 = vpop.f32.mrb[0].mxu0
        %v2274 = vpop.f32.mrb[0].mxu0
        %v2275 = vadd.f32 0.0, %v2274
        %v2276 = vpop.f32.mrb[0].mxu0
        %2277 = vmatprep.mubr.bf16.mxu0 0
        %2278 = vmatmul.mubr.bf16.gmra.mrb[0].mxu0 %v972
        %v2279 = vpop.f32.mrb[0].mxu0
        %v2280 = vadd.f32 0.0, %v2279
        %v2281 = vpop.f32.mrb[0].mxu0
        %v2282 = vpop.f32.mrb[0].mxu0
        %v2283 = vadd.f32 0.0, %v2282
        %v2284 = vpop.f32.mrb[0].mxu0
        %2285 = vmatprep.mubr.bf16.mxu0 0
        %2286 = vmatmul.mubr.bf16.gmra.mrb[0].mxu0 %v973
        %v2287 = vpop.f32.mrb[0].mxu0
        %v2288 = vadd.f32 0.0, %v2287
        %v2289 = vpop.f32.mrb[0].mxu0
        %v2290 = vpop.f32.mrb[0].mxu0
        %v2291 = vadd.f32 0.0, %v2290
        %v2292 = vpop.f32.mrb[0].mxu0
        %2293 = vmatprep.mubr.bf16.mxu0 0
        %2294 = vmatmul.mubr.bf16.gmra.mrb[0].mxu0 %v974
        %v2295 = vpop.f32.mrb[0].mxu0
        %v2296 = vadd.f32 0.0, %v2295
        %v2297 = vpop.f32.mrb[0].mxu0
        %v2298 = vpop.f32.mrb[0].mxu0
        %v2299 = vadd.f32 0.0, %v2298
        %v2300 = vpop.f32.mrb[0].mxu0
        %2301 = vmatprep.mubr.bf16.mxu0 0
        %2302 = vmatmul.mubr.bf16.gmra.mrb[0].mxu0 %v975
        %v2303 = vpop.f32.mrb[0].mxu0
        %v2304 = vadd.f32 0.0, %v2303
        %v2305 = vpop.f32.mrb[0].mxu0
        %v2306 = vpop.f32.mrb[0].mxu0
        %v2307 = vadd.f32 0.0, %v2306
        %v2308 = vpop.f32.mrb[0].mxu0
        %2309 = vmatprep.mubr.bf16.mxu0 0
        %2310 = vmatmul.mubr.bf16.gmra.mrb[0].mxu0 %v976
        %v2311 = vpop.f32.mrb[0].mxu0
        %v2312 = vadd.f32 0.0, %v2311
        %v2313 = vpop.f32.mrb[0].mxu0
        %v2314 = vpop.f32.mrb[0].mxu0
        %v2315 = vadd.f32 0.0, %v2314
        %v2316 = vpop.f32.mrb[0].mxu0
        %2317 = vmatprep.mubr.bf16.mxu0 0
        %2318 = vmatmul.mubr.bf16.gmra.mrb[0].mxu0 %v977
        %v2319 = vpop.f32.mrb[0].mxu0
        %v2320 = vadd.f32 0.0, %v2319
        %v2321 = vpop.f32.mrb[0].mxu0
        %v2322 = vpop.f32.mrb[0].mxu0
        %v2323 = vadd.f32 0.0, %v2322
        %v2324 = vpop.f32.mrb[0].mxu0
        %2325 = vmatprep.mubr.bf16.mxu0 0
        %2326 = vmatmul.mubr.bf16.gmra.mrb[0].mxu0 %v978
        %v2327 = vpop.f32.mrb[0].mxu0
        %v2328 = vadd.f32 0.0, %v2327
        %v2329 = vpop.f32.mrb[0].mxu0
        %v2330 = vpop.f32.mrb[0].mxu0
        %v2331 = vadd.f32 0.0, %v2330
        %v2332 = vpop.f32.mrb[0].mxu0
        %2333 = vmatprep.mubr.bf16.mxu0 0
        %2334 = vmatmul.mubr.bf16.gmra.mrb[0].mxu0 %v979
        %v2335 = vpop.f32.mrb[0].mxu0
        %v2336 = vadd.f32 0.0, %v2335
        %v2337 = vpop.f32.mrb[0].mxu0
        %v2338 = vpop.f32.mrb[0].mxu0
        %v2339 = vadd.f32 0.0, %v2338
        %v2340 = vpop.f32.mrb[0].mxu0
        %2341 = vmatprep.mubr.bf16.mxu0 0
        %2342 = vmatmul.mubr.bf16.gmra.mrb[0].mxu0 %v980
        %v2343 = vpop.f32.mrb[0].mxu0
        %v2344 = vadd.f32 0.0, %v2343
        %v2345 = vpop.f32.mrb[0].mxu0
        %v2346 = vpop.f32.mrb[0].mxu0
        %v2347 = vadd.f32 0.0, %v2346
        %v2348 = vpop.f32.mrb[0].mxu0
        %2349 = vmatprep.mubr.bf16.mxu0 0
        %2350 = vmatmul.mubr.bf16.gmra.mrb[0].mxu0 %v981
        %v2351 = vpop.f32.mrb[0].mxu0
        %v2352 = vadd.f32 0.0, %v2351
        %v2353 = vpop.f32.mrb[0].mxu0
        %v2354 = vpop.f32.mrb[0].mxu0
        %v2355 = vadd.f32 0.0, %v2354
        %v2356 = vpop.f32.mrb[0].mxu0
        %2357 = vmatprep.mubr.bf16.mxu0 0
        %2358 = vmatmul.mubr.bf16.gmra.mrb[0].mxu0 %v982
        %v2359 = vpop.f32.mrb[0].mxu0
        %v2360 = vadd.f32 0.0, %v2359
        %v2361 = vpop.f32.mrb[0].mxu0
        %v2362 = vpop.f32.mrb[0].mxu0
        %v2363 = vadd.f32 0.0, %v2362
        %v2364 = vpop.f32.mrb[0].mxu0
        %2365 = vmatprep.mubr.bf16.mxu0 0
        %2366 = vmatmul.mubr.bf16.gmra.mrb[0].mxu0 %v983
        %v2367 = vpop.f32.mrb[0].mxu0
        %v2368 = vadd.f32 0.0, %v2367
        %v2369 = vpop.f32.mrb[0].mxu0
        %v2370 = vpop.f32.mrb[0].mxu0
        %v2371 = vadd.f32 0.0, %v2370
        %v2372 = vpop.f32.mrb[0].mxu0
        %2373 = vmatprep.mubr.bf16.mxu0 0
        %2374 = vmatmul.mubr.bf16.gmra.mrb[0].mxu0 %v984
        %v2375 = vpop.f32.mrb[0].mxu0
        %v2376 = vadd.f32 0.0, %v2375
        %v2377 = vpop.f32.mrb[0].mxu0
        %v2378 = vpop.f32.mrb[0].mxu0
        %v2379 = vadd.f32 0.0, %v2378
        %v2380 = vpop.f32.mrb[0].mxu0
        %2381 = vmatprep.mubr.bf16.mxu0 0
        %2382 = vmatmul.mubr.bf16.gmra.mrb[0].mxu0 %v985
        %v2383 = vpop.f32.mrb[0].mxu0
        %v2384 = vadd.f32 0.0, %v2383
        %v2385 = vpop.f32.mrb[0].mxu0
        %v2386 = vpop.f32.mrb[0].mxu0
        %v2387 = vadd.f32 0.0, %v2386
        %v2388 = vpop.f32.mrb[0].mxu0
        %2389 = vdwg.mxu0
        %v2406 = vunpack.c.l.b16 %v2085
        %v2407 = vunpack.c.l.b16 %v2086
        %v2408 = vunpack.c.l.b16 %v2087
        %v2409 = vunpack.c.l.b16 %v2088
        %v2410 = vunpack.c.l.b16 %v2089
        %v2411 = vunpack.c.l.b16 %v2090
        %v2412 = vunpack.c.l.b16 %v2091
        %v2413 = vunpack.c.l.b16 %v2092
        %v2414 = vunpack.c.l.b16 %v2093
        %v2415 = vunpack.c.l.b16 %v2094
        %v2416 = vunpack.c.l.b16 %v2095
        %v2417 = vunpack.c.l.b16 %v2096
        %v2418 = vunpack.c.l.b16 %v2097
        %v2419 = vunpack.c.l.b16 %v2098
        %v2420 = vunpack.c.l.b16 %v2099
        %v2421 = vunpack.c.l.b16 %v2100
        %v2422 = vpack.c.b16 %v2407, %v2406
        %v2423 = vpack.c.b16 %v2409, %v2408
        %v2424 = vpack.c.b16 %v2411, %v2410
        %v2425 = vpack.c.b16 %v2413, %v2412
        %v2426 = vpack.c.b16 %v2415, %v2414
        %v2427 = vpack.c.b16 %v2417, %v2416
        %v2428 = vpack.c.b16 %v2419, %v2418
        %v2429 = vpack.c.b16 %v2421, %v2420
        %2438 = vmatprep.subr.bf16.mxu0 0
        %2439 = vmatpush1.bf16.msra.mxu0 %v2422
        %2440 = vmatprep.subr.bf16.mxu0 0
        %2441 = vmatpush1.bf16.msra.mxu0 %v2423
        %2442 = vmatprep.subr.bf16.mxu0 0
        %2443 = vmatpush1.bf16.msra.mxu0 %v2424
        %2444 = vmatprep.subr.bf16.mxu0 0
        %2445 = vmatpush1.bf16.msra.mxu0 %v2425
        %2446 = vmatprep.subr.bf16.mxu0 0
        %2447 = vmatpush1.bf16.msra.mxu0 %v2426
        %2448 = vmatprep.subr.bf16.mxu0 0
        %2449 = vmatpush1.bf16.msra.mxu0 %v2427
        %2450 = vmatprep.subr.bf16.mxu0 0
        %2451 = vmatpush1.bf16.msra.mxu0 %v2428
        %2452 = vmatprep.subr.bf16.mxu0 0
        %2453 = vmatpush1.bf16.msra.mxu0 %v2429
        %2454 = vmatprep.subr.bf16.mxu0 0
        %2455 = vmatpush1.bf16.msra.mxu0 0
        %2456 = vmatprep.subr.bf16.mxu0 0
        %2457 = vmatpush1.bf16.msra.mxu0 0
        %2458 = vmatprep.subr.bf16.mxu0 0
        %2459 = vmatpush1.bf16.msra.mxu0 0
        %2460 = vmatprep.subr.bf16.mxu0 0
        %2461 = vmatpush1.bf16.msra.mxu0 0
        %2462 = vmatprep.subr.bf16.mxu0 0
        %2463 = vmatpush1.bf16.msra.mxu0 0
        %2464 = vmatprep.subr.bf16.mxu0 0
        %2465 = vmatpush1.bf16.msra.mxu0 0
        %2466 = vmatprep.subr.bf16.mxu0 0
        %2467 = vmatpush1.bf16.msra.mxu0 0
        %2468 = vmatprep.subr.bf16.mxu0 0
        %2469 = vmatpush1.bf16.msra.mxu0 0
        %2470 = vmatprep.mubr.bf16.mxu0 0
        %2471 = vmatmul.mubr.bf16.gmra.mrb[0].mxu0 %v2061
        %v2472 = vpop.f32.mrb[0].mxu0
        %v2473 = vadd.f32 %v2200, %v2472
        %v2474 = vpop.f32.mrb[0].mxu0
        %v2475 = vpop.f32.mrb[0].mxu0
        %v2476 = vadd.f32 %v2203, %v2475
        %v2477 = vpop.f32.mrb[0].mxu0
        %2478 = vmatprep.mubr.bf16.mxu0 0
        %2479 = vmatmul.mubr.bf16.gmra.mrb[0].mxu0 %v2062
        %v2480 = vpop.f32.mrb[0].mxu0
        %v2481 = vadd.f32 %v2208, %v2480
        %v2482 = vpop.f32.mrb[0].mxu0
        %v2483 = vpop.f32.mrb[0].mxu0
        %v2484 = vadd.f32 %v2211, %v2483
        %v2485 = vpop.f32.mrb[0].mxu0
        %2486 = vmatprep.mubr.bf16.mxu0 0
        %2487 = vmatmul.mubr.bf16.gmra.mrb[0].mxu0 %v2063
        %v2488 = vpop.f32.mrb[0].mxu0
        %v2489 = vadd.f32 %v2216, %v2488
        %v2490 = vpop.f32.mrb[0].mxu0
        %v2491 = vpop.f32.mrb[0].mxu0
        %v2492 = vadd.f32 %v2219, %v2491
        %v2493 = vpop.f32.mrb[0].mxu0
        %2494 = vmatprep.mubr.bf16.mxu0 0
        %2495 = vmatmul.mubr.bf16.gmra.mrb[0].mxu0 %v2064
        %v2496 = vpop.f32.mrb[0].mxu0
        %v2497 = vadd.f32 %v2224, %v2496
        %v2498 = vpop.f32.mrb[0].mxu0
        %v2499 = vpop.f32.mrb[0].mxu0
        %v2500 = vadd.f32 %v2227, %v2499
        %v2501 = vpop.f32.mrb[0].mxu0
        %2502 = vmatprep.mubr.bf16.mxu0 0
        %2503 = vmatmul.mubr.bf16.gmra.mrb[0].mxu0 %v2065
        %v2504 = vpop.f32.mrb[0].mxu0
        %v2505 = vadd.f32 %v2232, %v2504
        %v2506 = vpop.f32.mrb[0].mxu0
        %v2507 = vpop.f32.mrb[0].mxu0
        %v2508 = vadd.f32 %v2235, %v2507
        %v2509 = vpop.f32.mrb[0].mxu0
        %2510 = vmatprep.mubr.bf16.mxu0 0
        %2511 = vmatmul.mubr.bf16.gmra.mrb[0].mxu0 %v2066
        %v2512 = vpop.f32.mrb[0].mxu0
        %v2513 = vadd.f32 %v2240, %v2512
        %v2514 = vpop.f32.mrb[0].mxu0
        %v2515 = vpop.f32.mrb[0].mxu0
        %v2516 = vadd.f32 %v2243, %v2515
        %v2517 = vpop.f32.mrb[0].mxu0
        %2518 = vmatprep.mubr.bf16.mxu0 0
        %2519 = vmatmul.mubr.bf16.gmra.mrb[0].mxu0 %v2067
        %v2520 = vpop.f32.mrb[0].mxu0
        %v2521 = vadd.f32 %v2248, %v2520
        %v2522 = vpop.f32.mrb[0].mxu0
        %v2523 = vpop.f32.mrb[0].mxu0
        %v2524 = vadd.f32 %v2251, %v2523
        %v2525 = vpop.f32.mrb[0].mxu0
        %2526 = vmatprep.mubr.bf16.mxu0 0
        %2527 = vmatmul.mubr.bf16.gmra.mrb[0].mxu0 %v2068
        %v2528 = vpop.f32.mrb[0].mxu0
        %v2529 = vadd.f32 %v2256, %v2528
        %v2530 = vpop.f32.mrb[0].mxu0
        %v2531 = vpop.f32.mrb[0].mxu0
        %v2532 = vadd.f32 %v2259, %v2531
        %v2533 = vpop.f32.mrb[0].mxu0
        %2534 = vmatprep.mubr.bf16.mxu0 0
        %2535 = vmatmul.mubr.bf16.gmra.mrb[0].mxu0 %v2069
        %v2536 = vpop.f32.mrb[0].mxu0
        %v2537 = vadd.f32 %v2264, %v2536
        %v2538 = vpop.f32.mrb[0].mxu0
        %v2539 = vpop.f32.mrb[0].mxu0
        %v2540 = vadd.f32 %v2267, %v2539
        %v2541 = vpop.f32.mrb[0].mxu0
        %2542 = vmatprep.mubr.bf16.mxu0 0
        %2543 = vmatmul.mubr.bf16.gmra.mrb[0].mxu0 %v2070
        %v2544 = vpop.f32.mrb[0].mxu0
        %v2545 = vadd.f32 %v2272, %v2544
        %v2546 = vpop.f32.mrb[0].mxu0
        %v2547 = vpop.f32.mrb[0].mxu0
        %v2548 = vadd.f32 %v2275, %v2547
        %v2549 = vpop.f32.mrb[0].mxu0
        %2550 = vmatprep.mubr.bf16.mxu0 0
        %2551 = vmatmul.mubr.bf16.gmra.mrb[0].mxu0 %v2071
        %v2552 = vpop.f32.mrb[0].mxu0
        %v2553 = vadd.f32 %v2280, %v2552
        %v2554 = vpop.f32.mrb[0].mxu0
        %v2555 = vpop.f32.mrb[0].mxu0
        %v2556 = vadd.f32 %v2283, %v2555
        %v2557 = vpop.f32.mrb[0].mxu0
        %2558 = vmatprep.mubr.bf16.mxu0 0
        %2559 = vmatmul.mubr.bf16.gmra.mrb[0].mxu0 %v2072
        %v2560 = vpop.f32.mrb[0].mxu0
        %v2561 = vadd.f32 %v2288, %v2560
        %v2562 = vpop.f32.mrb[0].mxu0
        %v2563 = vpop.f32.mrb[0].mxu0
        %v2564 = vadd.f32 %v2291, %v2563
        %v2565 = vpop.f32.mrb[0].mxu0
        %2566 = vmatprep.mubr.bf16.mxu0 0
        %2567 = vmatmul.mubr.bf16.gmra.mrb[0].mxu0 %v2073
        %v2568 = vpop.f32.mrb[0].mxu0
        %v2569 = vadd.f32 %v2296, %v2568
        %v2570 = vpop.f32.mrb[0].mxu0
        %v2571 = vpop.f32.mrb[0].mxu0
        %v2572 = vadd.f32 %v2299, %v2571
        %v2573 = vpop.f32.mrb[0].mxu0
        %2574 = vmatprep.mubr.bf16.mxu0 0
        %2575 = vmatmul.mubr.bf16.gmra.mrb[0].mxu0 %v2074
        %v2576 = vpop.f32.mrb[0].mxu0
        %v2577 = vadd.f32 %v2304, %v2576
        %v2578 = vpop.f32.mrb[0].mxu0
        %v2579 = vpop.f32.mrb[0].mxu0
        %v2580 = vadd.f32 %v2307, %v2579
        %v2581 = vpop.f32.mrb[0].mxu0
        %2582 = vmatprep.mubr.bf16.mxu0 0
        %2583 = vmatmul.mubr.bf16.gmra.mrb[0].mxu0 %v2075
        %v2584 = vpop.f32.mrb[0].mxu0
        %v2585 = vadd.f32 %v2312, %v2584
        %v2586 = vpop.f32.mrb[0].mxu0
        %v2587 = vpop.f32.mrb[0].mxu0
        %v2588 = vadd.f32 %v2315, %v2587
        %v2589 = vpop.f32.mrb[0].mxu0
        %2590 = vmatprep.mubr.bf16.mxu0 0
        %2591 = vmatmul.mubr.bf16.gmra.mrb[0].mxu0 %v2076
        %v2592 = vpop.f32.mrb[0].mxu0
        %v2593 = vadd.f32 %v2320, %v2592
        %v2594 = vpop.f32.mrb[0].mxu0
        %v2595 = vpop.f32.mrb[0].mxu0
        %v2596 = vadd.f32 %v2323, %v2595
        %v2597 = vpop.f32.mrb[0].mxu0
        %2598 = vmatprep.mubr.bf16.mxu0 0
        %2599 = vmatmul.mubr.bf16.gmra.mrb[0].mxu0 %v2077
        %v2600 = vpop.f32.mrb[0].mxu0
        %v2601 = vadd.f32 %v2328, %v2600
        %v2602 = vpop.f32.mrb[0].mxu0
        %v2603 = vpop.f32.mrb[0].mxu0
        %v2604 = vadd.f32 %v2331, %v2603
        %v2605 = vpop.f32.mrb[0].mxu0
        %2606 = vmatprep.mubr.bf16.mxu0 0
        %2607 = vmatmul.mubr.bf16.gmra.mrb[0].mxu0 %v2078
        %v2608 = vpop.f32.mrb[0].mxu0
        %v2609 = vadd.f32 %v2336, %v2608
        %v2610 = vpop.f32.mrb[0].mxu0
        %v2611 = vpop.f32.mrb[0].mxu0
        %v2612 = vadd.f32 %v2339, %v2611
        %v2613 = vpop.f32.mrb[0].mxu0
        %2614 = vmatprep.mubr.bf16.mxu0 0
        %2615 = vmatmul.mubr.bf16.gmra.mrb[0].mxu0 %v2079
        %v2616 = vpop.f32.mrb[0].mxu0
        %v2617 = vadd.f32 %v2344, %v2616
        %v2618 = vpop.f32.mrb[0].mxu0
        %v2619 = vpop.f32.mrb[0].mxu0
        %v2620 = vadd.f32 %v2347, %v2619
        %v2621 = vpop.f32.mrb[0].mxu0
        %2622 = vmatprep.mubr.bf16.mxu0 0
        %2623 = vmatmul.mubr.bf16.gmra.mrb[0].mxu0 %v2080
        %v2624 = vpop.f32.mrb[0].mxu0
        %v2625 = vadd.f32 %v2352, %v2624
        %v2626 = vpop.f32.mrb[0].mxu0
        %v2627 = vpop.f32.mrb[0].mxu0
        %v2628 = vadd.f32 %v2355, %v2627
        %v2629 = vpop.f32.mrb[0].mxu0
        %2630 = vmatprep.mubr.bf16.mxu0 0
        %2631 = vmatmul.mubr.bf16.gmra.mrb[0].mxu0 %v2081
        %v2632 = vpop.f32.mrb[0].mxu0
        %v2633 = vadd.f32 %v2360, %v2632
        %v2634 = vpop.f32.mrb[0].mxu0
        %v2635 = vpop.f32.mrb[0].mxu0
        %v2636 = vadd.f32 %v2363, %v2635
        %v2637 = vpop.f32.mrb[0].mxu0
        %2638 = vmatprep.mubr.bf16.mxu0 0
        %2639 = vmatmul.mubr.bf16.gmra.mrb[0].mxu0 %v2082
        %v2640 = vpop.f32.mrb[0].mxu0
        %v2641 = vadd.f32 %v2368, %v2640
        %v2642 = vpop.f32.mrb[0].mxu0
        %v2643 = vpop.f32.mrb[0].mxu0
        %v2644 = vadd.f32 %v2371, %v2643
        %v2645 = vpop.f32.mrb[0].mxu0
        %2646 = vmatprep.mubr.bf16.mxu0 0
        %2647 = vmatmul.mubr.bf16.gmra.mrb[0].mxu0 %v2083
        %v2648 = vpop.f32.mrb[0].mxu0
        %v2649 = vadd.f32 %v2376, %v2648
        %v2650 = vpop.f32.mrb[0].mxu0
        %v2651 = vpop.f32.mrb[0].mxu0
        %v2652 = vadd.f32 %v2379, %v2651
        %v2653 = vpop.f32.mrb[0].mxu0
        %2654 = vmatprep.mubr.bf16.mxu0 0
        %2655 = vmatmul.mubr.bf16.gmra.mrb[0].mxu0 %v2084
        %v2656 = vpop.f32.mrb[0].mxu0
        %v2657 = vadd.f32 %v2384, %v2656
        %v2658 = vpop.f32.mrb[0].mxu0
        %v2659 = vpop.f32.mrb[0].mxu0
        %v2660 = vadd.f32 %v2387, %v2659
        %v2661 = vpop.f32.mrb[0].mxu0
        %2662 = vdwg.mxu0
        %v2663 = vlaneseq
        %v2664 = vshrl.u32 %v2663, 7
        %v2665 = vsub.s32 0, %v2664
        %v2666 = vrot.slane %v794, %v2665
        %v2667 = vadd.f32 %v2473, %v2666
        %v2668 = vadd.f32 %v2476, %v2666
        %v2669 = vadd.f32 %v2481, %v2666
        %v2670 = vadd.f32 %v2484, %v2666
        %v2671 = vadd.f32 %v2489, %v2666
        %v2672 = vadd.f32 %v2492, %v2666
        %v2673 = vadd.f32 %v2497, %v2666
        %v2674 = vadd.f32 %v2500, %v2666
        %v2675 = vadd.f32 %v2505, %v2666
        %v2676 = vadd.f32 %v2508, %v2666
        %v2677 = vadd.f32 %v2513, %v2666
        %v2678 = vadd.f32 %v2516, %v2666
        %v2679 = vadd.f32 %v2521, %v2666
        %v2680 = vadd.f32 %v2524, %v2666
        %v2681 = vadd.f32 %v2529, %v2666
        %v2682 = vadd.f32 %v2532, %v2666
        %v2683 = vadd.f32 %v2537, %v2666
        %v2684 = vadd.f32 %v2540, %v2666
        %v2685 = vadd.f32 %v2545, %v2666
        %v2686 = vadd.f32 %v2548, %v2666
        %v2687 = vadd.f32 %v2553, %v2666
        %v2688 = vadd.f32 %v2556, %v2666
        %v2689 = vadd.f32 %v2561, %v2666
        %v2690 = vadd.f32 %v2564, %v2666
        %v2691 = vadd.f32 %v2569, %v2666
        %v2692 = vadd.f32 %v2572, %v2666
        %v2693 = vadd.f32 %v2577, %v2666
        %v2694 = vadd.f32 %v2580, %v2666
        %v2695 = vadd.f32 %v2585, %v2666
        %v2696 = vadd.f32 %v2588, %v2666
        %v2697 = vadd.f32 %v2593, %v2666
        %v2698 = vadd.f32 %v2596, %v2666
        %v2699 = vadd.f32 %v2601, %v2666
        %v2700 = vadd.f32 %v2604, %v2666
        %v2701 = vadd.f32 %v2609, %v2666
        %v2702 = vadd.f32 %v2612, %v2666
        %v2703 = vadd.f32 %v2617, %v2666
        %v2704 = vadd.f32 %v2620, %v2666
        %v2705 = vadd.f32 %v2625, %v2666
        %v2706 = vadd.f32 %v2628, %v2666
        %v2707 = vadd.f32 %v2633, %v2666
        %v2708 = vadd.f32 %v2636, %v2666
        %v2709 = vadd.f32 %v2641, %v2666
        %v2710 = vadd.f32 %v2644, %v2666
        %v2711 = vadd.f32 %v2649, %v2666
        %v2712 = vadd.f32 %v2652, %v2666
        %v2713 = vadd.f32 %v2657, %v2666
        %v2714 = vadd.f32 %v2660, %v2666
        %v2715 = vmax.f32 %v2667, 0.0
        %v2716 = vmax.f32 %v2668, 0.0
        %v2717 = vmax.f32 %v2669, 0.0
        %v2718 = vmax.f32 %v2670, 0.0
        %v2719 = vmax.f32 %v2671, 0.0
        %v2720 = vmax.f32 %v2672, 0.0
        %v2721 = vmax.f32 %v2673, 0.0
        %v2722 = vmax.f32 %v2674, 0.0
        %v2723 = vmax.f32 %v2675, 0.0
        %v2724 = vmax.f32 %v2676, 0.0
        %v2725 = vmax.f32 %v2677, 0.0
        %v2726 = vmax.f32 %v2678, 0.0
        %v2727 = vmax.f32 %v2679, 0.0
        %v2728 = vmax.f32 %v2680, 0.0
        %v2729 = vmax.f32 %v2681, 0.0
        %v2730 = vmax.f32 %v2682, 0.0
        %v2731 = vmax.f32 %v2683, 0.0
        %v2732 = vmax.f32 %v2684, 0.0
        %v2733 = vmax.f32 %v2685, 0.0
        %v2734 = vmax.f32 %v2686, 0.0
        %v2735 = vmax.f32 %v2687, 0.0
        %v2736 = vmax.f32 %v2688, 0.0
        %v2737 = vmax.f32 %v2689, 0.0
        %v2738 = vmax.f32 %v2690, 0.0
        %v2739 = vmax.f32 %v2691, 0.0
        %v2740 = vmax.f32 %v2692, 0.0
        %v2741 = vmax.f32 %v2693, 0.0
        %v2742 = vmax.f32 %v2694, 0.0
        %v2743 = vmax.f32 %v2695, 0.0
        %v2744 = vmax.f32 %v2696, 0.0
        %v2745 = vmax.f32 %v2697, 0.0
        %v2746 = vmax.f32 %v2698, 0.0
        %v2747 = vmax.f32 %v2699, 0.0
        %v2748 = vmax.f32 %v2700, 0.0
        %v2749 = vmax.f32 %v2701, 0.0
        %v2750 = vmax.f32 %v2702, 0.0
        %v2751 = vmax.f32 %v2703, 0.0
        %v2752 = vmax.f32 %v2704, 0.0
        %v2753 = vmax.f32 %v2705, 0.0
        %v2754 = vmax.f32 %v2706, 0.0
        %v2755 = vmax.f32 %v2707, 0.0
        %v2756 = vmax.f32 %v2708, 0.0
        %v2757 = vmax.f32 %v2709, 0.0
        %v2758 = vmax.f32 %v2710, 0.0
        %v2759 = vmax.f32 %v2711, 0.0
        %v2760 = vmax.f32 %v2712, 0.0
        %v2761 = vmax.f32 %v2713, 0.0
        %v2762 = vmax.f32 %v2714, 0.0
        %v2763 = vpack.c.bf16 %v2716, %v2715
        %v2764 = vpack.c.bf16 %v2718, %v2717
        %v2765 = vpack.c.bf16 %v2720, %v2719
        %v2766 = vpack.c.bf16 %v2722, %v2721
        %v2767 = vpack.c.bf16 %v2724, %v2723
        %v2768 = vpack.c.bf16 %v2726, %v2725
        %v2769 = vpack.c.bf16 %v2728, %v2727
        %v2770 = vpack.c.bf16 %v2730, %v2729
        %v2771 = vpack.c.bf16 %v2732, %v2731
        %v2772 = vpack.c.bf16 %v2734, %v2733
        %v2773 = vpack.c.bf16 %v2736, %v2735
        %v2774 = vpack.c.bf16 %v2738, %v2737
        %v2775 = vpack.c.bf16 %v2740, %v2739
        %v2776 = vpack.c.bf16 %v2742, %v2741
        %v2777 = vpack.c.bf16 %v2744, %v2743
        %v2778 = vpack.c.bf16 %v2746, %v2745
        %v2779 = vpack.c.bf16 %v2748, %v2747
        %v2780 = vpack.c.bf16 %v2750, %v2749
        %v2781 = vpack.c.bf16 %v2752, %v2751
        %v2782 = vpack.c.bf16 %v2754, %v2753
        %v2783 = vpack.c.bf16 %v2756, %v2755
        %v2784 = vpack.c.bf16 %v2758, %v2757
        %v2785 = vpack.c.bf16 %v2760, %v2759
        %v2786 = vpack.c.bf16 %v2762, %v2761
        %v2787 = vld [vmem:[%s669] sm:$0xf]
        %v2788 = vld [vmem:[%s669 + $0x4] sm:$0xf]
        %v2789 = vld [vmem:[%s669 + $0x8] sm:$0xf]
        %v2790 = vld [vmem:[%s669 + $0xc] sm:$0xf]
        %v2791 = vld [vmem:[%s669 + $0x10] sm:$0xf]
        %v2792 = vld [vmem:[%s669 + $0x14] sm:$0xf]
        %v2793 = vld [vmem:[%s669 + $0x18] sm:$0xf]
        %v2794 = vld [vmem:[%s669 + $0x1c] sm:$0xf]
        %v2795 = vld [vmem:[%s669 + $0x20] sm:$0xf]
        %v2796 = vld [vmem:[%s669 + $0x24] sm:$0xf]
        %v2797 = vld [vmem:[%s669 + $0x28] sm:$0xf]
        %v2798 = vld [vmem:[%s669 + $0x2c] sm:$0xf]
        %v2799 = vld [vmem:[%s669 + $0x30] sm:$0xf]
        %v2800 = vld [vmem:[%s669 + $0x34] sm:$0xf]
        %v2801 = vld [vmem:[%s669 + $0x38] sm:$0xf]
        %v2802 = vld [vmem:[%s669 + $0x3c] sm:$0xf]
        %v2803 = vld [vmem:[%s678] sm:$0xf]
        %v2804 = vld [vmem:[%s678 + $0x4] sm:$0xf]
        %v2805 = vld [vmem:[%s678 + $0x8] sm:$0xf]
        %v2806 = vld [vmem:[%s678 + $0xc] sm:$0xf]
        %v2807 = vld [vmem:[%s678 + $0x10] sm:$0xf]
        %v2808 = vld [vmem:[%s678 + $0x14] sm:$0xf]
        %v2809 = vld [vmem:[%s678 + $0x18] sm:$0xf]
        %v2810 = vld [vmem:[%s678 + $0x1c] sm:$0xf]
        %v2811 = vld [vmem:[%s678 + $0x20] sm:$0xf]
        %v2812 = vld [vmem:[%s678 + $0x24] sm:$0xf]
        %v2813 = vld [vmem:[%s678 + $0x28] sm:$0xf]
        %v2814 = vld [vmem:[%s678 + $0x2c] sm:$0xf]
        %v2815 = vld [vmem:[%s678 + $0x30] sm:$0xf]
        %v2816 = vld [vmem:[%s678 + $0x34] sm:$0xf]
        %v2817 = vld [vmem:[%s678 + $0x38] sm:$0xf]
        %v2818 = vld [vmem:[%s678 + $0x3c] sm:$0xf]
        %v2835 = vunpack.c.l.b16 %v2803
        %v2836 = vunpack.c.l.b16 %v2804
        %v2837 = vunpack.c.l.b16 %v2805
        %v2838 = vunpack.c.l.b16 %v2806
        %v2839 = vunpack.c.l.b16 %v2807
        %v2840 = vunpack.c.l.b16 %v2808
        %v2841 = vunpack.c.l.b16 %v2809
        %v2842 = vunpack.c.l.b16 %v2810
        %v2843 = vunpack.c.l.b16 %v2811
        %v2844 = vunpack.c.l.b16 %v2812
        %v2845 = vunpack.c.l.b16 %v2813
        %v2846 = vunpack.c.l.b16 %v2814
        %v2847 = vunpack.c.l.b16 %v2815
        %v2848 = vunpack.c.l.b16 %v2816
        %v2849 = vunpack.c.l.b16 %v2817
        %v2850 = vunpack.c.l.b16 %v2818
        %v2851 = vpack.c.b16 %v2836, %v2835
        %v2852 = vpack.c.b16 %v2838, %v2837
        %v2853 = vpack.c.b16 %v2840, %v2839
        %v2854 = vpack.c.b16 %v2842, %v2841
        %v2855 = vpack.c.b16 %v2844, %v2843
        %v2856 = vpack.c.b16 %v2846, %v2845
        %v2857 = vpack.c.b16 %v2848, %v2847
        %v2858 = vpack.c.b16 %v2850, %v2849
        %2867 = vmatprep.subr.bf16.mxu0 0
        %2868 = vmatpush1.bf16.msra.mxu0 %v2851
        %2869 = vmatprep.subr.bf16.mxu0 0
        %2870 = vmatpush1.bf16.msra.mxu0 %v2852
        %2871 = vmatprep.subr.bf16.mxu0 0
        %2872 = vmatpush1.bf16.msra.mxu0 %v2853
        %2873 = vmatprep.subr.bf16.mxu0 0
        %2874 = vmatpush1.bf16.msra.mxu0 %v2854
        %2875 = vmatprep.subr.bf16.mxu0 0
        %2876 = vmatpush1.bf16.msra.mxu0 %v2855
        %2877 = vmatprep.subr.bf16.mxu0 0
        %2878 = vmatpush1.bf16.msra.mxu0 %v2856
        %2879 = vmatprep.subr.bf16.mxu0 0
        %2880 = vmatpush1.bf16.msra.mxu0 %v2857
        %2881 = vmatprep.subr.bf16.mxu0 0
        %2882 = vmatpush1.bf16.msra.mxu0 %v2858
        %2883 = vmatprep.subr.bf16.mxu0 0
        %2884 = vmatpush1.bf16.msra.mxu0 0
        %2885 = vmatprep.subr.bf16.mxu0 0
        %2886 = vmatpush1.bf16.msra.mxu0 0
        %2887 = vmatprep.subr.bf16.mxu0 0
        %2888 = vmatpush1.bf16.msra.mxu0 0
        %2889 = vmatprep.subr.bf16.mxu0 0
        %2890 = vmatpush1.bf16.msra.mxu0 0
        %2891 = vmatprep.subr.bf16.mxu0 0
        %2892 = vmatpush1.bf16.msra.mxu0 0
        %2893 = vmatprep.subr.bf16.mxu0 0
        %2894 = vmatpush1.bf16.msra.mxu0 0
        %2895 = vmatprep.subr.bf16.mxu0 0
        %2896 = vmatpush1.bf16.msra.mxu0 0
        %2897 = vmatprep.subr.bf16.mxu0 0
        %2898 = vmatpush1.bf16.msra.mxu0 0
        %2899 = vmatprep.mubr.bf16.mxu0 0
        %2900 = vmatmul.mubr.bf16.gmra.mrb[0].mxu0 %v962
        %v2901 = vpop.f32.mrb[0].mxu0
        %v2902 = vadd.f32 0.0, %v2901
        %v2903 = vpop.f32.mrb[0].mxu0
        %v2904 = vpop.f32.mrb[0].mxu0
        %v2905 = vadd.f32 0.0, %v2904
        %v2906 = vpop.f32.mrb[0].mxu0
        %2907 = vmatprep.mubr.bf16.mxu0 0
        %2908 = vmatmul.mubr.bf16.gmra.mrb[0].mxu0 %v963
        %v2909 = vpop.f32.mrb[0].mxu0
        %v2910 = vadd.f32 0.0, %v2909
        %v2911 = vpop.f32.mrb[0].mxu0
        %v2912 = vpop.f32.mrb[0].mxu0
        %v2913 = vadd.f32 0.0, %v2912
        %v2914 = vpop.f32.mrb[0].mxu0
        %2915 = vmatprep.mubr.bf16.mxu0 0
        %2916 = vmatmul.mubr.bf16.gmra.mrb[0].mxu0 %v964
        %v2917 = vpop.f32.mrb[0].mxu0
        %v2918 = vadd.f32 0.0, %v2917
        %v2919 = vpop.f32.mrb[0].mxu0
        %v2920 = vpop.f32.mrb[0].mxu0
        %v2921 = vadd.f32 0.0, %v2920
        %v2922 = vpop.f32.mrb[0].mxu0
        %2923 = vmatprep.mubr.bf16.mxu0 0
        %2924 = vmatmul.mubr.bf16.gmra.mrb[0].mxu0 %v965
        %v2925 = vpop.f32.mrb[0].mxu0
        %v2926 = vadd.f32 0.0, %v2925
        %v2927 = vpop.f32.mrb[0].mxu0
        %v2928 = vpop.f32.mrb[0].mxu0
        %v2929 = vadd.f32 0.0, %v2928
        %v2930 = vpop.f32.mrb[0].mxu0
        %2931 = vmatprep.mubr.bf16.mxu0 0
        %2932 = vmatmul.mubr.bf16.gmra.mrb[0].mxu0 %v966
        %v2933 = vpop.f32.mrb[0].mxu0
        %v2934 = vadd.f32 0.0, %v2933
        %v2935 = vpop.f32.mrb[0].mxu0
        %v2936 = vpop.f32.mrb[0].mxu0
        %v2937 = vadd.f32 0.0, %v2936
        %v2938 = vpop.f32.mrb[0].mxu0
        %2939 = vmatprep.mubr.bf16.mxu0 0
        %2940 = vmatmul.mubr.bf16.gmra.mrb[0].mxu0 %v967
        %v2941 = vpop.f32.mrb[0].mxu0
        %v2942 = vadd.f32 0.0, %v2941
        %v2943 = vpop.f32.mrb[0].mxu0
        %v2944 = vpop.f32.mrb[0].mxu0
        %v2945 = vadd.f32 0.0, %v2944
        %v2946 = vpop.f32.mrb[0].mxu0
        %2947 = vmatprep.mubr.bf16.mxu0 0
        %2948 = vmatmul.mubr.bf16.gmra.mrb[0].mxu0 %v968
        %v2949 = vpop.f32.mrb[0].mxu0
        %v2950 = vadd.f32 0.0, %v2949
        %v2951 = vpop.f32.mrb[0].mxu0
        %v2952 = vpop.f32.mrb[0].mxu0
        %v2953 = vadd.f32 0.0, %v2952
        %v2954 = vpop.f32.mrb[0].mxu0
        %2955 = vmatprep.mubr.bf16.mxu0 0
        %2956 = vmatmul.mubr.bf16.gmra.mrb[0].mxu0 %v969
        %v2957 = vpop.f32.mrb[0].mxu0
        %v2958 = vadd.f32 0.0, %v2957
        %v2959 = vpop.f32.mrb[0].mxu0
        %v2960 = vpop.f32.mrb[0].mxu0
        %v2961 = vadd.f32 0.0, %v2960
        %v2962 = vpop.f32.mrb[0].mxu0
        %2963 = vmatprep.mubr.bf16.mxu0 0
        %2964 = vmatmul.mubr.bf16.gmra.mrb[0].mxu0 %v970
        %v2965 = vpop.f32.mrb[0].mxu0
        %v2966 = vadd.f32 0.0, %v2965
        %v2967 = vpop.f32.mrb[0].mxu0
        %v2968 = vpop.f32.mrb[0].mxu0
        %v2969 = vadd.f32 0.0, %v2968
        %v2970 = vpop.f32.mrb[0].mxu0
        %2971 = vmatprep.mubr.bf16.mxu0 0
        %2972 = vmatmul.mubr.bf16.gmra.mrb[0].mxu0 %v971
        %v2973 = vpop.f32.mrb[0].mxu0
        %v2974 = vadd.f32 0.0, %v2973
        %v2975 = vpop.f32.mrb[0].mxu0
        %v2976 = vpop.f32.mrb[0].mxu0
        %v2977 = vadd.f32 0.0, %v2976
        %v2978 = vpop.f32.mrb[0].mxu0
        %2979 = vmatprep.mubr.bf16.mxu0 0
        %2980 = vmatmul.mubr.bf16.gmra.mrb[0].mxu0 %v972
        %v2981 = vpop.f32.mrb[0].mxu0
        %v2982 = vadd.f32 0.0, %v2981
        %v2983 = vpop.f32.mrb[0].mxu0
        %v2984 = vpop.f32.mrb[0].mxu0
        %v2985 = vadd.f32 0.0, %v2984
        %v2986 = vpop.f32.mrb[0].mxu0
        %2987 = vmatprep.mubr.bf16.mxu0 0
        %2988 = vmatmul.mubr.bf16.gmra.mrb[0].mxu0 %v973
        %v2989 = vpop.f32.mrb[0].mxu0
        %v2990 = vadd.f32 0.0, %v2989
        %v2991 = vpop.f32.mrb[0].mxu0
        %v2992 = vpop.f32.mrb[0].mxu0
        %v2993 = vadd.f32 0.0, %v2992
        %v2994 = vpop.f32.mrb[0].mxu0
        %2995 = vmatprep.mubr.bf16.mxu0 0
        %2996 = vmatmul.mubr.bf16.gmra.mrb[0].mxu0 %v974
        %v2997 = vpop.f32.mrb[0].mxu0
        %v2998 = vadd.f32 0.0, %v2997
        %v2999 = vpop.f32.mrb[0].mxu0
        %v3000 = vpop.f32.mrb[0].mxu0
        %v3001 = vadd.f32 0.0, %v3000
        %v3002 = vpop.f32.mrb[0].mxu0
        %3003 = vmatprep.mubr.bf16.mxu0 0
        %3004 = vmatmul.mubr.bf16.gmra.mrb[0].mxu0 %v975
        %v3005 = vpop.f32.mrb[0].mxu0
        %v3006 = vadd.f32 0.0, %v3005
        %v3007 = vpop.f32.mrb[0].mxu0
        %v3008 = vpop.f32.mrb[0].mxu0
        %v3009 = vadd.f32 0.0, %v3008
        %v3010 = vpop.f32.mrb[0].mxu0
        %3011 = vmatprep.mubr.bf16.mxu0 0
        %3012 = vmatmul.mubr.bf16.gmra.mrb[0].mxu0 %v976
        %v3013 = vpop.f32.mrb[0].mxu0
        %v3014 = vadd.f32 0.0, %v3013
        %v3015 = vpop.f32.mrb[0].mxu0
        %v3016 = vpop.f32.mrb[0].mxu0
        %v3017 = vadd.f32 0.0, %v3016
        %v3018 = vpop.f32.mrb[0].mxu0
        %3019 = vmatprep.mubr.bf16.mxu0 0
        %3020 = vmatmul.mubr.bf16.gmra.mrb[0].mxu0 %v977
        %v3021 = vpop.f32.mrb[0].mxu0
        %v3022 = vadd.f32 0.0, %v3021
        %v3023 = vpop.f32.mrb[0].mxu0
        %v3024 = vpop.f32.mrb[0].mxu0
        %v3025 = vadd.f32 0.0, %v3024
        %v3026 = vpop.f32.mrb[0].mxu0
        %3027 = vmatprep.mubr.bf16.mxu0 0
        %3028 = vmatmul.mubr.bf16.gmra.mrb[0].mxu0 %v978
        %v3029 = vpop.f32.mrb[0].mxu0
        %v3030 = vadd.f32 0.0, %v3029
        %v3031 = vpop.f32.mrb[0].mxu0
        %v3032 = vpop.f32.mrb[0].mxu0
        %v3033 = vadd.f32 0.0, %v3032
        %v3034 = vpop.f32.mrb[0].mxu0
        %3035 = vmatprep.mubr.bf16.mxu0 0
        %3036 = vmatmul.mubr.bf16.gmra.mrb[0].mxu0 %v979
        %v3037 = vpop.f32.mrb[0].mxu0
        %v3038 = vadd.f32 0.0, %v3037
        %v3039 = vpop.f32.mrb[0].mxu0
        %v3040 = vpop.f32.mrb[0].mxu0
        %v3041 = vadd.f32 0.0, %v3040
        %v3042 = vpop.f32.mrb[0].mxu0
        %3043 = vmatprep.mubr.bf16.mxu0 0
        %3044 = vmatmul.mubr.bf16.gmra.mrb[0].mxu0 %v980
        %v3045 = vpop.f32.mrb[0].mxu0
        %v3046 = vadd.f32 0.0, %v3045
        %v3047 = vpop.f32.mrb[0].mxu0
        %v3048 = vpop.f32.mrb[0].mxu0
        %v3049 = vadd.f32 0.0, %v3048
        %v3050 = vpop.f32.mrb[0].mxu0
        %3051 = vmatprep.mubr.bf16.mxu0 0
        %3052 = vmatmul.mubr.bf16.gmra.mrb[0].mxu0 %v981
        %v3053 = vpop.f32.mrb[0].mxu0
        %v3054 = vadd.f32 0.0, %v3053
        %v3055 = vpop.f32.mrb[0].mxu0
        %v3056 = vpop.f32.mrb[0].mxu0
        %v3057 = vadd.f32 0.0, %v3056
        %v3058 = vpop.f32.mrb[0].mxu0
        %3059 = vmatprep.mubr.bf16.mxu0 0
        %3060 = vmatmul.mubr.bf16.gmra.mrb[0].mxu0 %v982
        %v3061 = vpop.f32.mrb[0].mxu0
        %v3062 = vadd.f32 0.0, %v3061
        %v3063 = vpop.f32.mrb[0].mxu0
        %v3064 = vpop.f32.mrb[0].mxu0
        %v3065 = vadd.f32 0.0, %v3064
        %v3066 = vpop.f32.mrb[0].mxu0
        %3067 = vmatprep.mubr.bf16.mxu0 0
        %3068 = vmatmul.mubr.bf16.gmra.mrb[0].mxu0 %v983
        %v3069 = vpop.f32.mrb[0].mxu0
        %v3070 = vadd.f32 0.0, %v3069
        %v3071 = vpop.f32.mrb[0].mxu0
        %v3072 = vpop.f32.mrb[0].mxu0
        %v3073 = vadd.f32 0.0, %v3072
        %v3074 = vpop.f32.mrb[0].mxu0
        %3075 = vmatprep.mubr.bf16.mxu0 0
        %3076 = vmatmul.mubr.bf16.gmra.mrb[0].mxu0 %v984
        %v3077 = vpop.f32.mrb[0].mxu0
        %v3078 = vadd.f32 0.0, %v3077
        %v3079 = vpop.f32.mrb[0].mxu0
        %v3080 = vpop.f32.mrb[0].mxu0
        %v3081 = vadd.f32 0.0, %v3080
        %v3082 = vpop.f32.mrb[0].mxu0
        %3083 = vmatprep.mubr.bf16.mxu0 0
        %3084 = vmatmul.mubr.bf16.gmra.mrb[0].mxu0 %v985
        %v3085 = vpop.f32.mrb[0].mxu0
        %v3086 = vadd.f32 0.0, %v3085
        %v3087 = vpop.f32.mrb[0].mxu0
        %v3088 = vpop.f32.mrb[0].mxu0
        %v3089 = vadd.f32 0.0, %v3088
        %v3090 = vpop.f32.mrb[0].mxu0
        %3091 = vdwg.mxu0
        %v3108 = vunpack.c.l.b16 %v2787
        %v3109 = vunpack.c.l.b16 %v2788
        %v3110 = vunpack.c.l.b16 %v2789
        %v3111 = vunpack.c.l.b16 %v2790
        %v3112 = vunpack.c.l.b16 %v2791
        %v3113 = vunpack.c.l.b16 %v2792
        %v3114 = vunpack.c.l.b16 %v2793
        %v3115 = vunpack.c.l.b16 %v2794
        %v3116 = vunpack.c.l.b16 %v2795
        %v3117 = vunpack.c.l.b16 %v2796
        %v3118 = vunpack.c.l.b16 %v2797
        %v3119 = vunpack.c.l.b16 %v2798
        %v3120 = vunpack.c.l.b16 %v2799
        %v3121 = vunpack.c.l.b16 %v2800
        %v3122 = vunpack.c.l.b16 %v2801
        %v3123 = vunpack.c.l.b16 %v2802
        %v3124 = vpack.c.b16 %v3109, %v3108
        %v3125 = vpack.c.b16 %v3111, %v3110
        %v3126 = vpack.c.b16 %v3113, %v3112
        %v3127 = vpack.c.b16 %v3115, %v3114
        %v3128 = vpack.c.b16 %v3117, %v3116
        %v3129 = vpack.c.b16 %v3119, %v3118
        %v3130 = vpack.c.b16 %v3121, %v3120
        %v3131 = vpack.c.b16 %v3123, %v3122
        %3140 = vmatprep.subr.bf16.mxu0 0
        %3141 = vmatpush1.bf16.msra.mxu0 %v3124
        %3142 = vmatprep.subr.bf16.mxu0 0
        %3143 = vmatpush1.bf16.msra.mxu0 %v3125
        %3144 = vmatprep.subr.bf16.mxu0 0
        %3145 = vmatpush1.bf16.msra.mxu0 %v3126
        %3146 = vmatprep.subr.bf16.mxu0 0
        %3147 = vmatpush1.bf16.msra.mxu0 %v3127
        %3148 = vmatprep.subr.bf16.mxu0 0
        %3149 = vmatpush1.bf16.msra.mxu0 %v3128
        %3150 = vmatprep.subr.bf16.mxu0 0
        %3151 = vmatpush1.bf16.msra.mxu0 %v3129
        %3152 = vmatprep.subr.bf16.mxu0 0
        %3153 = vmatpush1.bf16.msra.mxu0 %v3130
        %3154 = vmatprep.subr.bf16.mxu0 0
        %3155 = vmatpush1.bf16.msra.mxu0 %v3131
        %3156 = vmatprep.subr.bf16.mxu0 0
        %3157 = vmatpush1.bf16.msra.mxu0 0
        %3158 = vmatprep.subr.bf16.mxu0 0
        %3159 = vmatpush1.bf16.msra.mxu0 0
        %3160 = vmatprep.subr.bf16.mxu0 0
        %3161 = vmatpush1.bf16.msra.mxu0 0
        %3162 = vmatprep.subr.bf16.mxu0 0
        %3163 = vmatpush1.bf16.msra.mxu0 0
        %3164 = vmatprep.subr.bf16.mxu0 0
        %3165 = vmatpush1.bf16.msra.mxu0 0
        %3166 = vmatprep.subr.bf16.mxu0 0
        %3167 = vmatpush1.bf16.msra.mxu0 0
        %3168 = vmatprep.subr.bf16.mxu0 0
        %3169 = vmatpush1.bf16.msra.mxu0 0
        %3170 = vmatprep.subr.bf16.mxu0 0
        %3171 = vmatpush1.bf16.msra.mxu0 0
        %3172 = vmatprep.mubr.bf16.mxu0 0
        %3173 = vmatmul.mubr.bf16.gmra.mrb[0].mxu0 %v2763
        %v3174 = vpop.f32.mrb[0].mxu0
        %v3175 = vadd.f32 %v2902, %v3174
        %v3176 = vpop.f32.mrb[0].mxu0
        %v3177 = vpop.f32.mrb[0].mxu0
        %v3178 = vadd.f32 %v2905, %v3177
        %v3179 = vpop.f32.mrb[0].mxu0
        %3180 = vmatprep.mubr.bf16.mxu0 0
        %3181 = vmatmul.mubr.bf16.gmra.mrb[0].mxu0 %v2764
        %v3182 = vpop.f32.mrb[0].mxu0
        %v3183 = vadd.f32 %v2910, %v3182
        %v3184 = vpop.f32.mrb[0].mxu0
        %v3185 = vpop.f32.mrb[0].mxu0
        %v3186 = vadd.f32 %v2913, %v3185
        %v3187 = vpop.f32.mrb[0].mxu0
        %3188 = vmatprep.mubr.bf16.mxu0 0
        %3189 = vmatmul.mubr.bf16.gmra.mrb[0].mxu0 %v2765
        %v3190 = vpop.f32.mrb[0].mxu0
        %v3191 = vadd.f32 %v2918, %v3190
        %v3192 = vpop.f32.mrb[0].mxu0
        %v3193 = vpop.f32.mrb[0].mxu0
        %v3194 = vadd.f32 %v2921, %v3193
        %v3195 = vpop.f32.mrb[0].mxu0
        %3196 = vmatprep.mubr.bf16.mxu0 0
        %3197 = vmatmul.mubr.bf16.gmra.mrb[0].mxu0 %v2766
        %v3198 = vpop.f32.mrb[0].mxu0
        %v3199 = vadd.f32 %v2926, %v3198
        %v3200 = vpop.f32.mrb[0].mxu0
        %v3201 = vpop.f32.mrb[0].mxu0
        %v3202 = vadd.f32 %v2929, %v3201
        %v3203 = vpop.f32.mrb[0].mxu0
        %3204 = vmatprep.mubr.bf16.mxu0 0
        %3205 = vmatmul.mubr.bf16.gmra.mrb[0].mxu0 %v2767
        %v3206 = vpop.f32.mrb[0].mxu0
        %v3207 = vadd.f32 %v2934, %v3206
        %v3208 = vpop.f32.mrb[0].mxu0
        %v3209 = vpop.f32.mrb[0].mxu0
        %v3210 = vadd.f32 %v2937, %v3209
        %v3211 = vpop.f32.mrb[0].mxu0
        %3212 = vmatprep.mubr.bf16.mxu0 0
        %3213 = vmatmul.mubr.bf16.gmra.mrb[0].mxu0 %v2768
        %v3214 = vpop.f32.mrb[0].mxu0
        %v3215 = vadd.f32 %v2942, %v3214
        %v3216 = vpop.f32.mrb[0].mxu0
        %v3217 = vpop.f32.mrb[0].mxu0
        %v3218 = vadd.f32 %v2945, %v3217
        %v3219 = vpop.f32.mrb[0].mxu0
        %3220 = vmatprep.mubr.bf16.mxu0 0
        %3221 = vmatmul.mubr.bf16.gmra.mrb[0].mxu0 %v2769
        %v3222 = vpop.f32.mrb[0].mxu0
        %v3223 = vadd.f32 %v2950, %v3222
        %v3224 = vpop.f32.mrb[0].mxu0
        %v3225 = vpop.f32.mrb[0].mxu0
        %v3226 = vadd.f32 %v2953, %v3225
        %v3227 = vpop.f32.mrb[0].mxu0
        %3228 = vmatprep.mubr.bf16.mxu0 0
        %3229 = vmatmul.mubr.bf16.gmra.mrb[0].mxu0 %v2770
        %v3230 = vpop.f32.mrb[0].mxu0
        %v3231 = vadd.f32 %v2958, %v3230
        %v3232 = vpop.f32.mrb[0].mxu0
        %v3233 = vpop.f32.mrb[0].mxu0
        %v3234 = vadd.f32 %v2961, %v3233
        %v3235 = vpop.f32.mrb[0].mxu0
        %3236 = vmatprep.mubr.bf16.mxu0 0
        %3237 = vmatmul.mubr.bf16.gmra.mrb[0].mxu0 %v2771
        %v3238 = vpop.f32.mrb[0].mxu0
        %v3239 = vadd.f32 %v2966, %v3238
        %v3240 = vpop.f32.mrb[0].mxu0
        %v3241 = vpop.f32.mrb[0].mxu0
        %v3242 = vadd.f32 %v2969, %v3241
        %v3243 = vpop.f32.mrb[0].mxu0
        %3244 = vmatprep.mubr.bf16.mxu0 0
        %3245 = vmatmul.mubr.bf16.gmra.mrb[0].mxu0 %v2772
        %v3246 = vpop.f32.mrb[0].mxu0
        %v3247 = vadd.f32 %v2974, %v3246
        %v3248 = vpop.f32.mrb[0].mxu0
        %v3249 = vpop.f32.mrb[0].mxu0
        %v3250 = vadd.f32 %v2977, %v3249
        %v3251 = vpop.f32.mrb[0].mxu0
        %3252 = vmatprep.mubr.bf16.mxu0 0
        %3253 = vmatmul.mubr.bf16.gmra.mrb[0].mxu0 %v2773
        %v3254 = vpop.f32.mrb[0].mxu0
        %v3255 = vadd.f32 %v2982, %v3254
        %v3256 = vpop.f32.mrb[0].mxu0
        %v3257 = vpop.f32.mrb[0].mxu0
        %v3258 = vadd.f32 %v2985, %v3257
        %v3259 = vpop.f32.mrb[0].mxu0
        %3260 = vmatprep.mubr.bf16.mxu0 0
        %3261 = vmatmul.mubr.bf16.gmra.mrb[0].mxu0 %v2774
        %v3262 = vpop.f32.mrb[0].mxu0
        %v3263 = vadd.f32 %v2990, %v3262
        %v3264 = vpop.f32.mrb[0].mxu0
        %v3265 = vpop.f32.mrb[0].mxu0
        %v3266 = vadd.f32 %v2993, %v3265
        %v3267 = vpop.f32.mrb[0].mxu0
        %3268 = vmatprep.mubr.bf16.mxu0 0
        %3269 = vmatmul.mubr.bf16.gmra.mrb[0].mxu0 %v2775
        %v3270 = vpop.f32.mrb[0].mxu0
        %v3271 = vadd.f32 %v2998, %v3270
        %v3272 = vpop.f32.mrb[0].mxu0
        %v3273 = vpop.f32.mrb[0].mxu0
        %v3274 = vadd.f32 %v3001, %v3273
        %v3275 = vpop.f32.mrb[0].mxu0
        %3276 = vmatprep.mubr.bf16.mxu0 0
        %3277 = vmatmul.mubr.bf16.gmra.mrb[0].mxu0 %v2776
        %v3278 = vpop.f32.mrb[0].mxu0
        %v3279 = vadd.f32 %v3006, %v3278
        %v3280 = vpop.f32.mrb[0].mxu0
        %v3281 = vpop.f32.mrb[0].mxu0
        %v3282 = vadd.f32 %v3009, %v3281
        %v3283 = vpop.f32.mrb[0].mxu0
        %3284 = vmatprep.mubr.bf16.mxu0 0
        %3285 = vmatmul.mubr.bf16.gmra.mrb[0].mxu0 %v2777
        %v3286 = vpop.f32.mrb[0].mxu0
        %v3287 = vadd.f32 %v3014, %v3286
        %v3288 = vpop.f32.mrb[0].mxu0
        %v3289 = vpop.f32.mrb[0].mxu0
        %v3290 = vadd.f32 %v3017, %v3289
        %v3291 = vpop.f32.mrb[0].mxu0
        %3292 = vmatprep.mubr.bf16.mxu0 0
        %3293 = vmatmul.mubr.bf16.gmra.mrb[0].mxu0 %v2778
        %v3294 = vpop.f32.mrb[0].mxu0
        %v3295 = vadd.f32 %v3022, %v3294
        %v3296 = vpop.f32.mrb[0].mxu0
        %v3297 = vpop.f32.mrb[0].mxu0
        %v3298 = vadd.f32 %v3025, %v3297
        %v3299 = vpop.f32.mrb[0].mxu0
        %3300 = vmatprep.mubr.bf16.mxu0 0
        %3301 = vmatmul.mubr.bf16.gmra.mrb[0].mxu0 %v2779
        %v3302 = vpop.f32.mrb[0].mxu0
        %v3303 = vadd.f32 %v3030, %v3302
        %v3304 = vpop.f32.mrb[0].mxu0
        %v3305 = vpop.f32.mrb[0].mxu0
        %v3306 = vadd.f32 %v3033, %v3305
        %v3307 = vpop.f32.mrb[0].mxu0
        %3308 = vmatprep.mubr.bf16.mxu0 0
        %3309 = vmatmul.mubr.bf16.gmra.mrb[0].mxu0 %v2780
        %v3310 = vpop.f32.mrb[0].mxu0
        %v3311 = vadd.f32 %v3038, %v3310
        %v3312 = vpop.f32.mrb[0].mxu0
        %v3313 = vpop.f32.mrb[0].mxu0
        %v3314 = vadd.f32 %v3041, %v3313
        %v3315 = vpop.f32.mrb[0].mxu0
        %3316 = vmatprep.mubr.bf16.mxu0 0
        %3317 = vmatmul.mubr.bf16.gmra.mrb[0].mxu0 %v2781
        %v3318 = vpop.f32.mrb[0].mxu0
        %v3319 = vadd.f32 %v3046, %v3318
        %v3320 = vpop.f32.mrb[0].mxu0
        %v3321 = vpop.f32.mrb[0].mxu0
        %v3322 = vadd.f32 %v3049, %v3321
        %v3323 = vpop.f32.mrb[0].mxu0
        %3324 = vmatprep.mubr.bf16.mxu0 0
        %3325 = vmatmul.mubr.bf16.gmra.mrb[0].mxu0 %v2782
        %v3326 = vpop.f32.mrb[0].mxu0
        %v3327 = vadd.f32 %v3054, %v3326
        %v3328 = vpop.f32.mrb[0].mxu0
        %v3329 = vpop.f32.mrb[0].mxu0
        %v3330 = vadd.f32 %v3057, %v3329
        %v3331 = vpop.f32.mrb[0].mxu0
        %3332 = vmatprep.mubr.bf16.mxu0 0
        %3333 = vmatmul.mubr.bf16.gmra.mrb[0].mxu0 %v2783
        %v3334 = vpop.f32.mrb[0].mxu0
        %v3335 = vadd.f32 %v3062, %v3334
        %v3336 = vpop.f32.mrb[0].mxu0
        %v3337 = vpop.f32.mrb[0].mxu0
        %v3338 = vadd.f32 %v3065, %v3337
        %v3339 = vpop.f32.mrb[0].mxu0
        %3340 = vmatprep.mubr.bf16.mxu0 0
        %3341 = vmatmul.mubr.bf16.gmra.mrb[0].mxu0 %v2784
        %v3342 = vpop.f32.mrb[0].mxu0
        %v3343 = vadd.f32 %v3070, %v3342
        %v3344 = vpop.f32.mrb[0].mxu0
        %v3345 = vpop.f32.mrb[0].mxu0
        %v3346 = vadd.f32 %v3073, %v3345
        %v3347 = vpop.f32.mrb[0].mxu0
        %3348 = vmatprep.mubr.bf16.mxu0 0
        %3349 = vmatmul.mubr.bf16.gmra.mrb[0].mxu0 %v2785
        %v3350 = vpop.f32.mrb[0].mxu0
        %v3351 = vadd.f32 %v3078, %v3350
        %v3352 = vpop.f32.mrb[0].mxu0
        %v3353 = vpop.f32.mrb[0].mxu0
        %v3354 = vadd.f32 %v3081, %v3353
        %v3355 = vpop.f32.mrb[0].mxu0
        %3356 = vmatprep.mubr.bf16.mxu0 0
        %3357 = vmatmul.mubr.bf16.gmra.mrb[0].mxu0 %v2786
        %v3358 = vpop.f32.mrb[0].mxu0
        %v3359 = vadd.f32 %v3086, %v3358
        %v3360 = vpop.f32.mrb[0].mxu0
        %v3361 = vpop.f32.mrb[0].mxu0
        %v3362 = vadd.f32 %v3089, %v3361
        %v3363 = vpop.f32.mrb[0].mxu0
        %3364 = vdwg.mxu0
        %v3365 = vlaneseq
        %v3366 = vshrl.u32 %v3365, 7
        %v3367 = vsub.s32 0, %v3366
        %v3368 = vrot.slane %v795, %v3367
        %v3369 = vadd.f32 %v3175, %v3368
        %v3370 = vadd.f32 %v3178, %v3368
        %v3371 = vadd.f32 %v3183, %v3368
        %v3372 = vadd.f32 %v3186, %v3368
        %v3373 = vadd.f32 %v3191, %v3368
        %v3374 = vadd.f32 %v3194, %v3368
        %v3375 = vadd.f32 %v3199, %v3368
        %v3376 = vadd.f32 %v3202, %v3368
        %v3377 = vadd.f32 %v3207, %v3368
        %v3378 = vadd.f32 %v3210, %v3368
        %v3379 = vadd.f32 %v3215, %v3368
        %v3380 = vadd.f32 %v3218, %v3368
        %v3381 = vadd.f32 %v3223, %v3368
        %v3382 = vadd.f32 %v3226, %v3368
        %v3383 = vadd.f32 %v3231, %v3368
        %v3384 = vadd.f32 %v3234, %v3368
        %v3385 = vadd.f32 %v3239, %v3368
        %v3386 = vadd.f32 %v3242, %v3368
        %v3387 = vadd.f32 %v3247, %v3368
        %v3388 = vadd.f32 %v3250, %v3368
        %v3389 = vadd.f32 %v3255, %v3368
        %v3390 = vadd.f32 %v3258, %v3368
        %v3391 = vadd.f32 %v3263, %v3368
        %v3392 = vadd.f32 %v3266, %v3368
        %v3393 = vadd.f32 %v3271, %v3368
        %v3394 = vadd.f32 %v3274, %v3368
        %v3395 = vadd.f32 %v3279, %v3368
        %v3396 = vadd.f32 %v3282, %v3368
        %v3397 = vadd.f32 %v3287, %v3368
        %v3398 = vadd.f32 %v3290, %v3368
        %v3399 = vadd.f32 %v3295, %v3368
        %v3400 = vadd.f32 %v3298, %v3368
        %v3401 = vadd.f32 %v3303, %v3368
        %v3402 = vadd.f32 %v3306, %v3368
        %v3403 = vadd.f32 %v3311, %v3368
        %v3404 = vadd.f32 %v3314, %v3368
        %v3405 = vadd.f32 %v3319, %v3368
        %v3406 = vadd.f32 %v3322, %v3368
        %v3407 = vadd.f32 %v3327, %v3368
        %v3408 = vadd.f32 %v3330, %v3368
        %v3409 = vadd.f32 %v3335, %v3368
        %v3410 = vadd.f32 %v3338, %v3368
        %v3411 = vadd.f32 %v3343, %v3368
        %v3412 = vadd.f32 %v3346, %v3368
        %v3413 = vadd.f32 %v3351, %v3368
        %v3414 = vadd.f32 %v3354, %v3368
        %v3415 = vadd.f32 %v3359, %v3368
        %v3416 = vadd.f32 %v3362, %v3368
        %v3417 = vadd.f32 %v3369, %v3385
        %v3418 = vadd.f32 %v3417, %v3401
        %v3419 = vadd.f32 %v3370, %v3386
        %v3420 = vadd.f32 %v3419, %v3402
        %v3421 = vadd.f32 %v3371, %v3387
        %v3422 = vadd.f32 %v3421, %v3403
        %v3423 = vadd.f32 %v3372, %v3388
        %v3424 = vadd.f32 %v3423, %v3404
        %v3425 = vadd.f32 %v3373, %v3389
        %v3426 = vadd.f32 %v3425, %v3405
        %v3427 = vadd.f32 %v3374, %v3390
        %v3428 = vadd.f32 %v3427, %v3406
        %v3429 = vadd.f32 %v3375, %v3391
        %v3430 = vadd.f32 %v3429, %v3407
        %v3431 = vadd.f32 %v3376, %v3392
        %v3432 = vadd.f32 %v3431, %v3408
        %v3433 = vadd.f32 %v3377, %v3393
        %v3434 = vadd.f32 %v3433, %v3409
        %v3435 = vadd.f32 %v3378, %v3394
        %v3436 = vadd.f32 %v3435, %v3410
        %v3437 = vadd.f32 %v3379, %v3395
        %v3438 = vadd.f32 %v3437, %v3411
        %v3439 = vadd.f32 %v3380, %v3396
        %v3440 = vadd.f32 %v3439, %v3412
        %v3441 = vadd.f32 %v3381, %v3397
        %v3442 = vadd.f32 %v3441, %v3413
        %v3443 = vadd.f32 %v3382, %v3398
        %v3444 = vadd.f32 %v3443, %v3414
        %v3445 = vadd.f32 %v3383, %v3399
        %v3446 = vadd.f32 %v3445, %v3415
        %v3447 = vadd.f32 %v3384, %v3400
        %v3448 = vadd.f32 %v3447, %v3416
        %v3449 = vmul.f32 %v3418, 0.33333334
        %v3450 = vmul.f32 %v3420, 0.33333334
        %v3451 = vmul.f32 %v3422, 0.33333334
        %v3452 = vmul.f32 %v3424, 0.33333334
        %v3453 = vmul.f32 %v3426, 0.33333334
        %v3454 = vmul.f32 %v3428, 0.33333334
        %v3455 = vmul.f32 %v3430, 0.33333334
        %v3456 = vmul.f32 %v3432, 0.33333334
        %v3457 = vmul.f32 %v3434, 0.33333334
        %v3458 = vmul.f32 %v3436, 0.33333334
        %v3459 = vmul.f32 %v3438, 0.33333334
        %v3460 = vmul.f32 %v3440, 0.33333334
        %v3461 = vmul.f32 %v3442, 0.33333334
        %v3462 = vmul.f32 %v3444, 0.33333334
        %v3463 = vmul.f32 %v3446, 0.33333334
        %v3464 = vmul.f32 %v3448, 0.33333334
        %v3465 = vmax.f32 %v3449, 0.0
        %v3466 = vmax.f32 %v3450, 0.0
        %v3467 = vmax.f32 %v3451, 0.0
        %v3468 = vmax.f32 %v3452, 0.0
        %v3469 = vmax.f32 %v3453, 0.0
        %v3470 = vmax.f32 %v3454, 0.0
        %v3471 = vmax.f32 %v3455, 0.0
        %v3472 = vmax.f32 %v3456, 0.0
        %v3473 = vmax.f32 %v3457, 0.0
        %v3474 = vmax.f32 %v3458, 0.0
        %v3475 = vmax.f32 %v3459, 0.0
        %v3476 = vmax.f32 %v3460, 0.0
        %v3477 = vmax.f32 %v3461, 0.0
        %v3478 = vmax.f32 %v3462, 0.0
        %v3479 = vmax.f32 %v3463, 0.0
        %v3480 = vmax.f32 %v3464, 0.0
        %v3481 = vpack.c.bf16 %v3466, %v3465
        %v3482 = vpack.c.bf16 %v3468, %v3467
        %v3483 = vpack.c.bf16 %v3470, %v3469
        %v3484 = vpack.c.bf16 %v3472, %v3471
        %v3485 = vpack.c.bf16 %v3474, %v3473
        %v3486 = vpack.c.bf16 %v3476, %v3475
        %v3487 = vpack.c.bf16 %v3478, %v3477
        %v3488 = vpack.c.bf16 %v3480, %v3479
        %v3489 = vld [vmem:[%s687] sm:$0xf]
        %v3490 = vld [vmem:[%s687 + $0x4] sm:$0xf]
        %v3491 = vld [vmem:[%s687 + $0x8] sm:$0xf]
        %v3492 = vld [vmem:[%s687 + $0xc] sm:$0xf]
        %v3493 = vld [vmem:[%s687 + $0x10] sm:$0xf]
        %v3494 = vld [vmem:[%s687 + $0x14] sm:$0xf]
        %v3495 = vld [vmem:[%s687 + $0x18] sm:$0xf]
        %v3496 = vld [vmem:[%s687 + $0x1c] sm:$0xf]
        %v3497 = vld [vmem:[%s687 + $0x20] sm:$0xf]
        %v3498 = vld [vmem:[%s687 + $0x24] sm:$0xf]
        %v3499 = vld [vmem:[%s687 + $0x28] sm:$0xf]
        %v3500 = vld [vmem:[%s687 + $0x2c] sm:$0xf]
        %v3501 = vld [vmem:[%s687 + $0x30] sm:$0xf]
        %v3502 = vld [vmem:[%s687 + $0x34] sm:$0xf]
        %v3503 = vld [vmem:[%s687 + $0x38] sm:$0xf]
        %v3504 = vld [vmem:[%s687 + $0x3c] sm:$0xf]
        %v3505 = vlaneseq
        %v3506 = vshrl.u32 %v3505, 7
        %v3507 = vsub.s32 0, %v3506
        %v3508 = vrot.slane %v796, %v3507
        %v3525 = vunpack.c.l.b16 %v3489
        %v3526 = vunpack.c.l.b16 %v3490
        %v3527 = vunpack.c.l.b16 %v3491
        %v3528 = vunpack.c.l.b16 %v3492
        %v3529 = vunpack.c.l.b16 %v3493
        %v3530 = vunpack.c.l.b16 %v3494
        %v3531 = vunpack.c.l.b16 %v3495
        %v3532 = vunpack.c.l.b16 %v3496
        %v3533 = vunpack.c.l.b16 %v3497
        %v3534 = vunpack.c.l.b16 %v3498
        %v3535 = vunpack.c.l.b16 %v3499
        %v3536 = vunpack.c.l.b16 %v3500
        %v3537 = vunpack.c.l.b16 %v3501
        %v3538 = vunpack.c.l.b16 %v3502
        %v3539 = vunpack.c.l.b16 %v3503
        %v3540 = vunpack.c.l.b16 %v3504
        %v3541 = vpack.c.b16 %v3526, %v3525
        %v3542 = vpack.c.b16 %v3528, %v3527
        %v3543 = vpack.c.b16 %v3530, %v3529
        %v3544 = vpack.c.b16 %v3532, %v3531
        %v3545 = vpack.c.b16 %v3534, %v3533
        %v3546 = vpack.c.b16 %v3536, %v3535
        %v3547 = vpack.c.b16 %v3538, %v3537
        %v3548 = vpack.c.b16 %v3540, %v3539
        %3557 = vmatprep.subr.bf16.mxu0 0
        %3558 = vmatpush1.bf16.msra.mxu0 %v3541
        %3559 = vmatprep.subr.bf16.mxu0 0
        %3560 = vmatpush1.bf16.msra.mxu0 %v3542
        %3561 = vmatprep.subr.bf16.mxu0 0
        %3562 = vmatpush1.bf16.msra.mxu0 %v3543
        %3563 = vmatprep.subr.bf16.mxu0 0
        %3564 = vmatpush1.bf16.msra.mxu0 %v3544
        %3565 = vmatprep.subr.bf16.mxu0 0
        %3566 = vmatpush1.bf16.msra.mxu0 %v3545
        %3567 = vmatprep.subr.bf16.mxu0 0
        %3568 = vmatpush1.bf16.msra.mxu0 %v3546
        %3569 = vmatprep.subr.bf16.mxu0 0
        %3570 = vmatpush1.bf16.msra.mxu0 %v3547
        %3571 = vmatprep.subr.bf16.mxu0 0
        %3572 = vmatpush1.bf16.msra.mxu0 %v3548
        %3573 = vmatprep.subr.bf16.mxu0 0
        %3574 = vmatpush1.bf16.msra.mxu0 0
        %3575 = vmatprep.subr.bf16.mxu0 0
        %3576 = vmatpush1.bf16.msra.mxu0 0
        %3577 = vmatprep.subr.bf16.mxu0 0
        %3578 = vmatpush1.bf16.msra.mxu0 0
        %3579 = vmatprep.subr.bf16.mxu0 0
        %3580 = vmatpush1.bf16.msra.mxu0 0
        %3581 = vmatprep.subr.bf16.mxu0 0
        %3582 = vmatpush1.bf16.msra.mxu0 0
        %3583 = vmatprep.subr.bf16.mxu0 0
        %3584 = vmatpush1.bf16.msra.mxu0 0
        %3585 = vmatprep.subr.bf16.mxu0 0
        %3586 = vmatpush1.bf16.msra.mxu0 0
        %3587 = vmatprep.subr.bf16.mxu0 0
        %3588 = vmatpush1.bf16.msra.mxu0 0
        %3589 = vmatprep.mubr.bf16.mxu0 0
        %3590 = vmatmul.mubr.bf16.gmra.mrb[0].mxu0 %v3481
        %v3591 = vpop.f32.mrb[0].mxu0
        %v3592 = vadd.f32 %v3508, %v3591
        %v3593 = vpop.f32.mrb[0].mxu0
        %v3594 = vpop.f32.mrb[0].mxu0
        %v3595 = vadd.f32 %v3508, %v3594
        %v3596 = vpop.f32.mrb[0].mxu0
        %3597 = vmatprep.mubr.bf16.mxu0 0
        %3598 = vmatmul.mubr.bf16.gmra.mrb[0].mxu0 %v3482
        %v3599 = vpop.f32.mrb[0].mxu0
        %v3600 = vadd.f32 %v3508, %v3599
        %v3601 = vpop.f32.mrb[0].mxu0
        %v3602 = vpop.f32.mrb[0].mxu0
        %v3603 = vadd.f32 %v3508, %v3602
        %v3604 = vpop.f32.mrb[0].mxu0
        %3605 = vmatprep.mubr.bf16.mxu0 0
        %3606 = vmatmul.mubr.bf16.gmra.mrb[0].mxu0 %v3483
        %v3607 = vpop.f32.mrb[0].mxu0
        %v3608 = vadd.f32 %v3508, %v3607
        %v3609 = vpop.f32.mrb[0].mxu0
        %v3610 = vpop.f32.mrb[0].mxu0
        %v3611 = vadd.f32 %v3508, %v3610
        %v3612 = vpop.f32.mrb[0].mxu0
        %3613 = vmatprep.mubr.bf16.mxu0 0
        %3614 = vmatmul.mubr.bf16.gmra.mrb[0].mxu0 %v3484
        %v3615 = vpop.f32.mrb[0].mxu0
        %v3616 = vadd.f32 %v3508, %v3615
        %v3617 = vpop.f32.mrb[0].mxu0
        %v3618 = vpop.f32.mrb[0].mxu0
        %v3619 = vadd.f32 %v3508, %v3618
        %v3620 = vpop.f32.mrb[0].mxu0
        %3621 = vmatprep.mubr.bf16.mxu0 0
        %3622 = vmatmul.mubr.bf16.gmra.mrb[0].mxu0 %v3485
        %v3623 = vpop.f32.mrb[0].mxu0
        %v3624 = vadd.f32 %v3508, %v3623
        %v3625 = vpop.f32.mrb[0].mxu0
        %v3626 = vpop.f32.mrb[0].mxu0
        %v3627 = vadd.f32 %v3508, %v3626
        %v3628 = vpop.f32.mrb[0].mxu0
        %3629 = vmatprep.mubr.bf16.mxu0 0
        %3630 = vmatmul.mubr.bf16.gmra.mrb[0].mxu0 %v3486
        %v3631 = vpop.f32.mrb[0].mxu0
        %v3632 = vadd.f32 %v3508, %v3631
        %v3633 = vpop.f32.mrb[0].mxu0
        %v3634 = vpop.f32.mrb[0].mxu0
        %v3635 = vadd.f32 %v3508, %v3634
        %v3636 = vpop.f32.mrb[0].mxu0
        %3637 = vmatprep.mubr.bf16.mxu0 0
        %3638 = vmatmul.mubr.bf16.gmra.mrb[0].mxu0 %v3487
        %v3639 = vpop.f32.mrb[0].mxu0
        %v3640 = vadd.f32 %v3508, %v3639
        %v3641 = vpop.f32.mrb[0].mxu0
        %v3642 = vpop.f32.mrb[0].mxu0
        %v3643 = vadd.f32 %v3508, %v3642
        %v3644 = vpop.f32.mrb[0].mxu0
        %3645 = vmatprep.mubr.bf16.mxu0 0
        %3646 = vmatmul.mubr.bf16.gmra.mrb[0].mxu0 %v3488
        %v3647 = vpop.f32.mrb[0].mxu0
        %v3648 = vadd.f32 %v3508, %v3647
        %v3649 = vpop.f32.mrb[0].mxu0
        %v3650 = vpop.f32.mrb[0].mxu0
        %v3651 = vadd.f32 %v3508, %v3650
        %v3652 = vpop.f32.mrb[0].mxu0
        %3653 = vdwg.mxu0
        %v3654 = vmax.f32 %v3592, 0.0
        %v3655 = vmax.f32 %v3595, 0.0
        %v3656 = vmax.f32 %v3600, 0.0
        %v3657 = vmax.f32 %v3603, 0.0
        %v3658 = vmax.f32 %v3608, 0.0
        %v3659 = vmax.f32 %v3611, 0.0
        %v3660 = vmax.f32 %v3616, 0.0
        %v3661 = vmax.f32 %v3619, 0.0
        %v3662 = vmax.f32 %v3624, 0.0
        %v3663 = vmax.f32 %v3627, 0.0
        %v3664 = vmax.f32 %v3632, 0.0
        %v3665 = vmax.f32 %v3635, 0.0
        %v3666 = vmax.f32 %v3640, 0.0
        %v3667 = vmax.f32 %v3643, 0.0
        %v3668 = vmax.f32 %v3648, 0.0
        %v3669 = vmax.f32 %v3651, 0.0
        %v3670 = vpack.c.bf16 %v3655, %v3654
        %v3671 = vpack.c.bf16 %v3657, %v3656
        %v3672 = vpack.c.bf16 %v3659, %v3658
        %v3673 = vpack.c.bf16 %v3661, %v3660
        %v3674 = vpack.c.bf16 %v3663, %v3662
        %v3675 = vpack.c.bf16 %v3665, %v3664
        %v3676 = vpack.c.bf16 %v3667, %v3666
        %v3677 = vpack.c.bf16 %v3669, %v3668
        %v3678 = vld [vmem:[%s696] sm:$0xf]
        %v3679 = vld [vmem:[%s696 + $0x4] sm:$0xf]
        %v3680 = vld [vmem:[%s696 + $0x8] sm:$0xf]
        %v3681 = vld [vmem:[%s696 + $0xc] sm:$0xf]
        %v3682 = vld [vmem:[%s696 + $0x10] sm:$0xf]
        %v3683 = vld [vmem:[%s696 + $0x14] sm:$0xf]
        %v3684 = vld [vmem:[%s696 + $0x18] sm:$0xf]
        %v3685 = vld [vmem:[%s696 + $0x1c] sm:$0xf]
        %v3686 = vld [vmem:[%s696 + $0x20] sm:$0xf]
        %v3687 = vld [vmem:[%s696 + $0x24] sm:$0xf]
        %v3688 = vld [vmem:[%s696 + $0x28] sm:$0xf]
        %v3689 = vld [vmem:[%s696 + $0x2c] sm:$0xf]
        %v3690 = vld [vmem:[%s696 + $0x30] sm:$0xf]
        %v3691 = vld [vmem:[%s696 + $0x34] sm:$0xf]
        %v3692 = vld [vmem:[%s696 + $0x38] sm:$0xf]
        %v3693 = vld [vmem:[%s696 + $0x3c] sm:$0xf]
        %v3694 = vlaneseq
        %v3695 = vshrl.u32 %v3694, 7
        %v3696 = vsub.s32 0, %v3695
        %v3697 = vrot.slane %v797, %v3696
        %v3714 = vunpack.c.l.b16 %v3678
        %v3715 = vunpack.c.l.b16 %v3679
        %v3716 = vunpack.c.l.b16 %v3680
        %v3717 = vunpack.c.l.b16 %v3681
        %v3718 = vunpack.c.l.b16 %v3682
        %v3719 = vunpack.c.l.b16 %v3683
        %v3720 = vunpack.c.l.b16 %v3684
        %v3721 = vunpack.c.l.b16 %v3685
        %v3722 = vunpack.c.l.b16 %v3686
        %v3723 = vunpack.c.l.b16 %v3687
        %v3724 = vunpack.c.l.b16 %v3688
        %v3725 = vunpack.c.l.b16 %v3689
        %v3726 = vunpack.c.l.b16 %v3690
        %v3727 = vunpack.c.l.b16 %v3691
        %v3728 = vunpack.c.l.b16 %v3692
        %v3729 = vunpack.c.l.b16 %v3693
        %v3730 = vpack.c.b16 %v3715, %v3714
        %v3731 = vpack.c.b16 %v3717, %v3716
        %v3732 = vpack.c.b16 %v3719, %v3718
        %v3733 = vpack.c.b16 %v3721, %v3720
        %v3734 = vpack.c.b16 %v3723, %v3722
        %v3735 = vpack.c.b16 %v3725, %v3724
        %v3736 = vpack.c.b16 %v3727, %v3726
        %v3737 = vpack.c.b16 %v3729, %v3728
        %3746 = vmatprep.subr.bf16.mxu0 0
        %3747 = vmatpush1.bf16.msra.mxu0 %v3730
        %3748 = vmatprep.subr.bf16.mxu0 0
        %3749 = vmatpush1.bf16.msra.mxu0 %v3731
        %3750 = vmatprep.subr.bf16.mxu0 0
        %3751 = vmatpush1.bf16.msra.mxu0 %v3732
        %3752 = vmatprep.subr.bf16.mxu0 0
        %3753 = vmatpush1.bf16.msra.mxu0 %v3733
        %3754 = vmatprep.subr.bf16.mxu0 0
        %3755 = vmatpush1.bf16.msra.mxu0 %v3734
        %3756 = vmatprep.subr.bf16.mxu0 0
        %3757 = vmatpush1.bf16.msra.mxu0 %v3735
        %3758 = vmatprep.subr.bf16.mxu0 0
        %3759 = vmatpush1.bf16.msra.mxu0 %v3736
        %3760 = vmatprep.subr.bf16.mxu0 0
        %3761 = vmatpush1.bf16.msra.mxu0 %v3737
        %3762 = vmatprep.subr.bf16.mxu0 0
        %3763 = vmatpush1.bf16.msra.mxu0 0
        %3764 = vmatprep.subr.bf16.mxu0 0
        %3765 = vmatpush1.bf16.msra.mxu0 0
        %3766 = vmatprep.subr.bf16.mxu0 0
        %3767 = vmatpush1.bf16.msra.mxu0 0
        %3768 = vmatprep.subr.bf16.mxu0 0
        %3769 = vmatpush1.bf16.msra.mxu0 0
        %3770 = vmatprep.subr.bf16.mxu0 0
        %3771 = vmatpush1.bf16.msra.mxu0 0
        %3772 = vmatprep.subr.bf16.mxu0 0
        %3773 = vmatpush1.bf16.msra.mxu0 0
        %3774 = vmatprep.subr.bf16.mxu0 0
        %3775 = vmatpush1.bf16.msra.mxu0 0
        %3776 = vmatprep.subr.bf16.mxu0 0
        %3777 = vmatpush1.bf16.msra.mxu0 0
        %3778 = vmatprep.mubr.bf16.mxu0 0
        %3779 = vmatmul.mubr.bf16.gmra.mrb[0].mxu0 %v3670
        %v3780 = vpop.f32.mrb[0].mxu0
        %v3781 = vadd.f32 %v3697, %v3780
        %v3782 = vpop.f32.mrb[0].mxu0
        %v3783 = vpop.f32.mrb[0].mxu0
        %v3784 = vadd.f32 %v3697, %v3783
        %v3785 = vpop.f32.mrb[0].mxu0
        %3786 = vmatprep.mubr.bf16.mxu0 0
        %3787 = vmatmul.mubr.bf16.gmra.mrb[0].mxu0 %v3671
        %v3788 = vpop.f32.mrb[0].mxu0
        %v3789 = vadd.f32 %v3697, %v3788
        %v3790 = vpop.f32.mrb[0].mxu0
        %v3791 = vpop.f32.mrb[0].mxu0
        %v3792 = vadd.f32 %v3697, %v3791
        %v3793 = vpop.f32.mrb[0].mxu0
        %3794 = vmatprep.mubr.bf16.mxu0 0
        %3795 = vmatmul.mubr.bf16.gmra.mrb[0].mxu0 %v3672
        %v3796 = vpop.f32.mrb[0].mxu0
        %v3797 = vadd.f32 %v3697, %v3796
        %v3798 = vpop.f32.mrb[0].mxu0
        %v3799 = vpop.f32.mrb[0].mxu0
        %v3800 = vadd.f32 %v3697, %v3799
        %v3801 = vpop.f32.mrb[0].mxu0
        %3802 = vmatprep.mubr.bf16.mxu0 0
        %3803 = vmatmul.mubr.bf16.gmra.mrb[0].mxu0 %v3673
        %v3804 = vpop.f32.mrb[0].mxu0
        %v3805 = vadd.f32 %v3697, %v3804
        %v3806 = vpop.f32.mrb[0].mxu0
        %v3807 = vpop.f32.mrb[0].mxu0
        %v3808 = vadd.f32 %v3697, %v3807
        %v3809 = vpop.f32.mrb[0].mxu0
        %3810 = vmatprep.mubr.bf16.mxu0 0
        %3811 = vmatmul.mubr.bf16.gmra.mrb[0].mxu0 %v3674
        %v3812 = vpop.f32.mrb[0].mxu0
        %v3813 = vadd.f32 %v3697, %v3812
        %v3814 = vpop.f32.mrb[0].mxu0
        %v3815 = vpop.f32.mrb[0].mxu0
        %v3816 = vadd.f32 %v3697, %v3815
        %v3817 = vpop.f32.mrb[0].mxu0
        %3818 = vmatprep.mubr.bf16.mxu0 0
        %3819 = vmatmul.mubr.bf16.gmra.mrb[0].mxu0 %v3675
        %v3820 = vpop.f32.mrb[0].mxu0
        %v3821 = vadd.f32 %v3697, %v3820
        %v3822 = vpop.f32.mrb[0].mxu0
        %v3823 = vpop.f32.mrb[0].mxu0
        %v3824 = vadd.f32 %v3697, %v3823
        %v3825 = vpop.f32.mrb[0].mxu0
        %3826 = vmatprep.mubr.bf16.mxu0 0
        %3827 = vmatmul.mubr.bf16.gmra.mrb[0].mxu0 %v3676
        %v3828 = vpop.f32.mrb[0].mxu0
        %v3829 = vadd.f32 %v3697, %v3828
        %v3830 = vpop.f32.mrb[0].mxu0
        %v3831 = vpop.f32.mrb[0].mxu0
        %v3832 = vadd.f32 %v3697, %v3831
        %v3833 = vpop.f32.mrb[0].mxu0
        %3834 = vmatprep.mubr.bf16.mxu0 0
        %3835 = vmatmul.mubr.bf16.gmra.mrb[0].mxu0 %v3677
        %v3836 = vpop.f32.mrb[0].mxu0
        %v3837 = vadd.f32 %v3697, %v3836
        %v3838 = vpop.f32.mrb[0].mxu0
        %v3839 = vpop.f32.mrb[0].mxu0
        %v3840 = vadd.f32 %v3697, %v3839
        %v3841 = vpop.f32.mrb[0].mxu0
        %3842 = vdwg.mxu0
        %v3843 = vadd.f32 %v3449, -1.0
        %v3844 = vadd.f32 %v3450, -1.0
        %v3845 = vadd.f32 %v3451, -1.0
        %v3846 = vadd.f32 %v3452, -1.0
        %v3847 = vadd.f32 %v3453, -1.0
        %v3848 = vadd.f32 %v3454, -1.0
        %v3849 = vadd.f32 %v3455, -1.0
        %v3850 = vadd.f32 %v3456, -1.0
        %v3851 = vadd.f32 %v3457, -1.0
        %v3852 = vadd.f32 %v3458, -1.0
        %v3853 = vadd.f32 %v3459, -1.0
        %v3854 = vadd.f32 %v3460, -1.0
        %v3855 = vadd.f32 %v3461, -1.0
        %v3856 = vadd.f32 %v3462, -1.0
        %v3857 = vadd.f32 %v3463, -1.0
        %v3858 = vadd.f32 %v3464, -1.0
        %v3859 = vmax.f32 %v3843, 0.0
        %v3860 = vmax.f32 %v3844, 0.0
        %v3861 = vmax.f32 %v3845, 0.0
        %v3862 = vmax.f32 %v3846, 0.0
        %v3863 = vmax.f32 %v3847, 0.0
        %v3864 = vmax.f32 %v3848, 0.0
        %v3865 = vmax.f32 %v3849, 0.0
        %v3866 = vmax.f32 %v3850, 0.0
        %v3867 = vmax.f32 %v3851, 0.0
        %v3868 = vmax.f32 %v3852, 0.0
        %v3869 = vmax.f32 %v3853, 0.0
        %v3870 = vmax.f32 %v3854, 0.0
        %v3871 = vmax.f32 %v3855, 0.0
        %v3872 = vmax.f32 %v3856, 0.0
        %v3873 = vmax.f32 %v3857, 0.0
        %v3874 = vmax.f32 %v3858, 0.0
        %v3875 = vand.u32 2147483647, %v3843
        %v3876 = vand.u32 2147483647, %v3844
        %v3877 = vand.u32 2147483647, %v3845
        %v3878 = vand.u32 2147483647, %v3846
        %v3879 = vand.u32 2147483647, %v3847
        %v3880 = vand.u32 2147483647, %v3848
        %v3881 = vand.u32 2147483647, %v3849
        %v3882 = vand.u32 2147483647, %v3850
        %v3883 = vand.u32 2147483647, %v3851
        %v3884 = vand.u32 2147483647, %v3852
        %v3885 = vand.u32 2147483647, %v3853
        %v3886 = vand.u32 2147483647, %v3854
        %v3887 = vand.u32 2147483647, %v3855
        %v3888 = vand.u32 2147483647, %v3856
        %v3889 = vand.u32 2147483647, %v3857
        %v3890 = vand.u32 2147483647, %v3858
        %v3891 = vsub.f32 0.0, %v3875
        %v3892 = vsub.f32 0.0, %v3876
        %v3893 = vsub.f32 0.0, %v3877
        %v3894 = vsub.f32 0.0, %v3878
        %v3895 = vsub.f32 0.0, %v3879
        %v3896 = vsub.f32 0.0, %v3880
        %v3897 = vsub.f32 0.0, %v3881
        %v3898 = vsub.f32 0.0, %v3882
        %v3899 = vsub.f32 0.0, %v3883
        %v3900 = vsub.f32 0.0, %v3884
        %v3901 = vsub.f32 0.0, %v3885
        %v3902 = vsub.f32 0.0, %v3886
        %v3903 = vsub.f32 0.0, %v3887
        %v3904 = vsub.f32 0.0, %v3888
        %v3905 = vsub.f32 0.0, %v3889
        %v3906 = vsub.f32 0.0, %v3890
        %v3907 = vmul.f32 %v3891, 1.442695
        %v3908 = vpow.pop %v3907
        %v3909 = vmul.f32 %v3892, 1.442695
        %v3910 = vpow.pop %v3909
        %v3911 = vmul.f32 %v3893, 1.442695
        %v3912 = vpow.pop %v3911
        %v3913 = vmul.f32 %v3894, 1.442695
        %v3914 = vpow.pop %v3913
        %v3915 = vmul.f32 %v3895, 1.442695
        %v3916 = vpow.pop %v3915
        %v3917 = vmul.f32 %v3896, 1.442695
        %v3918 = vpow.pop %v3917
        %v3919 = vmul.f32 %v3897, 1.442695
        %v3920 = vpow.pop %v3919
        %v3921 = vmul.f32 %v3898, 1.442695
        %v3922 = vpow.pop %v3921
        %v3923 = vmul.f32 %v3899, 1.442695
        %v3924 = vpow.pop %v3923
        %v3925 = vmul.f32 %v3900, 1.442695
        %v3926 = vpow.pop %v3925
        %v3927 = vmul.f32 %v3901, 1.442695
        %v3928 = vpow.pop %v3927
        %v3929 = vmul.f32 %v3902, 1.442695
        %v3930 = vpow.pop %v3929
        %v3931 = vmul.f32 %v3903, 1.442695
        %v3932 = vpow.pop %v3931
        %v3933 = vmul.f32 %v3904, 1.442695
        %v3934 = vpow.pop %v3933
        %v3935 = vmul.f32 %v3905, 1.442695
        %v3936 = vpow.pop %v3935
        %v3937 = vmul.f32 %v3906, 1.442695
        %v3938 = vpow.pop %v3937
        %v3939 = vadd.f32 %v3908, 1.0
        %v3940 = vlog2.pop %v3939
        %v3941 = vmul.f32 %v3940, 0.6931472
        %v3942 = vmul.f32 -0.5, %v3908
        %v3943 = vadd.f32 %v3942, 1.0
        %v3944 = vmul.f32 %v3943, %v3908
        %v3945 = vand.u32 2147483647, %v3908
        %vm3946 = vcmp.lt.f32.partialorder %v3945, 0.0004427343
        %v3947 = vsel %vm3946, %v3944, %v3941
        %v3948 = vadd.f32 %v3910, 1.0
        %v3949 = vlog2.pop %v3948
        %v3950 = vmul.f32 %v3949, 0.6931472
        %v3951 = vmul.f32 -0.5, %v3910
        %v3952 = vadd.f32 %v3951, 1.0
        %v3953 = vmul.f32 %v3952, %v3910
        %v3954 = vand.u32 2147483647, %v3910
        %vm3955 = vcmp.lt.f32.partialorder %v3954, 0.0004427343
        %v3956 = vsel %vm3955, %v3953, %v3950
        %v3957 = vadd.f32 %v3912, 1.0
        %v3958 = vlog2.pop %v3957
        %v3959 = vmul.f32 %v3958, 0.6931472
        %v3960 = vmul.f32 -0.5, %v3912
        %v3961 = vadd.f32 %v3960, 1.0
        %v3962 = vmul.f32 %v3961, %v3912
        %v3963 = vand.u32 2147483647, %v3912
        %vm3964 = vcmp.lt.f32.partialorder %v3963, 0.0004427343
        %v3965 = vsel %vm3964, %v3962, %v3959
        %v3966 = vadd.f32 %v3914, 1.0
        %v3967 = vlog2.pop %v3966
        %v3968 = vmul.f32 %v3967, 0.6931472
        %v3969 = vmul.f32 -0.5, %v3914
        %v3970 = vadd.f32 %v3969, 1.0
        %v3971 = vmul.f32 %v3970, %v3914
        %v3972 = vand.u32 2147483647, %v3914
        %vm3973 = vcmp.lt.f32.partialorder %v3972, 0.0004427343
        %v3974 = vsel %vm3973, %v3971, %v3968
        %v3975 = vadd.f32 %v3916, 1.0
        %v3976 = vlog2.pop %v3975
        %v3977 = vmul.f32 %v3976, 0.6931472
        %v3978 = vmul.f32 -0.5, %v3916
        %v3979 = vadd.f32 %v3978, 1.0
        %v3980 = vmul.f32 %v3979, %v3916
        %v3981 = vand.u32 2147483647, %v3916
        %vm3982 = vcmp.lt.f32.partialorder %v3981, 0.0004427343
        %v3983 = vsel %vm3982, %v3980, %v3977
        %v3984 = vadd.f32 %v3918, 1.0
        %v3985 = vlog2.pop %v3984
        %v3986 = vmul.f32 %v3985, 0.6931472
        %v3987 = vmul.f32 -0.5, %v3918
        %v3988 = vadd.f32 %v3987, 1.0
        %v3989 = vmul.f32 %v3988, %v3918
        %v3990 = vand.u32 2147483647, %v3918
        %vm3991 = vcmp.lt.f32.partialorder %v3990, 0.0004427343
        %v3992 = vsel %vm3991, %v3989, %v3986
        %v3993 = vadd.f32 %v3920, 1.0
        %v3994 = vlog2.pop %v3993
        %v3995 = vmul.f32 %v3994, 0.6931472
        %v3996 = vmul.f32 -0.5, %v3920
        %v3997 = vadd.f32 %v3996, 1.0
        %v3998 = vmul.f32 %v3997, %v3920
        %v3999 = vand.u32 2147483647, %v3920
        %vm4000 = vcmp.lt.f32.partialorder %v3999, 0.0004427343
        %v4001 = vsel %vm4000, %v3998, %v3995
        %v4002 = vadd.f32 %v3922, 1.0
        %v4003 = vlog2.pop %v4002
        %v4004 = vmul.f32 %v4003, 0.6931472
        %v4005 = vmul.f32 -0.5, %v3922
        %v4006 = vadd.f32 %v4005, 1.0
        %v4007 = vmul.f32 %v4006, %v3922
        %v4008 = vand.u32 2147483647, %v3922
        %vm4009 = vcmp.lt.f32.partialorder %v4008, 0.0004427343
        %v4010 = vsel %vm4009, %v4007, %v4004
        %v4011 = vadd.f32 %v3924, 1.0
        %v4012 = vlog2.pop %v4011
        %v4013 = vmul.f32 %v4012, 0.6931472
        %v4014 = vmul.f32 -0.5, %v3924
        %v4015 = vadd.f32 %v4014, 1.0
        %v4016 = vmul.f32 %v4015, %v3924
        %v4017 = vand.u32 2147483647, %v3924
        %vm4018 = vcmp.lt.f32.partialorder %v4017, 0.0004427343
        %v4019 = vsel %vm4018, %v4016, %v4013
        %v4020 = vadd.f32 %v3926, 1.0
        %v4021 = vlog2.pop %v4020
        %v4022 = vmul.f32 %v4021, 0.6931472
        %v4023 = vmul.f32 -0.5, %v3926
        %v4024 = vadd.f32 %v4023, 1.0
        %v4025 = vmul.f32 %v4024, %v3926
        %v4026 = vand.u32 2147483647, %v3926
        %vm4027 = vcmp.lt.f32.partialorder %v4026, 0.0004427343
        %v4028 = vsel %vm4027, %v4025, %v4022
        %v4029 = vadd.f32 %v3928, 1.0
        %v4030 = vlog2.pop %v4029
        %v4031 = vmul.f32 %v4030, 0.6931472
        %v4032 = vmul.f32 -0.5, %v3928
        %v4033 = vadd.f32 %v4032, 1.0
        %v4034 = vmul.f32 %v4033, %v3928
        %v4035 = vand.u32 2147483647, %v3928
        %vm4036 = vcmp.lt.f32.partialorder %v4035, 0.0004427343
        %v4037 = vsel %vm4036, %v4034, %v4031
        %v4038 = vadd.f32 %v3930, 1.0
        %v4039 = vlog2.pop %v4038
        %v4040 = vmul.f32 %v4039, 0.6931472
        %v4041 = vmul.f32 -0.5, %v3930
        %v4042 = vadd.f32 %v4041, 1.0
        %v4043 = vmul.f32 %v4042, %v3930
        %v4044 = vand.u32 2147483647, %v3930
        %vm4045 = vcmp.lt.f32.partialorder %v4044, 0.0004427343
        %v4046 = vsel %vm4045, %v4043, %v4040
        %v4047 = vadd.f32 %v3932, 1.0
        %v4048 = vlog2.pop %v4047
        %v4049 = vmul.f32 %v4048, 0.6931472
        %v4050 = vmul.f32 -0.5, %v3932
        %v4051 = vadd.f32 %v4050, 1.0
        %v4052 = vmul.f32 %v4051, %v3932
        %v4053 = vand.u32 2147483647, %v3932
        %vm4054 = vcmp.lt.f32.partialorder %v4053, 0.0004427343
        %v4055 = vsel %vm4054, %v4052, %v4049
        %v4056 = vadd.f32 %v3934, 1.0
        %v4057 = vlog2.pop %v4056
        %v4058 = vmul.f32 %v4057, 0.6931472
        %v4059 = vmul.f32 -0.5, %v3934
        %v4060 = vadd.f32 %v4059, 1.0
        %v4061 = vmul.f32 %v4060, %v3934
        %v4062 = vand.u32 2147483647, %v3934
        %vm4063 = vcmp.lt.f32.partialorder %v4062, 0.0004427343
        %v4064 = vsel %vm4063, %v4061, %v4058
        %v4065 = vadd.f32 %v3936, 1.0
        %v4066 = vlog2.pop %v4065
        %v4067 = vmul.f32 %v4066, 0.6931472
        %v4068 = vmul.f32 -0.5, %v3936
        %v4069 = vadd.f32 %v4068, 1.0
        %v4070 = vmul.f32 %v4069, %v3936
        %v4071 = vand.u32 2147483647, %v3936
        %vm4072 = vcmp.lt.f32.partialorder %v4071, 0.0004427343
        %v4073 = vsel %vm4072, %v4070, %v4067
        %v4074 = vadd.f32 %v3938, 1.0
        %v4075 = vlog2.pop %v4074
        %v4076 = vmul.f32 %v4075, 0.6931472
        %v4077 = vmul.f32 -0.5, %v3938
        %v4078 = vadd.f32 %v4077, 1.0
        %v4079 = vmul.f32 %v4078, %v3938
        %v4080 = vand.u32 2147483647, %v3938
        %vm4081 = vcmp.lt.f32.partialorder %v4080, 0.0004427343
        %v4082 = vsel %vm4081, %v4079, %v4076
        %v4083 = vadd.f32 %v3859, %v3947
        %v4084 = vadd.f32 %v3860, %v3956
        %v4085 = vadd.f32 %v3861, %v3965
        %v4086 = vadd.f32 %v3862, %v3974
        %v4087 = vadd.f32 %v3863, %v3983
        %v4088 = vadd.f32 %v3864, %v3992
        %v4089 = vadd.f32 %v3865, %v4001
        %v4090 = vadd.f32 %v3866, %v4010
        %v4091 = vadd.f32 %v3867, %v4019
        %v4092 = vadd.f32 %v3868, %v4028
        %v4093 = vadd.f32 %v3869, %v4037
        %v4094 = vadd.f32 %v3870, %v4046
        %v4095 = vadd.f32 %v3871, %v4055
        %v4096 = vadd.f32 %v3872, %v4064
        %v4097 = vadd.f32 %v3873, %v4073
        %v4098 = vadd.f32 %v3874, %v4082
        %v4099 = vsub.f32 0.0, %v3781
        %v4100 = vsub.f32 0.0, %v3784
        %v4101 = vsub.f32 0.0, %v3789
        %v4102 = vsub.f32 0.0, %v3792
        %v4103 = vsub.f32 0.0, %v3797
        %v4104 = vsub.f32 0.0, %v3800
        %v4105 = vsub.f32 0.0, %v3805
        %v4106 = vsub.f32 0.0, %v3808
        %v4107 = vsub.f32 0.0, %v3813
        %v4108 = vsub.f32 0.0, %v3816
        %v4109 = vsub.f32 0.0, %v3821
        %v4110 = vsub.f32 0.0, %v3824
        %v4111 = vsub.f32 0.0, %v3829
        %v4112 = vsub.f32 0.0, %v3832
        %v4113 = vsub.f32 0.0, %v3837
        %v4114 = vsub.f32 0.0, %v3840
        %v4115 = vmul.f32 %v4099, 1.442695
        %v4116 = vpow.pop %v4115
        %v4117 = vmul.f32 %v4100, 1.442695
        %v4118 = vpow.pop %v4117
        %v4119 = vmul.f32 %v4101, 1.442695
        %v4120 = vpow.pop %v4119
        %v4121 = vmul.f32 %v4102, 1.442695
        %v4122 = vpow.pop %v4121
        %v4123 = vmul.f32 %v4103, 1.442695
        %v4124 = vpow.pop %v4123
        %v4125 = vmul.f32 %v4104, 1.442695
        %v4126 = vpow.pop %v4125
        %v4127 = vmul.f32 %v4105, 1.442695
        %v4128 = vpow.pop %v4127
        %v4129 = vmul.f32 %v4106, 1.442695
        %v4130 = vpow.pop %v4129
        %v4131 = vmul.f32 %v4107, 1.442695
        %v4132 = vpow.pop %v4131
        %v4133 = vmul.f32 %v4108, 1.442695
        %v4134 = vpow.pop %v4133
        %v4135 = vmul.f32 %v4109, 1.442695
        %v4136 = vpow.pop %v4135
        %v4137 = vmul.f32 %v4110, 1.442695
        %v4138 = vpow.pop %v4137
        %v4139 = vmul.f32 %v4111, 1.442695
        %v4140 = vpow.pop %v4139
        %v4141 = vmul.f32 %v4112, 1.442695
        %v4142 = vpow.pop %v4141
        %v4143 = vmul.f32 %v4113, 1.442695
        %v4144 = vpow.pop %v4143
        %v4145 = vmul.f32 %v4114, 1.442695
        %v4146 = vpow.pop %v4145
        %v4147 = vadd.f32 %v4116, 1.0
        %v4148 = vadd.f32 %v4118, 1.0
        %v4149 = vadd.f32 %v4120, 1.0
        %v4150 = vadd.f32 %v4122, 1.0
        %v4151 = vadd.f32 %v4124, 1.0
        %v4152 = vadd.f32 %v4126, 1.0
        %v4153 = vadd.f32 %v4128, 1.0
        %v4154 = vadd.f32 %v4130, 1.0
        %v4155 = vadd.f32 %v4132, 1.0
        %v4156 = vadd.f32 %v4134, 1.0
        %v4157 = vadd.f32 %v4136, 1.0
        %v4158 = vadd.f32 %v4138, 1.0
        %v4159 = vadd.f32 %v4140, 1.0
        %v4160 = vadd.f32 %v4142, 1.0
        %v4161 = vadd.f32 %v4144, 1.0
        %v4162 = vadd.f32 %v4146, 1.0
        %v4163 = vrcp.pop %v4147
        %v4164 = vrcp.pop %v4148
        %v4165 = vrcp.pop %v4149
        %v4166 = vrcp.pop %v4150
        %v4167 = vrcp.pop %v4151
        %v4168 = vrcp.pop %v4152
        %v4169 = vrcp.pop %v4153
        %v4170 = vrcp.pop %v4154
        %v4171 = vrcp.pop %v4155
        %v4172 = vrcp.pop %v4156
        %v4173 = vrcp.pop %v4157
        %v4174 = vrcp.pop %v4158
        %v4175 = vrcp.pop %v4159
        %v4176 = vrcp.pop %v4160
        %v4177 = vrcp.pop %v4161
        %v4178 = vrcp.pop %v4162
        %v4179 = vmul.f32 %v4163, 1.002
        %v4180 = vmul.f32 %v4164, 1.002
        %v4181 = vmul.f32 %v4165, 1.002
        %v4182 = vmul.f32 %v4166, 1.002
        %v4183 = vmul.f32 %v4167, 1.002
        %v4184 = vmul.f32 %v4168, 1.002
        %v4185 = vmul.f32 %v4169, 1.002
        %v4186 = vmul.f32 %v4170, 1.002
        %v4187 = vmul.f32 %v4171, 1.002
        %v4188 = vmul.f32 %v4172, 1.002
        %v4189 = vmul.f32 %v4173, 1.002
        %v4190 = vmul.f32 %v4174, 1.002
        %v4191 = vmul.f32 %v4175, 1.002
        %v4192 = vmul.f32 %v4176, 1.002
        %v4193 = vmul.f32 %v4177, 1.002
        %v4194 = vmul.f32 %v4178, 1.002
        %v4195 = vsub.f32 %v4179, 0.001
        %v4196 = vsub.f32 %v4180, 0.001
        %v4197 = vsub.f32 %v4181, 0.001
        %v4198 = vsub.f32 %v4182, 0.001
        %v4199 = vsub.f32 %v4183, 0.001
        %v4200 = vsub.f32 %v4184, 0.001
        %v4201 = vsub.f32 %v4185, 0.001
        %v4202 = vsub.f32 %v4186, 0.001
        %v4203 = vsub.f32 %v4187, 0.001
        %v4204 = vsub.f32 %v4188, 0.001
        %v4205 = vsub.f32 %v4189, 0.001
        %v4206 = vsub.f32 %v4190, 0.001
        %v4207 = vsub.f32 %v4191, 0.001
        %v4208 = vsub.f32 %v4192, 0.001
        %v4209 = vsub.f32 %v4193, 0.001
        %v4210 = vsub.f32 %v4194, 0.001
        %v4211 = vlaneseq
        %v4212 = vand.u32 %v4211, 127
        %vm4213 = vcmp.eq.s32.totalorder %v4212, 3
        %4215 = vset.pattern.permute.xlu0 64
        %4216 = vperm.xlu0 %4215, %v4083
        %v4217 = vpop.permute.xlu0 %4216
        %4220 = vset.pattern.permute.xlu0 64
        %4221 = vperm.xlu0 %4220, %v4084
        %v4222 = vpop.permute.xlu0 %4221
        %4225 = vset.pattern.permute.xlu0 64
        %4226 = vperm.xlu0 %4225, %v4085
        %v4227 = vpop.permute.xlu0 %4226
        %4230 = vset.pattern.permute.xlu0 64
        %4231 = vperm.xlu0 %4230, %v4086
        %v4232 = vpop.permute.xlu0 %4231
        %4235 = vset.pattern.permute.xlu0 64
        %4236 = vperm.xlu0 %4235, %v4087
        %v4237 = vpop.permute.xlu0 %4236
        %4240 = vset.pattern.permute.xlu0 64
        %4241 = vperm.xlu0 %4240, %v4088
        %v4242 = vpop.permute.xlu0 %4241
        %4245 = vset.pattern.permute.xlu0 64
        %4246 = vperm.xlu0 %4245, %v4089
        %v4247 = vpop.permute.xlu0 %4246
        %4250 = vset.pattern.permute.xlu0 64
        %4251 = vperm.xlu0 %4250, %v4090
        %v4252 = vpop.permute.xlu0 %4251
        %4255 = vset.pattern.permute.xlu0 64
        %4256 = vperm.xlu0 %4255, %v4091
        %v4257 = vpop.permute.xlu0 %4256
        %4260 = vset.pattern.permute.xlu0 64
        %4261 = vperm.xlu0 %4260, %v4092
        %v4262 = vpop.permute.xlu0 %4261
        %4265 = vset.pattern.permute.xlu0 64
        %4266 = vperm.xlu0 %4265, %v4093
        %v4267 = vpop.permute.xlu0 %4266
        %4270 = vset.pattern.permute.xlu0 64
        %4271 = vperm.xlu0 %4270, %v4094
        %v4272 = vpop.permute.xlu0 %4271
        %4275 = vset.pattern.permute.xlu0 64
        %4276 = vperm.xlu0 %4275, %v4095
        %v4277 = vpop.permute.xlu0 %4276
        %4280 = vset.pattern.permute.xlu0 64
        %4281 = vperm.xlu0 %4280, %v4096
        %v4282 = vpop.permute.xlu0 %4281
        %4285 = vset.pattern.permute.xlu0 64
        %4286 = vperm.xlu0 %4285, %v4097
        %v4287 = vpop.permute.xlu0 %4286
        %4290 = vset.pattern.permute.xlu0 64
        %4291 = vperm.xlu0 %4290, %v4098
        %v4292 = vpop.permute.xlu0 %4291
        %v4294 = vsel %vm4213, %v4217, %v4195
        %v4295 = vsel %vm4213, %v4222, %v4196
        %v4296 = vsel %vm4213, %v4227, %v4197
        %v4297 = vsel %vm4213, %v4232, %v4198
        %v4298 = vsel %vm4213, %v4237, %v4199
        %v4299 = vsel %vm4213, %v4242, %v4200
        %v4300 = vsel %vm4213, %v4247, %v4201
        %v4301 = vsel %vm4213, %v4252, %v4202
        %v4302 = vsel %vm4213, %v4257, %v4203
        %v4303 = vsel %vm4213, %v4262, %v4204
        %v4304 = vsel %vm4213, %v4267, %v4205
        %v4305 = vsel %vm4213, %v4272, %v4206
        %v4306 = vsel %vm4213, %v4277, %v4207
        %v4307 = vsel %vm4213, %v4282, %v4208
        %v4308 = vsel %vm4213, %v4287, %v4209
        %v4309 = vsel %vm4213, %v4292, %v4210
        %v4310 = vpack.c.bf16 %v4295, %v4294
        %v4311 = vpack.c.bf16 %v4297, %v4296
        %v4312 = vpack.c.bf16 %v4299, %v4298
        %v4313 = vpack.c.bf16 %v4301, %v4300
        %v4314 = vpack.c.bf16 %v4303, %v4302
        %v4315 = vpack.c.bf16 %v4305, %v4304
        %v4316 = vpack.c.bf16 %v4307, %v4306
        %v4317 = vpack.c.bf16 %v4309, %v4308
        %v4326 = vunpack.c.l.b16 %v4310
        %v4327 = vunpack.c.h.b16 %v4310
        %v4328 = vunpack.c.l.b16 %v4311
        %v4329 = vunpack.c.h.b16 %v4311
        %v4330 = vunpack.c.l.b16 %v4312
        %v4331 = vunpack.c.h.b16 %v4312
        %v4332 = vunpack.c.l.b16 %v4313
        %v4333 = vunpack.c.h.b16 %v4313
        %v4334 = vunpack.c.l.b16 %v4314
        %v4335 = vunpack.c.h.b16 %v4314
        %v4336 = vunpack.c.l.b16 %v4315
        %v4337 = vunpack.c.h.b16 %v4315
        %v4338 = vunpack.c.l.b16 %v4316
        %v4339 = vunpack.c.h.b16 %v4316
        %v4340 = vunpack.c.l.b16 %v4317
        %v4341 = vunpack.c.h.b16 %v4317
        %v4342 = vpack.c.b16 %v4326, %v4326
        %v4343 = vpack.c.b16 %v4327, %v4327
        %v4344 = vpack.c.b16 %v4328, %v4328
        %v4345 = vpack.c.b16 %v4329, %v4329
        %v4346 = vpack.c.b16 %v4330, %v4330
        %v4347 = vpack.c.b16 %v4331, %v4331
        %v4348 = vpack.c.b16 %v4332, %v4332
        %v4349 = vpack.c.b16 %v4333, %v4333
        %v4350 = vpack.c.b16 %v4334, %v4334
        %v4351 = vpack.c.b16 %v4335, %v4335
        %v4352 = vpack.c.b16 %v4336, %v4336
        %v4353 = vpack.c.b16 %v4337, %v4337
        %v4354 = vpack.c.b16 %v4338, %v4338
        %v4355 = vpack.c.b16 %v4339, %v4339
        %v4356 = vpack.c.b16 %v4340, %v4340
        %v4357 = vpack.c.b16 %v4341, %v4341
        %4374 = vst [vmem:[%s783] sm:$0xf] %v4342
        %4375 = vst [vmem:[%s783 + $0x4] sm:$0xf] %v4343
        %4376 = vst [vmem:[%s783 + $0x8] sm:$0xf] %v4344
        %4377 = vst [vmem:[%s783 + $0xc] sm:$0xf] %v4345
        %4378 = vst [vmem:[%s783 + $0x10] sm:$0xf] %v4346
        %4379 = vst [vmem:[%s783 + $0x14] sm:$0xf] %v4347
        %4380 = vst [vmem:[%s783 + $0x18] sm:$0xf] %v4348
        %4381 = vst [vmem:[%s783 + $0x1c] sm:$0xf] %v4349
        %4382 = vst [vmem:[%s783 + $0x20] sm:$0xf] %v4350
        %4383 = vst [vmem:[%s783 + $0x24] sm:$0xf] %v4351
        %4384 = vst [vmem:[%s783 + $0x28] sm:$0xf] %v4352
        %4385 = vst [vmem:[%s783 + $0x2c] sm:$0xf] %v4353
        %4386 = vst [vmem:[%s783 + $0x30] sm:$0xf] %v4354
        %4387 = vst [vmem:[%s783 + $0x34] sm:$0xf] %v4355
        %4388 = vst [vmem:[%s783 + $0x38] sm:$0xf] %v4356
        %4389 = vst [vmem:[%s783 + $0x3c] sm:$0xf] %v4357
        %s4390 = sand.u32 %s353, 1
        %s4391 = scalar_lea.sflag [#allocation4], %s4390
        %s4392 = sand.u32 %s353, 1
        %s4393 = smul.addr %s4392, 64
        %s4394 = scalar_lea.vmem [#allocation19], %s4393
        // Predicated region
        $region105: #{tpu_custom_call.1} parent=63 // pred_check
          %p4395 = pneg %p363
        $region106: #{tpu_custom_call.1} parent=63 // pred_check_branch
          %4397 = sbr.rel (%p4395) target = $region108
        $region107: #{tpu_custom_call.1} parent=63 // pred_region
          %s4398 = smul.u32 16, %s48
          %s4400 = ssub.s32 1024, 1024
          %4401 = vsyncadd %s4391, %s4400
          %s4402 = smul.addr %s47, 16
          %s4403 = sadd.s32 %s4398, %s4402
          %s4404 = smul.addr %s4403, 64
          %s4405 = scalar_lea.hbm %s11, %s4404
          %s4406 = sshll.u32 %s4394, 4
          %s4407 = int_to_ptr.vmem [resolvable:$true] %s4406
          %4412 = dma.vmem_to_hbm [thread:$0]  %s4407, 1024, %s4405, %s4391, 64, 64, 4
        $region108: #{tpu_custom_call.1} parent=63 // pred_fallthru
          _
      $region64: #{tpu_custom_call.1} parent=5 // pred_fallthru
        _
      %p4413 = scmp.le.s32.totalorder 2, %s38
      // Predicated region
      $region109: #{tpu_custom_call.1} parent=5 // pred_check
        %p4414 = pneg %p4413
      $region110: #{tpu_custom_call.1} parent=5 // pred_check_branch
        %4416 = sbr.rel (%p4414) target = $region112
      $region111: #{tpu_custom_call.1} parent=5 // pred_region
        %s4417 = ssub.s32 %s38, 2
        // Predicated region
        $region113: #{tpu_custom_call.1} parent=111 // pred_check
          %p4418 = pneg %p369
        $region114: #{tpu_custom_call.1} parent=111 // pred_check_branch
          %4420 = sbr.rel (%p4418) target = $region116
        $region115: #{tpu_custom_call.1} parent=111 // pred_region
          %s4421 = sand.u32 %s354, 1
          %s4422 = scalar_lea.sflag [#allocation4], %s4421
          %s4423 = sand.u32 %s354, 1
          %s4424 = smul.addr %s4423, 64
          %s4425 = scalar_lea.vmem [#allocation19], %s4424
          %4426 = dma.done %s4422, 1024
        $region116: #{tpu_custom_call.1} parent=111 // pred_fallthru
          _
      $region112: #{tpu_custom_call.1} parent=5 // pred_fallthru
        _
    $region6: #{tpu_custom_call.1} parent=1 // loop_footer
      %s42 = sadd.s32 1, %s38
    $region7: #{tpu_custom_call.1} parent=1 // loop_footer_branch
      %37 = sbr.rel target = $region3
    $region8: #{tpu_custom_call.1} parent=1 // loop_exit
      _
    %4427 = vsyncpa [#allocation3], 1
    %s4428 = scalar_lea.sflag [#allocation3], 1
    %4429 = vsyncpa %s4428, 1
    %4430 = vsyncpa [#allocation6], 1
    %s4431 = scalar_lea.sflag [#allocation6], 1
    %4432 = vsyncpa %s4431, 1
    %4433 = vsyncpa [#allocation9], 1
    %s4434 = scalar_lea.sflag [#allocation9], 1
    %4435 = vsyncpa %s4434, 1
    %4436 = vsyncpa [#allocation12], 1
    %s4437 = scalar_lea.sflag [#allocation12], 1
    %4438 = vsyncpa %s4437, 1
    %4439 = vsyncpa [#allocation15], 1
    %s4440 = scalar_lea.sflag [#allocation15], 1
    %4441 = vsyncpa %s4440, 1
    %4442 = vsyncpa [#allocation18], 1
    %s4443 = scalar_lea.sflag [#allocation18], 1
    %4444 = vsyncpa %s4443, 1
    %4445 = vsyncpa [#allocation4], 1
    %s4446 = scalar_lea.sflag [#allocation4], 1
    %4447 = vsyncpa %s4446, 1

</llo_original>
